<compile_context>
chip_gen: v7x
topology: tpu7x:2x2x1
jax: 0.10.0
libtpu: 0.0.40
codegen_flags: <defaults>
</compile_context>

<pallas_src>
import jax
import jax.numpy as jnp
from jax.experimental import pallas as pl
from jax.experimental.pallas import tpu as pltpu


def _round_up(x, m):
    return (x + m - 1) // m * m


def _make_mlp_kernel(n_chunks, n_mid_layers):
    """Kernel over one edge tile.

    refs layout:
      [feat_0 .. feat_{n_chunks-1},        # bf16 [tile_e, chunk_pad_i]
       w1_0  .. w1_{n_chunks-1},           # bf16 [chunk_pad_i, hid_pad]
       wmid_0 .. wmid_{n_mid_layers-1},    # bf16 [hid_pad, hid_pad]
       w_out,                              # bf16 [hid_pad, cls_pad]
       o_ref]                              # bf16 [tile_e, cls_pad]
    """

    def kernel(*refs):
        feat_refs = refs[:n_chunks]
        w1_refs = refs[n_chunks:2 * n_chunks]
        wmid_refs = refs[2 * n_chunks:2 * n_chunks + n_mid_layers]
        w_out_ref = refs[2 * n_chunks + n_mid_layers]
        o_ref = refs[-1]

        # First hidden layer; when n_chunks > 1 the feature concat is fused
        # into split matmuls (h1 = xs @ W1_src + xd @ W1_dst + ...).
        h = jnp.dot(feat_refs[0][...], w1_refs[0][...],
                    preferred_element_type=jnp.float32)
        for f_ref, w_ref in zip(feat_refs[1:], w1_refs[1:]):
            h = h + jnp.dot(f_ref[...], w_ref[...],
                            preferred_element_type=jnp.float32)
        h = jnp.maximum(h, 0.0)            # ReLU; Dropout is identity in eval

        # Remaining hidden layers (bf16 matmul inputs, f32 accumulation).
        for w_ref in wmid_refs:
            h = jnp.dot(h.astype(jnp.bfloat16), w_ref[...],
                        preferred_element_type=jnp.float32)
            h = jnp.maximum(h, 0.0)

        # Final classifier layer (no activation); lane-dense bf16 store.
        out = jnp.dot(h.astype(jnp.bfloat16), w_out_ref[...],
                      preferred_element_type=jnp.float32)
        o_ref[...] = out.astype(o_ref.dtype)

    return kernel


def edge_classifier_forward(x, edge_index, weights, edge_attr=None, *, tile_e=1024):
    """Pallas implementation of EdgeClassifer.forward (eval mode).

    x:          [N, input_dim] float32 node embeddings
    edge_index: [2, E] int32 edge endpoints
    weights:    list of [out, in] float32 matrices (num_layers hidden + 1 output),
                PyTorch nn.Linear convention, bias=False
    edge_attr:  optional [E, edge_dim] float32
    tile_e:     edge-tile size (rounded to a multiple of 256)
    """
    input_dim = int(x.shape[1])
    hidden_dim = int(weights[0].shape[0])
    num_classes = int(weights[-1].shape[0])
    n_mid_layers = len(weights) - 2     # hidden layers beyond the first
    num_edges = int(edge_index.shape[1])

    # ---- edge-tile sizing (multiple of 256; avoid over-padding; keep the grid
    # >= 2 steps when possible so v7x can shard it across both TensorCores).
    tile_e = max(256, _round_up(int(tile_e), 256))
    tile_e = min(tile_e, _round_up(max(num_edges, 1), 256))
    if num_edges > 256:
        tile_e = min(tile_e, max(256, _round_up((num_edges + 1) // 2, 256)))
    e_pad = _round_up(max(num_edges, 1), tile_e)

    # ---- features: cast to bf16 BEFORE the gather; build padded slabs with a
    # single zeros().at[...].set(...) so XLA fuses gather+concat+pad+cast.
    # TODO(synk): if the node table fits VMEM, move the gather into the kernel
    # (resident x + per-tile edge_index slices) to drop this HBM round trip.
    x_bf = x.astype(jnp.bfloat16)
    parts = [x_bf[edge_index[0]], x_bf[edge_index[1]]]
    chunk_dims = [input_dim, input_dim]
    if edge_attr is not None:
        parts.append(edge_attr.astype(jnp.bfloat16))
        chunk_dims.append(int(edge_attr.shape[-1]))

    hid_pad = _round_up(hidden_dim, 128)
    cls_pad = _round_up(num_classes, 128)

    def pad2(a, rows, cols):
        return jnp.pad(a, ((0, rows - a.shape[0]), (0, cols - a.shape[1])))

    w1_t = weights[0].T                                  # [sum(chunk_dims), hidden]
    split_path = all(d % 128 == 0 for d in chunk_dims)

    if split_path:
        # Chunks already lane-dense: fuse the concat into split matmuls.
        chunk_pads = list(chunk_dims)
        feats_p = []
        for p in parts:
            f = jnp.zeros((e_pad, p.shape[1]), jnp.bfloat16)
            feats_p.append(f.at[:num_edges, :].set(p))
        w1_chunks, off = [], 0
        for d in chunk_dims:
            w1_chunks.append(pad2(w1_t[off:off + d], d, hid_pad).astype(jnp.bfloat16))
            off += d
    else:
        # Small chunks: concatenate once, pad once -> single [E_pad, cat_pad] slab.
        cat_dim = sum(chunk_dims)
        cat_pad = _round_up(cat_dim, 128)
        chunk_pads = [cat_pad]
        cat = parts[0] if len(parts) == 1 else jnp.concatenate(parts, axis=-1)
        feat = jnp.zeros((e_pad, cat_pad), jnp.bfloat16)
        feats_p = [feat.at[:num_edges, :cat_dim].set(cat)]
        w1_chunks = [pad2(w1_t, cat_pad, hid_pad).astype(jnp.bfloat16)]

    wmid = [pad2(w.T, hid_pad, hid_pad).astype(jnp.bfloat16) for w in weights[1:-1]]
    w_out = pad2(weights[-1].T, hid_pad, cls_pad).astype(jnp.bfloat16)
    all_w = w1_chunks + wmid + [w_out]

    n_chunks = len(feats_p)
    kernel = _make_mlp_kernel(n_chunks, n_mid_layers)
    grid = (e_pad // tile_e,)

    feat_specs = [pl.BlockSpec((tile_e, dp), lambda i: (i, 0)) for dp in chunk_pads]
    out_specs = pl.BlockSpec((tile_e, cls_pad), lambda i: (i, 0))

    # Advisory cost estimate based on REAL (unpadded) work.
    real_in = sum(chunk_dims)
    flops = 2 * num_edges * (real_in * hidden_dim
                             + n_mid_layers * hidden_dim * hidden_dim
                             + hidden_dim * num_classes)
    bytes_accessed = (num_edges * real_in * 2
                      + sum(int(w.size) for w in weights) * 2
                      + num_edges * num_classes * 2)
    cost = pl.CostEstimate(flops=int(flops), transcendentals=0,
                           bytes_accessed=int(bytes_accessed))

    # Exact VMEM budget: double-buffered streamed tiles, single-buffered
    # weights, f32 activations; capped at ~85% of the generation's capacity.
    w_bytes = sum(int(w.size) * 2 for w in all_w)
    feat_tile_bytes = tile_e * sum(chunk_pads) * 2
    out_tile_bytes = tile_e * cls_pad * 2
    act_bytes = 2 * tile_e * hid_pad * 4
    budget = 2 * (feat_tile_bytes + out_tile_bytes) + w_bytes + act_bytes
    try:
        vmem_cap = int(pltpu.get_tpu_info().vmem_capacity_bytes)
    except Exception:
        vmem_cap = 64 * 1024 * 1024        # safe on every generation
    vmem_limit = int(min(max(int(1.25 * budget), 32 * 1024 * 1024),
                         int(0.85 * vmem_cap)))

    def _call(single_buffer_weights):
        w_specs = []
        for w in all_w:
            if single_buffer_weights:
                # Weights are grid-constant; single-buffer them to save VMEM.
                w_specs.append(pl.BlockSpec(w.shape, lambda i: (0, 0),
                                            pipeline_mode=pl.Buffered(1)))
            else:
                w_specs.append(pl.BlockSpec(w.shape, lambda i: (0, 0)))
        return pl.pallas_call(
            kernel,
            out_shape=jax.ShapeDtypeStruct((e_pad, cls_pad), jnp.bfloat16),
            grid_spec=pltpu.PrefetchScalarGridSpec(
                num_scalar_prefetch=0,
                grid=grid,
                in_specs=feat_specs + w_specs,
                out_specs=out_specs,
            ),
            compiler_params=pltpu.CompilerParams(
                dimension_semantics=("parallel",),
                vmem_limit_bytes=vmem_limit,
            ),
            cost_estimate=cost,
        )(*feats_p, *all_w)

    try:
        out_padded = _call(True)
    except Exception:
        # Fallback if single-buffered (Buffered(1)) specs are unsupported.
        out_padded = _call(False)

    return out_padded[:num_edges, :num_classes].astype(jnp.float32)


def init_edge_classifier_params(key, input_dim, hidden_dim, num_classes,
                                num_layers=2, edge_dim=None):
    """Deterministic parameter init matching the module's layer shapes."""
    in_feats = input_dim * 2
    if edge_dim is not None:
        in_feats += edge_dim
    weights = []
    for _ in range(num_layers):
        key, sub = jax.random.split(key)
        # nn.Linear weight shape: [out_features, in_features], bias=False
        weights.append(
            jax.random.normal(sub, (hidden_dim, in_feats), jnp.float32)
            * (1.0 / jnp.sqrt(in_feats)))
        in_feats = hidden_dim
    key, sub = jax.random.split(key)
    weights.append(
        jax.random.normal(sub, (num_classes, hidden_dim), jnp.float32)
        * (1.0 / jnp.sqrt(hidden_dim)))
    return weights


def _reference_forward(x, edge_index, weights, edge_attr=None):
    h = jnp.concatenate([x[edge_index[0]], x[edge_index[1]]], axis=-1)
    if edge_attr is not None:
        h = jnp.concatenate([h, edge_attr], axis=-1)
    for w in weights[:-1]:
        h = jnp.maximum(h @ w.T, 0.0)
    return h @ weights[-1].T


if __name__ == "__main__":
    key = jax.random.PRNGKey(0)
    k_x, k_e, k_w, k_a, k_w2, k_w3 = jax.random.split(key, 6)

    # TODO(synk): nn.Dropout is train-mode only; eval-mode (identity) semantics
    # are implemented here.

    # ---- Case 1: small feature dims -> concat-and-pad-once path, ragged E.
    num_nodes, input_dim, hidden_dim, num_classes = 10, 32, 32, 5
    num_edges = 600       # not a multiple of the tile -> exercises edge padding
    x = jax.random.normal(k_x, (num_nodes, input_dim), jnp.float32)
    edge_index = jax.random.randint(k_e, (2, num_edges), 0, num_nodes, jnp.int32)
    weights = init_edge_classifier_params(k_w, input_dim, hidden_dim, num_classes,
                                          num_layers=2)
    out = jax.block_until_ready(edge_classifier_forward(x, edge_index, weights))
    ref = _reference_forward(x, edge_index, weights)
    assert out.shape == (num_edges, num_classes)
    assert jnp.allclose(out, ref, atol=6e-2, rtol=6e-2), "case1 mismatch"

    # ---- Case 2: with edge attributes (3-way fused concat).
    edge_dim = 16
    edge_attr = jax.random.normal(k_a, (num_edges, edge_dim), jnp.float32)
    weights_ea = init_edge_classifier_params(k_w2, input_dim, hidden_dim,
                                             num_classes, num_layers=2,
                                             edge_dim=edge_dim)
    out2 = jax.block_until_ready(
        edge_classifier_forward(x, edge_index, weights_ea, edge_attr=edge_attr))
    ref2 = _reference_forward(x, edge_index, weights_ea, edge_attr=edge_attr)
    assert out2.shape == (num_edges, num_classes)
    assert jnp.allclose(out2, ref2, atol=6e-2, rtol=6e-2), "case2 mismatch"

    # ---- Case 3: 128-aligned feature dim -> split-matmul (fused-concat) path.
    n3, d3, h3, c3, e3 = 12, 128, 128, 3, 300
    x3 = jax.random.normal(k_x, (n3, d3), jnp.float32)
    edge_index3 = jax.random.randint(k_e, (2, e3), 0, n3, jnp.int32)
    weights3 = init_edge_classifier_params(k_w3, d3, h3, c3, num_layers=2)
    out3 = jax.block_until_ready(edge_classifier_forward(x3, edge_index3, weights3))
    ref3 = _reference_forward(x3, edge_index3, weights3)
    assert out3.shape == (e3, c3)
    assert jnp.allclose(out3, ref3, atol=8e-2, rtol=8e-2), "case3 mismatch"

    print("KERNEL_OK")
</pallas_src>

<mosaic_0001>
module attributes {stable_mosaic.version = 11 : i64} {
  func.func @kernel(%arg0: i32, %arg1: memref<512x128xbf16, #tpu.memory_space<vmem>>, %arg2: memref<128x128xbf16, #tpu.memory_space<vmem>>, %arg3: memref<128x128xbf16, #tpu.memory_space<vmem>>, %arg4: memref<128x128xbf16, #tpu.memory_space<vmem>>, %arg5: memref<512x128xbf16, #tpu.memory_space<vmem>>) attributes {dimension_semantics = [#tpu.dimension_semantics<parallel>], iteration_bounds = array<i64: 2>, scalar_prefetch = 0 : i64, scratch_operands = 0 : i64, tpu.core_type = #tpu.core_type<tc>, window_params = [{transform_indices = @transform_0, window_bounds = array<i64: 512, 128>}, {pipeline_mode = #tpu.pipeline_mode<synchronous>, transform_indices = @transform_1, window_bounds = array<i64: 128, 128>}, {pipeline_mode = #tpu.pipeline_mode<synchronous>, transform_indices = @transform_2, window_bounds = array<i64: 128, 128>}, {pipeline_mode = #tpu.pipeline_mode<synchronous>, transform_indices = @transform_3, window_bounds = array<i64: 128, 128>}, {transform_indices = @transform_4, window_bounds = array<i64: 512, 128>}]} {
    %c0 = arith.constant 0 : index
    %c0_0 = arith.constant 0 : index
    %0 = vector.load %arg1[%c0, %c0_0] : memref<512x128xbf16, #tpu.memory_space<vmem>>, vector<512x128xbf16>
    %c0_1 = arith.constant 0 : index
    %c0_2 = arith.constant 0 : index
    %1 = vector.load %arg2[%c0_1, %c0_2] : memref<128x128xbf16, #tpu.memory_space<vmem>>, vector<128x128xbf16>
    %cst = arith.constant dense<0.000000e+00> : vector<512x128xf32>
    %2 = tpu.matmul %0, %1, %cst {dimension_numbers = #tpu.dot_dimension_numbers<[1], [0], [0], [1], [0, 0, 1, 1], [], []>} : vector<512x128xbf16>, vector<128x128xbf16>, vector<512x128xf32> -> vector<512x128xf32>
    %cst_3 = arith.constant 0.000000e+00 : f32
    %3 = vector.broadcast %cst_3 : f32 to vector<512x128xf32>
    %4 = arith.maximumf %2, %3 : vector<512x128xf32>
    %5 = arith.truncf %4 : vector<512x128xf32> to vector<512x128xbf16>
    %c0_4 = arith.constant 0 : index
    %c0_5 = arith.constant 0 : index
    %6 = vector.load %arg3[%c0_4, %c0_5] : memref<128x128xbf16, #tpu.memory_space<vmem>>, vector<128x128xbf16>
    %cst_6 = arith.constant dense<0.000000e+00> : vector<512x128xf32>
    %7 = tpu.matmul %5, %6, %cst_6 {dimension_numbers = #tpu.dot_dimension_numbers<[1], [0], [0], [1], [0, 0, 1, 1], [], []>} : vector<512x128xbf16>, vector<128x128xbf16>, vector<512x128xf32> -> vector<512x128xf32>
    %cst_7 = arith.constant 0.000000e+00 : f32
    %8 = vector.broadcast %cst_7 : f32 to vector<512x128xf32>
    %9 = arith.maximumf %7, %8 : vector<512x128xf32>
    %10 = arith.truncf %9 : vector<512x128xf32> to vector<512x128xbf16>
    %c0_8 = arith.constant 0 : index
    %c0_9 = arith.constant 0 : index
    %11 = vector.load %arg4[%c0_8, %c0_9] : memref<128x128xbf16, #tpu.memory_space<vmem>>, vector<128x128xbf16>
    %cst_10 = arith.constant dense<0.000000e+00> : vector<512x128xf32>
    %12 = tpu.matmul %10, %11, %cst_10 {dimension_numbers = #tpu.dot_dimension_numbers<[1], [0], [0], [1], [0, 0, 1, 1], [], []>} : vector<512x128xbf16>, vector<128x128xbf16>, vector<512x128xf32> -> vector<512x128xf32>
    %13 = arith.truncf %12 : vector<512x128xf32> to vector<512x128xbf16>
    %c0_11 = arith.constant 0 : index
    %c0_12 = arith.constant 0 : index
    %14 = vector.load %arg5[%c0_11, %c0_12] : memref<512x128xbf16, #tpu.memory_space<vmem>>, vector<512x128xbf16>
    tpu.vector_store %arg5[%c0_11, %c0_12], %13 {strides = array<i32>} : memref<512x128xbf16, #tpu.memory_space<vmem>>, vector<512x128xbf16>,
    return
  }
  func.func @transform_0(%arg0: i32) -> (i32, i32) {
    %c0_i32 = arith.constant 0 : i32
    %c0_i32_0 = arith.constant 0 : i32
    return %arg0, %c0_i32 : i32, i32
  }
  func.func @transform_1(%arg0: i32) -> (i32, i32) {
    %c0_i32 = arith.constant 0 : i32
    %c0_i32_0 = arith.constant 0 : i32
    %c0_i32_1 = arith.constant 0 : i32
    return %c0_i32, %c0_i32_0 : i32, i32
  }
  func.func @transform_2(%arg0: i32) -> (i32, i32) {
    %c0_i32 = arith.constant 0 : i32
    %c0_i32_0 = arith.constant 0 : i32
    %c0_i32_1 = arith.constant 0 : i32
    return %c0_i32, %c0_i32_0 : i32, i32
  }
  func.func @transform_3(%arg0: i32) -> (i32, i32) {
    %c0_i32 = arith.constant 0 : i32
    %c0_i32_0 = arith.constant 0 : i32
    %c0_i32_1 = arith.constant 0 : i32
    return %c0_i32, %c0_i32_0 : i32, i32
  }
  func.func @transform_4(%arg0: i32) -> (i32, i32) {
    %c0_i32 = arith.constant 0 : i32
    %c0_i32_0 = arith.constant 0 : i32
    return %arg0, %c0_i32 : i32, i32
  }
}

module attributes {stable_mosaic.version = 11 : i64} {
  func.func @kernel(%arg0: i32, %arg1: memref<512x128xbf16, #tpu.memory_space<vmem>>, %arg2: memref<128x128xbf16, #tpu.memory_space<vmem>>, %arg3: memref<128x128xbf16, #tpu.memory_space<vmem>>, %arg4: memref<128x128xbf16, #tpu.memory_space<vmem>>, %arg5: memref<512x128xbf16, #tpu.memory_space<vmem>>) attributes {dimension_semantics = [#tpu.dimension_semantics<parallel>], iteration_bounds = array<i64: 2>, scalar_prefetch = 0 : i64, scratch_operands = 0 : i64, tpu.core_type = #tpu.core_type<tc>, window_params = [{transform_indices = @transform_0, window_bounds = array<i64: 512, 128>}, {pipeline_mode = #tpu.pipeline_mode<synchronous>, transform_indices = @transform_1, window_bounds = array<i64: 128, 128>}, {pipeline_mode = #tpu.pipeline_mode<synchronous>, transform_indices = @transform_2, window_bounds = array<i64: 128, 128>}, {pipeline_mode = #tpu.pipeline_mode<synchronous>, transform_indices = @transform_3, window_bounds = array<i64: 128, 128>}, {transform_indices = @transform_4, window_bounds = array<i64: 512, 128>}]} {
    %c0 = arith.constant 0 : index
    %c0_0 = arith.constant 0 : index
    %0 = vector.load %arg1[%c0, %c0_0] : memref<512x128xbf16, #tpu.memory_space<vmem>>, vector<512x128xbf16>
    %c0_1 = arith.constant 0 : index
    %c0_2 = arith.constant 0 : index
    %1 = vector.load %arg2[%c0_1, %c0_2] : memref<128x128xbf16, #tpu.memory_space<vmem>>, vector<128x128xbf16>
    %cst = arith.constant dense<0.000000e+00> : vector<512x128xf32>
    %2 = tpu.matmul %0, %1, %cst {dimension_numbers = #tpu.dot_dimension_numbers<[1], [0], [0], [1], [0, 0, 1, 1], [], []>} : vector<512x128xbf16>, vector<128x128xbf16>, vector<512x128xf32> -> vector<512x128xf32>
    %cst_3 = arith.constant 0.000000e+00 : f32
    %3 = vector.broadcast %cst_3 : f32 to vector<512x128xf32>
    %4 = arith.maximumf %2, %3 : vector<512x128xf32>
    %5 = arith.truncf %4 : vector<512x128xf32> to vector<512x128xbf16>
    %c0_4 = arith.constant 0 : index
    %c0_5 = arith.constant 0 : index
    %6 = vector.load %arg3[%c0_4, %c0_5] : memref<128x128xbf16, #tpu.memory_space<vmem>>, vector<128x128xbf16>
    %cst_6 = arith.constant dense<0.000000e+00> : vector<512x128xf32>
    %7 = tpu.matmul %5, %6, %cst_6 {dimension_numbers = #tpu.dot_dimension_numbers<[1], [0], [0], [1], [0, 0, 1, 1], [], []>} : vector<512x128xbf16>, vector<128x128xbf16>, vector<512x128xf32> -> vector<512x128xf32>
    %cst_7 = arith.constant 0.000000e+00 : f32
    %8 = vector.broadcast %cst_7 : f32 to vector<512x128xf32>
    %9 = arith.maximumf %7, %8 : vector<512x128xf32>
    %10 = arith.truncf %9 : vector<512x128xf32> to vector<512x128xbf16>
    %c0_8 = arith.constant 0 : index
    %c0_9 = arith.constant 0 : index
    %11 = vector.load %arg4[%c0_8, %c0_9] : memref<128x128xbf16, #tpu.memory_space<vmem>>, vector<128x128xbf16>
    %cst_10 = arith.constant dense<0.000000e+00> : vector<512x128xf32>
    %12 = tpu.matmul %10, %11, %cst_10 {dimension_numbers = #tpu.dot_dimension_numbers<[1], [0], [0], [1], [0, 0, 1, 1], [], []>} : vector<512x128xbf16>, vector<128x128xbf16>, vector<512x128xf32> -> vector<512x128xf32>
    %13 = arith.truncf %12 : vector<512x128xf32> to vector<512x128xbf16>
    %c0_11 = arith.constant 0 : index
    %c0_12 = arith.constant 0 : index
    %14 = vector.load %arg5[%c0_11, %c0_12] : memref<512x128xbf16, #tpu.memory_space<vmem>>, vector<512x128xbf16>
    tpu.vector_store %arg5[%c0_11, %c0_12], %13 {strides = array<i32>} : memref<512x128xbf16, #tpu.memory_space<vmem>>, vector<512x128xbf16>,
    return
  }
  func.func @transform_0(%arg0: i32) -> (i32, i32) {
    %c0_i32 = arith.constant 0 : i32
    %c0_i32_0 = arith.constant 0 : i32
    return %arg0, %c0_i32 : i32, i32
  }
  func.func @transform_1(%arg0: i32) -> (i32, i32) {
    %c0_i32 = arith.constant 0 : i32
    %c0_i32_0 = arith.constant 0 : i32
    %c0_i32_1 = arith.constant 0 : i32
    return %c0_i32, %c0_i32_0 : i32, i32
  }
  func.func @transform_2(%arg0: i32) -> (i32, i32) {
    %c0_i32 = arith.constant 0 : i32
    %c0_i32_0 = arith.constant 0 : i32
    %c0_i32_1 = arith.constant 0 : i32
    return %c0_i32, %c0_i32_0 : i32, i32
  }
  func.func @transform_3(%arg0: i32) -> (i32, i32) {
    %c0_i32 = arith.constant 0 : i32
    %c0_i32_0 = arith.constant 0 : i32
    %c0_i32_1 = arith.constant 0 : i32
    return %c0_i32, %c0_i32_0 : i32, i32
  }
  func.func @transform_4(%arg0: i32) -> (i32, i32) {
    %c0_i32 = arith.constant 0 : i32
    %c0_i32_0 = arith.constant 0 : i32
    return %arg0, %c0_i32 : i32, i32
  }
}

</mosaic_0001>

<llo_original>
// kernel: tpu_custom_call.1
$region0: #{tpu_custom_call.1}
  #allocation0 [shape = 'u32[]', space=smem, size = 0x4, offset = 0x4, fixed_abs, tag = 'smem constant byte address 0x4 - core index']
  #allocation1 [shape = 'u32[144,128]{1,0:T(1,128)}', space=vmem, size = 0x12000, scoped, tag = 'internal scratch']
  %s0 = inlined_call_operand.hbm [shape: bf16[1024,128], index: 0, kind: input, shape index: {}]
  %s1 = inlined_call_operand.hbm [shape: bf16[128,128], index: 1, kind: input, shape index: {}]
  %s2 = inlined_call_operand.hbm [shape: bf16[128,128], index: 2, kind: input, shape index: {}]
  %s3 = inlined_call_operand.hbm [shape: bf16[128,128], index: 3, kind: input, shape index: {}]
  %s4 = inlined_call_operand.hbm [shape: bf16[1024,128], index: 4, kind: output, shape index: {}]
  %s5 = sld [smem:[#allocation0]]
  $region65: #{tpu_custom_call.1} parent=0
    _
  %s7 = ssub.s32 1, %s5
  %s8 = scalar_select 0, %s7, %s5
  $region1: #{tpu_custom_call.1} parent=0
    #allocation2 [shape = 'u8[262144]{0}', space=vmem, size = 0x40000, scoped, tag = 'input window, operand 0']
    #allocation3 [shape = 's32[2]{0}', space=sflag, size = 0x8, scoped, tag = 'scoped memory for tpu_custom_call.1']
    #allocation4 [shape = 's32[2]{0}', space=sflag, size = 0x8, scoped, tag = 'scoped memory for tpu_custom_call.1']
    #allocation5 [shape = 'u8[32768]{0}', space=vmem, size = 0x8000, scoped, tag = 'input window, operand 1, single buffered']
    #allocation6 [shape = 's32[1]{0}', space=sflag, size = 0x4, scoped, tag = 'scoped memory for tpu_custom_call.1']
    #allocation7 [shape = 'u8[32768]{0}', space=vmem, size = 0x8000, scoped, tag = 'input window, operand 2, single buffered']
    #allocation8 [shape = 'u8[32768]{0}', space=vmem, size = 0x8000, scoped, tag = 'input window, operand 3, single buffered']
    #allocation9 [shape = 's32[1]{0}', space=sflag, size = 0x4, scoped, tag = 'scoped memory for tpu_custom_call.1']
    #allocation10 [shape = 'u8[262144]{0}', space=vmem, size = 0x40000, scoped, tag = 'output window, operand 0']
    %9 = vsyncpa [#allocation3], 0
    %s10 = scalar_lea.sflag [#allocation3], 1
    %11 = vsyncpa %s10, 0
    %12 = vsyncpa [#allocation6], 0
    %13 = vsyncpa [#allocation9], 0
    %14 = vsyncpa [#allocation4], 0
    %s15 = scalar_lea.sflag [#allocation4], 1
    %16 = vsyncpa %s15, 0
    loop: start=0, step=1, limit=4
    $region2: #{tpu_custom_call.1} parent=1 // loop_pre_header
      _
    $region3: #{tpu_custom_call.1} parent=1 // loop_header
      %s18 = sphi 0, %s22
      %p19 = scmp.ge.s32.totalorder %s18, 4
      %s28 = sphi 0, %s30
      %s31 = sphi 0, %s28
      %s32 = sphi 0, %s31
      %s48 = sphi 0, %s32
      %s52 = sphi 0, %s52
      %s54 = sphi 0, %s52
      %s55 = sphi 0, %s54
      %s69 = sphi 0, %s55
      %s73 = sphi 0, %s73
      %s75 = sphi 0, %s73
      %s76 = sphi 0, %s75
      %s90 = sphi 0, %s76
      %s94 = sphi 0, %s94
      %s96 = sphi 0, %s94
      %s97 = sphi 0, %s96
      %s111 = sphi 0, %s97
      %s117 = sphi 0, %s119
      %s120 = sphi 0, %s117
      %s121 = sphi 0, %s120
      %s137 = sphi 0, %s121
    $region4: #{tpu_custom_call.1} parent=1 // loop_header_branch
      %21 = sbr.rel (%p19) target = $region8
    $region5: #{tpu_custom_call.1} parent=1 // loop_body
      %s23 = ssub.s32 %s18, 1
      %s24 = ssub.s32 %s18, 2
      %s25 = sadd.s32 %s18, 1
      %s26 = ssub.s32 %s18, %s25
      %p27 = scmp.eq.s32.totalorder %s26, 0
      %s29 = sadd.s32 %s28, 1
      %s30 = scalar_select %p27, %s28, %s29
      %p33 = pneg %p27
      %p34 = scmp.eq.s32.totalorder %s18, 1
      %p35 = por %p33, %p34
      %p36 = scmp.ne.s32.totalorder %s28, %s31
      %p37 = scmp.eq.s32.totalorder %s18, 0
      %p38 = por %p36, %p37
      %p39 = scmp.ne.s32.totalorder %s28, %s31
      %p40 = scmp.eq.s32.totalorder %s23, 1
      %p41 = por %p39, %p40
      %p42 = scmp.ne.s32.totalorder %s31, %s32
      %p43 = scmp.eq.s32.totalorder %s23, 0
      %p44 = por %p42, %p43
      %p45 = scmp.ne.s32.totalorder %s31, %s32
      %p46 = scmp.eq.s32.totalorder %s24, 1
      %p47 = por %p45, %p46
      %p49 = scmp.ne.s32.totalorder %s32, %s48
      %p50 = scmp.eq.s32.totalorder %s24, 0
      %p51 = por %p49, %p50
      %s53 = sadd.s32 %s52, 1
      %p56 = scmp.eq.s32.totalorder %s18, 1
      %p57 = scmp.ne.s32.totalorder %s52, %s54
      %p58 = scmp.eq.s32.totalorder %s18, 0
      %p59 = por %p57, %p58
      %p60 = scmp.ne.s32.totalorder %s52, %s54
      %p61 = scmp.eq.s32.totalorder %s23, 1
      %p62 = por %p60, %p61
      %p63 = scmp.ne.s32.totalorder %s54, %s55
      %p64 = scmp.eq.s32.totalorder %s23, 0
      %p65 = por %p63, %p64
      %p66 = scmp.ne.s32.totalorder %s54, %s55
      %p67 = scmp.eq.s32.totalorder %s24, 1
      %p68 = por %p66, %p67
      %p70 = scmp.ne.s32.totalorder %s55, %s69
      %p71 = scmp.eq.s32.totalorder %s24, 0
      %p72 = por %p70, %p71
      %s74 = sadd.s32 %s73, 1
      %p77 = scmp.eq.s32.totalorder %s18, 1
      %p78 = scmp.ne.s32.totalorder %s73, %s75
      %p79 = scmp.eq.s32.totalorder %s18, 0
      %p80 = por %p78, %p79
      %p81 = scmp.ne.s32.totalorder %s73, %s75
      %p82 = scmp.eq.s32.totalorder %s23, 1
      %p83 = por %p81, %p82
      %p84 = scmp.ne.s32.totalorder %s75, %s76
      %p85 = scmp.eq.s32.totalorder %s23, 0
      %p86 = por %p84, %p85
      %p87 = scmp.ne.s32.totalorder %s75, %s76
      %p88 = scmp.eq.s32.totalorder %s24, 1
      %p89 = por %p87, %p88
      %p91 = scmp.ne.s32.totalorder %s76, %s90
      %p92 = scmp.eq.s32.totalorder %s24, 0
      %p93 = por %p91, %p92
      %s95 = sadd.s32 %s94, 1
      %p98 = scmp.eq.s32.totalorder %s18, 1
      %p99 = scmp.ne.s32.totalorder %s94, %s96
      %p100 = scmp.eq.s32.totalorder %s18, 0
      %p101 = por %p99, %p100
      %p102 = scmp.ne.s32.totalorder %s94, %s96
      %p103 = scmp.eq.s32.totalorder %s23, 1
      %p104 = por %p102, %p103
      %p105 = scmp.ne.s32.totalorder %s96, %s97
      %p106 = scmp.eq.s32.totalorder %s23, 0
      %p107 = por %p105, %p106
      %p108 = scmp.ne.s32.totalorder %s96, %s97
      %p109 = scmp.eq.s32.totalorder %s24, 1
      %p110 = por %p108, %p109
      %p112 = scmp.ne.s32.totalorder %s97, %s111
      %p113 = scmp.eq.s32.totalorder %s24, 0
      %p114 = por %p112, %p113
      %s115 = ssub.s32 %s18, %s25
      %p116 = scmp.eq.s32.totalorder %s115, 0
      %s118 = sadd.s32 %s117, 1
      %s119 = scalar_select %p116, %s117, %s118
      %p122 = pneg %p116
      %p123 = scmp.eq.s32.totalorder %s18, 1
      %p124 = por %p122, %p123
      %p125 = scmp.ne.s32.totalorder %s117, %s120
      %p126 = scmp.eq.s32.totalorder %s18, 0
      %p127 = por %p125, %p126
      %p128 = scmp.ne.s32.totalorder %s117, %s120
      %p129 = scmp.eq.s32.totalorder %s23, 1
      %p130 = por %p128, %p129
      %p131 = scmp.ne.s32.totalorder %s120, %s121
      %p132 = scmp.eq.s32.totalorder %s23, 0
      %p133 = por %p131, %p132
      %p134 = scmp.ne.s32.totalorder %s120, %s121
      %p135 = scmp.eq.s32.totalorder %s24, 1
      %p136 = por %p134, %p135
      %p138 = scmp.ne.s32.totalorder %s121, %s137
      %p139 = scmp.eq.s32.totalorder %s24, 0
      %p140 = por %p138, %p139
      %p141 = scmp.le.s32.totalorder 1, %s18
      %p142 = scmp.lt.s32.totalorder %s18, 3
      %p143 = pnand %p141, %p142
      %p144 = pneg %p143
      // Predicated region
      $region9: #{tpu_custom_call.1} parent=5 // pred_check
        _
      $region10: #{tpu_custom_call.1} parent=5 // pred_check_branch
        %146 = sbr.rel (%p143) target = $region12
      $region11: #{tpu_custom_call.1} parent=5 // pred_region
        %s147 = ssub.s32 %s18, 1
        // Predicated region
        $region13: #{tpu_custom_call.1} parent=11 // pred_check
          %p148 = pneg %p65
        $region14: #{tpu_custom_call.1} parent=11 // pred_check_branch
          %150 = sbr.rel (%p148) target = $region16
        $region15: #{tpu_custom_call.1} parent=11 // pred_region
          %s152 = ssub.s32 1024, 1024
          %153 = vsyncadd [#allocation6], %s152
          %s154 = sshll.u32 [#allocation5], 4
          %s155 = int_to_ptr.vmem [resolvable:$true] %s154
          %160 = dma.hbm_to_vmem [thread:$0]  %s1, 1024, %s155, [#allocation6], 64, 64, 4
        $region16: #{tpu_custom_call.1} parent=11 // pred_fallthru
          _
        // Predicated region
        $region17: #{tpu_custom_call.1} parent=11 // pred_check
          %p161 = pneg %p86
        $region18: #{tpu_custom_call.1} parent=11 // pred_check_branch
          %163 = sbr.rel (%p161) target = $region20
        $region19: #{tpu_custom_call.1} parent=11 // pred_region
          %s165 = ssub.s32 1024, 1024
          %166 = vsyncadd [#allocation6], %s165
          %s167 = sshll.u32 [#allocation7], 4
          %s168 = int_to_ptr.vmem [resolvable:$true] %s167
          %173 = dma.hbm_to_vmem [thread:$0]  %s2, 1024, %s168, [#allocation6], 64, 64, 4
        $region20: #{tpu_custom_call.1} parent=11 // pred_fallthru
          _
        // Predicated region
        $region21: #{tpu_custom_call.1} parent=11 // pred_check
          %p174 = pneg %p107
        $region22: #{tpu_custom_call.1} parent=11 // pred_check_branch
          %176 = sbr.rel (%p174) target = $region24
        $region23: #{tpu_custom_call.1} parent=11 // pred_region
          %s178 = ssub.s32 1024, 1024
          %179 = vsyncadd [#allocation9], %s178
          %s180 = sshll.u32 [#allocation8], 4
          %s181 = int_to_ptr.vmem [resolvable:$true] %s180
          %186 = dma.hbm_to_vmem [thread:$0]  %s3, 1024, %s181, [#allocation9], 64, 64, 4
        $region24: #{tpu_custom_call.1} parent=11 // pred_fallthru
          _
      $region12: #{tpu_custom_call.1} parent=5 // pred_fallthru
        _
      %p187 = scmp.lt.s32.totalorder %s18, 2
      // Predicated region
      $region25: #{tpu_custom_call.1} parent=5 // pred_check
        %p188 = pneg %p187
      $region26: #{tpu_custom_call.1} parent=5 // pred_check_branch
        %190 = sbr.rel (%p188) target = $region28
      $region27: #{tpu_custom_call.1} parent=5 // pred_region
        // Predicated region
        $region29: #{tpu_custom_call.1} parent=27 // pred_check
          %p191 = pneg %p38
        $region30: #{tpu_custom_call.1} parent=27 // pred_check_branch
          %193 = sbr.rel (%p191) target = $region32
        $region31: #{tpu_custom_call.1} parent=27 // pred_region
          %s194 = sand.u32 %s28, 1
          %s195 = scalar_lea.sflag [#allocation3], %s194
          %s196 = sand.u32 %s28, 1
          %s197 = smul.addr %s196, 256
          %s198 = scalar_lea.vmem [#allocation2], %s197
          %s199 = smul.u32 64, %s18
          %s201 = ssub.s32 4096, 4096
          %202 = vsyncadd %s195, %s201
          %s203 = smul.addr %s199, 64
          %s204 = scalar_lea.hbm %s0, %s203
          %s205 = sshll.u32 %s198, 4
          %s206 = int_to_ptr.vmem [resolvable:$true] %s205
          %211 = dma.hbm_to_vmem [thread:$0]  %s204, 4096, %s206, %s195, 64, 64, 4
        $region32: #{tpu_custom_call.1} parent=27 // pred_fallthru
          _
      $region28: #{tpu_custom_call.1} parent=5 // pred_fallthru
        _
      %p212 = scmp.le.s32.totalorder 1, %s18
      %p213 = scmp.lt.s32.totalorder %s18, 3
      %p214 = pnand %p212, %p213
      %p215 = pneg %p214
      // Predicated region
      $region33: #{tpu_custom_call.1} parent=5 // pred_check
        _
      $region34: #{tpu_custom_call.1} parent=5 // pred_check_branch
        %217 = sbr.rel (%p214) target = $region36
      $region35: #{tpu_custom_call.1} parent=5 // pred_region
        %s218 = ssub.s32 %s18, 1
        %s219 = sand.u32 %s31, 1
        %s220 = scalar_lea.sflag [#allocation3], %s219
        %s221 = sand.u32 %s31, 1
        %s222 = smul.addr %s221, 256
        %s223 = scalar_lea.vmem [#allocation2], %s222
        // Predicated region
        $region37: #{tpu_custom_call.1} parent=35 // pred_check
          %p224 = pneg %p44
        $region38: #{tpu_custom_call.1} parent=35 // pred_check_branch
          %226 = sbr.rel (%p224) target = $region40
        $region39: #{tpu_custom_call.1} parent=35 // pred_region
          %227 = dma.done %s220, 4096
        $region40: #{tpu_custom_call.1} parent=35 // pred_fallthru
          _
        // Predicated region
        $region41: #{tpu_custom_call.1} parent=35 // pred_check
          %p228 = pneg %p65
        $region42: #{tpu_custom_call.1} parent=35 // pred_check_branch
          %230 = sbr.rel (%p228) target = $region44
        $region43: #{tpu_custom_call.1} parent=35 // pred_region
          %231 = dma.done [#allocation6], 1024
        $region44: #{tpu_custom_call.1} parent=35 // pred_fallthru
          _
        // Predicated region
        $region45: #{tpu_custom_call.1} parent=35 // pred_check
          %p232 = pneg %p86
        $region46: #{tpu_custom_call.1} parent=35 // pred_check_branch
          %234 = sbr.rel (%p232) target = $region48
        $region47: #{tpu_custom_call.1} parent=35 // pred_region
          %235 = dma.done [#allocation6], 1024
        $region48: #{tpu_custom_call.1} parent=35 // pred_fallthru
          _
        // Predicated region
        $region49: #{tpu_custom_call.1} parent=35 // pred_check
          %p236 = pneg %p107
        $region50: #{tpu_custom_call.1} parent=35 // pred_check_branch
          %238 = sbr.rel (%p236) target = $region52
        $region51: #{tpu_custom_call.1} parent=35 // pred_region
          %239 = dma.done [#allocation9], 1024
        $region52: #{tpu_custom_call.1} parent=35 // pred_fallthru
          _
        %s240 = sand.u32 %s31, 1
        %s241 = scalar_lea.sflag [#allocation3], %s240
        %s242 = sand.u32 %s31, 1
        %s243 = smul.addr %s242, 256
        %s244 = scalar_lea.vmem [#allocation2], %s243
        %p245 = pneg %p44
        %p246 = pneg %p41
        %p247 = pneg %p65
        %p248 = pneg %p62
        %p249 = pneg %p86
        %p250 = pneg %p83
        %p251 = pneg %p107
        %p252 = pneg %p104
        %p253 = pneg %p133
        %p254 = pneg %p130
        %s255 = sand.u32 %s120, 1
        %s256 = scalar_lea.sflag [#allocation4], %s255
        %s257 = sand.u32 %s120, 1
        %s258 = smul.addr %s257, 256
        %s259 = scalar_lea.vmem [#allocation10], %s258
        %s260 = smul.u32 64, %s23
        %s261 = smul.u32 64, %s23
        %v263 = vld [vmem:[%s223] sm:$0xf]
        %v264 = vld [vmem:[%s223 + $0x4] sm:$0xf]
        %v265 = vld [vmem:[%s223 + $0x8] sm:$0xf]
        %v266 = vld [vmem:[%s223 + $0xc] sm:$0xf]
        %v267 = vld [vmem:[%s223 + $0x10] sm:$0xf]
        %v268 = vld [vmem:[%s223 + $0x14] sm:$0xf]
        %v269 = vld [vmem:[%s223 + $0x18] sm:$0xf]
        %v270 = vld [vmem:[%s223 + $0x1c] sm:$0xf]
        %v271 = vld [vmem:[%s223 + $0x20] sm:$0xf]
        %v272 = vld [vmem:[%s223 + $0x24] sm:$0xf]
        %v273 = vld [vmem:[%s223 + $0x28] sm:$0xf]
        %v274 = vld [vmem:[%s223 + $0x2c] sm:$0xf]
        %v275 = vld [vmem:[%s223 + $0x30] sm:$0xf]
        %v276 = vld [vmem:[%s223 + $0x34] sm:$0xf]
        %v277 = vld [vmem:[%s223 + $0x38] sm:$0xf]
        %v278 = vld [vmem:[%s223 + $0x3c] sm:$0xf]
        %v279 = vld [vmem:[%s223 + $0x40] sm:$0xf]
        %v280 = vld [vmem:[%s223 + $0x44] sm:$0xf]
        %v281 = vld [vmem:[%s223 + $0x48] sm:$0xf]
        %v282 = vld [vmem:[%s223 + $0x4c] sm:$0xf]
        %v283 = vld [vmem:[%s223 + $0x50] sm:$0xf]
        %v284 = vld [vmem:[%s223 + $0x54] sm:$0xf]
        %v285 = vld [vmem:[%s223 + $0x58] sm:$0xf]
        %v286 = vld [vmem:[%s223 + $0x5c] sm:$0xf]
        %v287 = vld [vmem:[%s223 + $0x60] sm:$0xf]
        %v288 = vld [vmem:[%s223 + $0x64] sm:$0xf]
        %v289 = vld [vmem:[%s223 + $0x68] sm:$0xf]
        %v290 = vld [vmem:[%s223 + $0x6c] sm:$0xf]
        %v291 = vld [vmem:[%s223 + $0x70] sm:$0xf]
        %v292 = vld [vmem:[%s223 + $0x74] sm:$0xf]
        %v293 = vld [vmem:[%s223 + $0x78] sm:$0xf]
        %v294 = vld [vmem:[%s223 + $0x7c] sm:$0xf]
        %v295 = vld [vmem:[%s223 + $0x80] sm:$0xf]
        %v296 = vld [vmem:[%s223 + $0x84] sm:$0xf]
        %v297 = vld [vmem:[%s223 + $0x88] sm:$0xf]
        %v298 = vld [vmem:[%s223 + $0x8c] sm:$0xf]
        %v299 = vld [vmem:[%s223 + $0x90] sm:$0xf]
        %v300 = vld [vmem:[%s223 + $0x94] sm:$0xf]
        %v301 = vld [vmem:[%s223 + $0x98] sm:$0xf]
        %v302 = vld [vmem:[%s223 + $0x9c] sm:$0xf]
        %v303 = vld [vmem:[%s223 + $0xa0] sm:$0xf]
        %v304 = vld [vmem:[%s223 + $0xa4] sm:$0xf]
        %v305 = vld [vmem:[%s223 + $0xa8] sm:$0xf]
        %v306 = vld [vmem:[%s223 + $0xac] sm:$0xf]
        %v307 = vld [vmem:[%s223 + $0xb0] sm:$0xf]
        %v308 = vld [vmem:[%s223 + $0xb4] sm:$0xf]
        %v309 = vld [vmem:[%s223 + $0xb8] sm:$0xf]
        %v310 = vld [vmem:[%s223 + $0xbc] sm:$0xf]
        %v311 = vld [vmem:[%s223 + $0xc0] sm:$0xf]
        %v312 = vld [vmem:[%s223 + $0xc4] sm:$0xf]
        %v313 = vld [vmem:[%s223 + $0xc8] sm:$0xf]
        %v314 = vld [vmem:[%s223 + $0xcc] sm:$0xf]
        %v315 = vld [vmem:[%s223 + $0xd0] sm:$0xf]
        %v316 = vld [vmem:[%s223 + $0xd4] sm:$0xf]
        %v317 = vld [vmem:[%s223 + $0xd8] sm:$0xf]
        %v318 = vld [vmem:[%s223 + $0xdc] sm:$0xf]
        %v319 = vld [vmem:[%s223 + $0xe0] sm:$0xf]
        %v320 = vld [vmem:[%s223 + $0xe4] sm:$0xf]
        %v321 = vld [vmem:[%s223 + $0xe8] sm:$0xf]
        %v322 = vld [vmem:[%s223 + $0xec] sm:$0xf]
        %v323 = vld [vmem:[%s223 + $0xf0] sm:$0xf]
        %v324 = vld [vmem:[%s223 + $0xf4] sm:$0xf]
        %v325 = vld [vmem:[%s223 + $0xf8] sm:$0xf]
        %v326 = vld [vmem:[%s223 + $0xfc] sm:$0xf]
        %v327 = vld [vmem:[#allocation5] sm:$0xf]
        %v328 = vld [vmem:[#allocation5 + $0x4] sm:$0xf]
        %v329 = vld [vmem:[#allocation5 + $0x8] sm:$0xf]
        %v330 = vld [vmem:[#allocation5 + $0xc] sm:$0xf]
        %v331 = vld [vmem:[#allocation5 + $0x10] sm:$0xf]
        %v332 = vld [vmem:[#allocation5 + $0x14] sm:$0xf]
        %v333 = vld [vmem:[#allocation5 + $0x18] sm:$0xf]
        %v334 = vld [vmem:[#allocation5 + $0x1c] sm:$0xf]
        %v335 = vld [vmem:[#allocation5 + $0x20] sm:$0xf]
        %v336 = vld [vmem:[#allocation5 + $0x24] sm:$0xf]
        %v337 = vld [vmem:[#allocation5 + $0x28] sm:$0xf]
        %v338 = vld [vmem:[#allocation5 + $0x2c] sm:$0xf]
        %v339 = vld [vmem:[#allocation5 + $0x30] sm:$0xf]
        %v340 = vld [vmem:[#allocation5 + $0x34] sm:$0xf]
        %v341 = vld [vmem:[#allocation5 + $0x38] sm:$0xf]
        %v342 = vld [vmem:[#allocation5 + $0x3c] sm:$0xf]
        %v407 = vunpack.c.l.b16 %v263
        %v408 = vunpack.c.l.b16 %v264
        %v409 = vunpack.c.l.b16 %v265
        %v410 = vunpack.c.l.b16 %v266
        %v411 = vunpack.c.l.b16 %v267
        %v412 = vunpack.c.l.b16 %v268
        %v413 = vunpack.c.l.b16 %v269
        %v414 = vunpack.c.l.b16 %v270
        %v415 = vunpack.c.l.b16 %v271
        %v416 = vunpack.c.l.b16 %v272
        %v417 = vunpack.c.l.b16 %v273
        %v418 = vunpack.c.l.b16 %v274
        %v419 = vunpack.c.l.b16 %v275
        %v420 = vunpack.c.l.b16 %v276
        %v421 = vunpack.c.l.b16 %v277
        %v422 = vunpack.c.l.b16 %v278
        %v423 = vunpack.c.l.b16 %v279
        %v424 = vunpack.c.l.b16 %v280
        %v425 = vunpack.c.l.b16 %v281
        %v426 = vunpack.c.l.b16 %v282
        %v427 = vunpack.c.l.b16 %v283
        %v428 = vunpack.c.l.b16 %v284
        %v429 = vunpack.c.l.b16 %v285
        %v430 = vunpack.c.l.b16 %v286
        %v431 = vunpack.c.l.b16 %v287
        %v432 = vunpack.c.l.b16 %v288
        %v433 = vunpack.c.l.b16 %v289
        %v434 = vunpack.c.l.b16 %v290
        %v435 = vunpack.c.l.b16 %v291
        %v436 = vunpack.c.l.b16 %v292
        %v437 = vunpack.c.l.b16 %v293
        %v438 = vunpack.c.l.b16 %v294
        %v439 = vunpack.c.l.b16 %v295
        %v440 = vunpack.c.l.b16 %v296
        %v441 = vunpack.c.l.b16 %v297
        %v442 = vunpack.c.l.b16 %v298
        %v443 = vunpack.c.l.b16 %v299
        %v444 = vunpack.c.l.b16 %v300
        %v445 = vunpack.c.l.b16 %v301
        %v446 = vunpack.c.l.b16 %v302
        %v447 = vunpack.c.l.b16 %v303
        %v448 = vunpack.c.l.b16 %v304
        %v449 = vunpack.c.l.b16 %v305
        %v450 = vunpack.c.l.b16 %v306
        %v451 = vunpack.c.l.b16 %v307
        %v452 = vunpack.c.l.b16 %v308
        %v453 = vunpack.c.l.b16 %v309
        %v454 = vunpack.c.l.b16 %v310
        %v455 = vunpack.c.l.b16 %v311
        %v456 = vunpack.c.l.b16 %v312
        %v457 = vunpack.c.l.b16 %v313
        %v458 = vunpack.c.l.b16 %v314
        %v459 = vunpack.c.l.b16 %v315
        %v460 = vunpack.c.l.b16 %v316
        %v461 = vunpack.c.l.b16 %v317
        %v462 = vunpack.c.l.b16 %v318
        %v463 = vunpack.c.l.b16 %v319
        %v464 = vunpack.c.l.b16 %v320
        %v465 = vunpack.c.l.b16 %v321
        %v466 = vunpack.c.l.b16 %v322
        %v467 = vunpack.c.l.b16 %v323
        %v468 = vunpack.c.l.b16 %v324
        %v469 = vunpack.c.l.b16 %v325
        %v470 = vunpack.c.l.b16 %v326
        %v471 = vpack.c.b16 %v408, %v407
        %v472 = vpack.c.b16 %v410, %v409
        %v473 = vpack.c.b16 %v412, %v411
        %v474 = vpack.c.b16 %v414, %v413
        %v475 = vpack.c.b16 %v416, %v415
        %v476 = vpack.c.b16 %v418, %v417
        %v477 = vpack.c.b16 %v420, %v419
        %v478 = vpack.c.b16 %v422, %v421
        %v479 = vpack.c.b16 %v424, %v423
        %v480 = vpack.c.b16 %v426, %v425
        %v481 = vpack.c.b16 %v428, %v427
        %v482 = vpack.c.b16 %v430, %v429
        %v483 = vpack.c.b16 %v432, %v431
        %v484 = vpack.c.b16 %v434, %v433
        %v485 = vpack.c.b16 %v436, %v435
        %v486 = vpack.c.b16 %v438, %v437
        %v487 = vpack.c.b16 %v440, %v439
        %v488 = vpack.c.b16 %v442, %v441
        %v489 = vpack.c.b16 %v444, %v443
        %v490 = vpack.c.b16 %v446, %v445
        %v491 = vpack.c.b16 %v448, %v447
        %v492 = vpack.c.b16 %v450, %v449
        %v493 = vpack.c.b16 %v452, %v451
        %v494 = vpack.c.b16 %v454, %v453
        %v495 = vpack.c.b16 %v456, %v455
        %v496 = vpack.c.b16 %v458, %v457
        %v497 = vpack.c.b16 %v460, %v459
        %v498 = vpack.c.b16 %v462, %v461
        %v499 = vpack.c.b16 %v464, %v463
        %v500 = vpack.c.b16 %v466, %v465
        %v501 = vpack.c.b16 %v468, %v467
        %v502 = vpack.c.b16 %v470, %v469
        %v551 = vunpack.c.l.b16 %v327
        %v552 = vunpack.c.l.b16 %v328
        %v553 = vunpack.c.l.b16 %v329
        %v554 = vunpack.c.l.b16 %v330
        %v555 = vunpack.c.l.b16 %v331
        %v556 = vunpack.c.l.b16 %v332
        %v557 = vunpack.c.l.b16 %v333
        %v558 = vunpack.c.l.b16 %v334
        %v559 = vunpack.c.l.b16 %v335
        %v560 = vunpack.c.l.b16 %v336
        %v561 = vunpack.c.l.b16 %v337
        %v562 = vunpack.c.l.b16 %v338
        %v563 = vunpack.c.l.b16 %v339
        %v564 = vunpack.c.l.b16 %v340
        %v565 = vunpack.c.l.b16 %v341
        %v566 = vunpack.c.l.b16 %v342
        %v567 = vpack.c.b16 %v552, %v551
        %v568 = vpack.c.b16 %v554, %v553
        %v569 = vpack.c.b16 %v556, %v555
        %v570 = vpack.c.b16 %v558, %v557
        %v571 = vpack.c.b16 %v560, %v559
        %v572 = vpack.c.b16 %v562, %v561
        %v573 = vpack.c.b16 %v564, %v563
        %v574 = vpack.c.b16 %v566, %v565
        %583 = vmatprep.subr.bf16.mxu0 0
        %584 = vmatpush1.bf16.msra.mxu0 %v567
        %585 = vmatprep.subr.bf16.mxu0 0
        %586 = vmatpush1.bf16.msra.mxu0 %v568
        %587 = vmatprep.subr.bf16.mxu0 0
        %588 = vmatpush1.bf16.msra.mxu0 %v569
        %589 = vmatprep.subr.bf16.mxu0 0
        %590 = vmatpush1.bf16.msra.mxu0 %v570
        %591 = vmatprep.subr.bf16.mxu0 0
        %592 = vmatpush1.bf16.msra.mxu0 %v571
        %593 = vmatprep.subr.bf16.mxu0 0
        %594 = vmatpush1.bf16.msra.mxu0 %v572
        %595 = vmatprep.subr.bf16.mxu0 0
        %596 = vmatpush1.bf16.msra.mxu0 %v573
        %597 = vmatprep.subr.bf16.mxu0 0
        %598 = vmatpush1.bf16.msra.mxu0 %v574
        %599 = vmatprep.subr.bf16.mxu0 0
        %600 = vmatpush1.bf16.msra.mxu0 0
        %601 = vmatprep.subr.bf16.mxu0 0
        %602 = vmatpush1.bf16.msra.mxu0 0
        %603 = vmatprep.subr.bf16.mxu0 0
        %604 = vmatpush1.bf16.msra.mxu0 0
        %605 = vmatprep.subr.bf16.mxu0 0
        %606 = vmatpush1.bf16.msra.mxu0 0
        %607 = vmatprep.subr.bf16.mxu0 0
        %608 = vmatpush1.bf16.msra.mxu0 0
        %609 = vmatprep.subr.bf16.mxu0 0
        %610 = vmatpush1.bf16.msra.mxu0 0
        %611 = vmatprep.subr.bf16.mxu0 0
        %612 = vmatpush1.bf16.msra.mxu0 0
        %613 = vmatprep.subr.bf16.mxu0 0
        %614 = vmatpush1.bf16.msra.mxu0 0
        %615 = vmatprep.mubr.bf16.mxu0 0
        %616 = vmatmul.mubr.bf16.gmra.mrb[0].mxu0 %v471
        %v617 = vpop.f32.mrb[0].mxu0
        %v618 = vadd.f32 0.0, %v617
        %v619 = vpop.f32.mrb[0].mxu0
        %v620 = vpop.f32.mrb[0].mxu0
        %v621 = vadd.f32 0.0, %v620
        %v622 = vpop.f32.mrb[0].mxu0
        %623 = vmatprep.mubr.bf16.mxu0 0
        %624 = vmatmul.mubr.bf16.gmra.mrb[0].mxu0 %v472
        %v625 = vpop.f32.mrb[0].mxu0
        %v626 = vadd.f32 0.0, %v625
        %v627 = vpop.f32.mrb[0].mxu0
        %v628 = vpop.f32.mrb[0].mxu0
        %v629 = vadd.f32 0.0, %v628
        %v630 = vpop.f32.mrb[0].mxu0
        %631 = vmatprep.mubr.bf16.mxu0 0
        %632 = vmatmul.mubr.bf16.gmra.mrb[0].mxu0 %v473
        %v633 = vpop.f32.mrb[0].mxu0
        %v634 = vadd.f32 0.0, %v633
        %v635 = vpop.f32.mrb[0].mxu0
        %v636 = vpop.f32.mrb[0].mxu0
        %v637 = vadd.f32 0.0, %v636
        %v638 = vpop.f32.mrb[0].mxu0
        %639 = vmatprep.mubr.bf16.mxu0 0
        %640 = vmatmul.mubr.bf16.gmra.mrb[0].mxu0 %v474
        %v641 = vpop.f32.mrb[0].mxu0
        %v642 = vadd.f32 0.0, %v641
        %v643 = vpop.f32.mrb[0].mxu0
        %v644 = vpop.f32.mrb[0].mxu0
        %v645 = vadd.f32 0.0, %v644
        %v646 = vpop.f32.mrb[0].mxu0
        %647 = vmatprep.mubr.bf16.mxu0 0
        %648 = vmatmul.mubr.bf16.gmra.mrb[0].mxu0 %v475
        %v649 = vpop.f32.mrb[0].mxu0
        %v650 = vadd.f32 0.0, %v649
        %v651 = vpop.f32.mrb[0].mxu0
        %v652 = vpop.f32.mrb[0].mxu0
        %v653 = vadd.f32 0.0, %v652
        %v654 = vpop.f32.mrb[0].mxu0
        %655 = vmatprep.mubr.bf16.mxu0 0
        %656 = vmatmul.mubr.bf16.gmra.mrb[0].mxu0 %v476
        %v657 = vpop.f32.mrb[0].mxu0
        %v658 = vadd.f32 0.0, %v657
        %v659 = vpop.f32.mrb[0].mxu0
        %v660 = vpop.f32.mrb[0].mxu0
        %v661 = vadd.f32 0.0, %v660
        %v662 = vpop.f32.mrb[0].mxu0
        %663 = vmatprep.mubr.bf16.mxu0 0
        %664 = vmatmul.mubr.bf16.gmra.mrb[0].mxu0 %v477
        %v665 = vpop.f32.mrb[0].mxu0
        %v666 = vadd.f32 0.0, %v665
        %v667 = vpop.f32.mrb[0].mxu0
        %v668 = vpop.f32.mrb[0].mxu0
        %v669 = vadd.f32 0.0, %v668
        %v670 = vpop.f32.mrb[0].mxu0
        %671 = vmatprep.mubr.bf16.mxu0 0
        %672 = vmatmul.mubr.bf16.gmra.mrb[0].mxu0 %v478
        %v673 = vpop.f32.mrb[0].mxu0
        %v674 = vadd.f32 0.0, %v673
        %v675 = vpop.f32.mrb[0].mxu0
        %v676 = vpop.f32.mrb[0].mxu0
        %v677 = vadd.f32 0.0, %v676
        %v678 = vpop.f32.mrb[0].mxu0
        %679 = vmatprep.mubr.bf16.mxu0 0
        %680 = vmatmul.mubr.bf16.gmra.mrb[0].mxu0 %v479
        %v681 = vpop.f32.mrb[0].mxu0
        %v682 = vadd.f32 0.0, %v681
        %v683 = vpop.f32.mrb[0].mxu0
        %v684 = vpop.f32.mrb[0].mxu0
        %v685 = vadd.f32 0.0, %v684
        %v686 = vpop.f32.mrb[0].mxu0
        %687 = vmatprep.mubr.bf16.mxu0 0
        %688 = vmatmul.mubr.bf16.gmra.mrb[0].mxu0 %v480
        %v689 = vpop.f32.mrb[0].mxu0
        %v690 = vadd.f32 0.0, %v689
        %v691 = vpop.f32.mrb[0].mxu0
        %v692 = vpop.f32.mrb[0].mxu0
        %v693 = vadd.f32 0.0, %v692
        %v694 = vpop.f32.mrb[0].mxu0
        %695 = vmatprep.mubr.bf16.mxu0 0
        %696 = vmatmul.mubr.bf16.gmra.mrb[0].mxu0 %v481
        %v697 = vpop.f32.mrb[0].mxu0
        %v698 = vadd.f32 0.0, %v697
        %v699 = vpop.f32.mrb[0].mxu0
        %v700 = vpop.f32.mrb[0].mxu0
        %v701 = vadd.f32 0.0, %v700
        %v702 = vpop.f32.mrb[0].mxu0
        %703 = vmatprep.mubr.bf16.mxu0 0
        %704 = vmatmul.mubr.bf16.gmra.mrb[0].mxu0 %v482
        %v705 = vpop.f32.mrb[0].mxu0
        %v706 = vadd.f32 0.0, %v705
        %v707 = vpop.f32.mrb[0].mxu0
        %v708 = vpop.f32.mrb[0].mxu0
        %v709 = vadd.f32 0.0, %v708
        %v710 = vpop.f32.mrb[0].mxu0
        %711 = vmatprep.mubr.bf16.mxu0 0
        %712 = vmatmul.mubr.bf16.gmra.mrb[0].mxu0 %v483
        %v713 = vpop.f32.mrb[0].mxu0
        %v714 = vadd.f32 0.0, %v713
        %v715 = vpop.f32.mrb[0].mxu0
        %v716 = vpop.f32.mrb[0].mxu0
        %v717 = vadd.f32 0.0, %v716
        %v718 = vpop.f32.mrb[0].mxu0
        %719 = vmatprep.mubr.bf16.mxu0 0
        %720 = vmatmul.mubr.bf16.gmra.mrb[0].mxu0 %v484
        %v721 = vpop.f32.mrb[0].mxu0
        %v722 = vadd.f32 0.0, %v721
        %v723 = vpop.f32.mrb[0].mxu0
        %v724 = vpop.f32.mrb[0].mxu0
        %v725 = vadd.f32 0.0, %v724
        %v726 = vpop.f32.mrb[0].mxu0
        %727 = vmatprep.mubr.bf16.mxu0 0
        %728 = vmatmul.mubr.bf16.gmra.mrb[0].mxu0 %v485
        %v729 = vpop.f32.mrb[0].mxu0
        %v730 = vadd.f32 0.0, %v729
        %v731 = vpop.f32.mrb[0].mxu0
        %v732 = vpop.f32.mrb[0].mxu0
        %v733 = vadd.f32 0.0, %v732
        %v734 = vpop.f32.mrb[0].mxu0
        %735 = vmatprep.mubr.bf16.mxu0 0
        %736 = vmatmul.mubr.bf16.gmra.mrb[0].mxu0 %v486
        %v737 = vpop.f32.mrb[0].mxu0
        %v738 = vadd.f32 0.0, %v737
        %v739 = vpop.f32.mrb[0].mxu0
        %v740 = vpop.f32.mrb[0].mxu0
        %v741 = vadd.f32 0.0, %v740
        %v742 = vpop.f32.mrb[0].mxu0
        %743 = vmatprep.mubr.bf16.mxu0 0
        %744 = vmatmul.mubr.bf16.gmra.mrb[0].mxu0 %v487
        %v745 = vpop.f32.mrb[0].mxu0
        %v746 = vadd.f32 0.0, %v745
        %v747 = vpop.f32.mrb[0].mxu0
        %v748 = vpop.f32.mrb[0].mxu0
        %v749 = vadd.f32 0.0, %v748
        %v750 = vpop.f32.mrb[0].mxu0
        %751 = vmatprep.mubr.bf16.mxu0 0
        %752 = vmatmul.mubr.bf16.gmra.mrb[0].mxu0 %v488
        %v753 = vpop.f32.mrb[0].mxu0
        %v754 = vadd.f32 0.0, %v753
        %v755 = vpop.f32.mrb[0].mxu0
        %v756 = vpop.f32.mrb[0].mxu0
        %v757 = vadd.f32 0.0, %v756
        %v758 = vpop.f32.mrb[0].mxu0
        %759 = vmatprep.mubr.bf16.mxu0 0
        %760 = vmatmul.mubr.bf16.gmra.mrb[0].mxu0 %v489
        %v761 = vpop.f32.mrb[0].mxu0
        %v762 = vadd.f32 0.0, %v761
        %v763 = vpop.f32.mrb[0].mxu0
        %v764 = vpop.f32.mrb[0].mxu0
        %v765 = vadd.f32 0.0, %v764
        %v766 = vpop.f32.mrb[0].mxu0
        %767 = vmatprep.mubr.bf16.mxu0 0
        %768 = vmatmul.mubr.bf16.gmra.mrb[0].mxu0 %v490
        %v769 = vpop.f32.mrb[0].mxu0
        %v770 = vadd.f32 0.0, %v769
        %v771 = vpop.f32.mrb[0].mxu0
        %v772 = vpop.f32.mrb[0].mxu0
        %v773 = vadd.f32 0.0, %v772
        %v774 = vpop.f32.mrb[0].mxu0
        %775 = vmatprep.mubr.bf16.mxu0 0
        %776 = vmatmul.mubr.bf16.gmra.mrb[0].mxu0 %v491
        %v777 = vpop.f32.mrb[0].mxu0
        %v778 = vadd.f32 0.0, %v777
        %v779 = vpop.f32.mrb[0].mxu0
        %v780 = vpop.f32.mrb[0].mxu0
        %v781 = vadd.f32 0.0, %v780
        %v782 = vpop.f32.mrb[0].mxu0
        %783 = vmatprep.mubr.bf16.mxu0 0
        %784 = vmatmul.mubr.bf16.gmra.mrb[0].mxu0 %v492
        %v785 = vpop.f32.mrb[0].mxu0
        %v786 = vadd.f32 0.0, %v785
        %v787 = vpop.f32.mrb[0].mxu0
        %v788 = vpop.f32.mrb[0].mxu0
        %v789 = vadd.f32 0.0, %v788
        %v790 = vpop.f32.mrb[0].mxu0
        %791 = vmatprep.mubr.bf16.mxu0 0
        %792 = vmatmul.mubr.bf16.gmra.mrb[0].mxu0 %v493
        %v793 = vpop.f32.mrb[0].mxu0
        %v794 = vadd.f32 0.0, %v793
        %v795 = vpop.f32.mrb[0].mxu0
        %v796 = vpop.f32.mrb[0].mxu0
        %v797 = vadd.f32 0.0, %v796
        %v798 = vpop.f32.mrb[0].mxu0
        %799 = vmatprep.mubr.bf16.mxu0 0
        %800 = vmatmul.mubr.bf16.gmra.mrb[0].mxu0 %v494
        %v801 = vpop.f32.mrb[0].mxu0
        %v802 = vadd.f32 0.0, %v801
        %v803 = vpop.f32.mrb[0].mxu0
        %v804 = vpop.f32.mrb[0].mxu0
        %v805 = vadd.f32 0.0, %v804
        %v806 = vpop.f32.mrb[0].mxu0
        %807 = vmatprep.mubr.bf16.mxu0 0
        %808 = vmatmul.mubr.bf16.gmra.mrb[0].mxu0 %v495
        %v809 = vpop.f32.mrb[0].mxu0
        %v810 = vadd.f32 0.0, %v809
        %v811 = vpop.f32.mrb[0].mxu0
        %v812 = vpop.f32.mrb[0].mxu0
        %v813 = vadd.f32 0.0, %v812
        %v814 = vpop.f32.mrb[0].mxu0
        %815 = vmatprep.mubr.bf16.mxu0 0
        %816 = vmatmul.mubr.bf16.gmra.mrb[0].mxu0 %v496
        %v817 = vpop.f32.mrb[0].mxu0
        %v818 = vadd.f32 0.0, %v817
        %v819 = vpop.f32.mrb[0].mxu0
        %v820 = vpop.f32.mrb[0].mxu0
        %v821 = vadd.f32 0.0, %v820
        %v822 = vpop.f32.mrb[0].mxu0
        %823 = vmatprep.mubr.bf16.mxu0 0
        %824 = vmatmul.mubr.bf16.gmra.mrb[0].mxu0 %v497
        %v825 = vpop.f32.mrb[0].mxu0
        %v826 = vadd.f32 0.0, %v825
        %v827 = vpop.f32.mrb[0].mxu0
        %v828 = vpop.f32.mrb[0].mxu0
        %v829 = vadd.f32 0.0, %v828
        %v830 = vpop.f32.mrb[0].mxu0
        %831 = vmatprep.mubr.bf16.mxu0 0
        %832 = vmatmul.mubr.bf16.gmra.mrb[0].mxu0 %v498
        %v833 = vpop.f32.mrb[0].mxu0
        %v834 = vadd.f32 0.0, %v833
        %v835 = vpop.f32.mrb[0].mxu0
        %v836 = vpop.f32.mrb[0].mxu0
        %v837 = vadd.f32 0.0, %v836
        %v838 = vpop.f32.mrb[0].mxu0
        %839 = vmatprep.mubr.bf16.mxu0 0
        %840 = vmatmul.mubr.bf16.gmra.mrb[0].mxu0 %v499
        %v841 = vpop.f32.mrb[0].mxu0
        %v842 = vadd.f32 0.0, %v841
        %v843 = vpop.f32.mrb[0].mxu0
        %v844 = vpop.f32.mrb[0].mxu0
        %v845 = vadd.f32 0.0, %v844
        %v846 = vpop.f32.mrb[0].mxu0
        %847 = vmatprep.mubr.bf16.mxu0 0
        %848 = vmatmul.mubr.bf16.gmra.mrb[0].mxu0 %v500
        %v849 = vpop.f32.mrb[0].mxu0
        %v850 = vadd.f32 0.0, %v849
        %v851 = vpop.f32.mrb[0].mxu0
        %v852 = vpop.f32.mrb[0].mxu0
        %v853 = vadd.f32 0.0, %v852
        %v854 = vpop.f32.mrb[0].mxu0
        %855 = vmatprep.mubr.bf16.mxu0 0
        %856 = vmatmul.mubr.bf16.gmra.mrb[0].mxu0 %v501
        %v857 = vpop.f32.mrb[0].mxu0
        %v858 = vadd.f32 0.0, %v857
        %v859 = vpop.f32.mrb[0].mxu0
        %v860 = vpop.f32.mrb[0].mxu0
        %v861 = vadd.f32 0.0, %v860
        %v862 = vpop.f32.mrb[0].mxu0
        %863 = vmatprep.mubr.bf16.mxu0 0
        %864 = vmatmul.mubr.bf16.gmra.mrb[0].mxu0 %v502
        %v865 = vpop.f32.mrb[0].mxu0
        %v866 = vadd.f32 0.0, %v865
        %v867 = vpop.f32.mrb[0].mxu0
        %v868 = vpop.f32.mrb[0].mxu0
        %v869 = vadd.f32 0.0, %v868
        %v870 = vpop.f32.mrb[0].mxu0
        %871 = vdwg.mxu0
        %v872 = vmax.f32 %v618, 0.0
        %v873 = vmax.f32 %v621, 0.0
        %v874 = vmax.f32 %v626, 0.0
        %v875 = vmax.f32 %v629, 0.0
        %v876 = vmax.f32 %v634, 0.0
        %v877 = vmax.f32 %v637, 0.0
        %v878 = vmax.f32 %v642, 0.0
        %v879 = vmax.f32 %v645, 0.0
        %v880 = vmax.f32 %v650, 0.0
        %v881 = vmax.f32 %v653, 0.0
        %v882 = vmax.f32 %v658, 0.0
        %v883 = vmax.f32 %v661, 0.0
        %v884 = vmax.f32 %v666, 0.0
        %v885 = vmax.f32 %v669, 0.0
        %v886 = vmax.f32 %v674, 0.0
        %v887 = vmax.f32 %v677, 0.0
        %v888 = vmax.f32 %v682, 0.0
        %v889 = vmax.f32 %v685, 0.0
        %v890 = vmax.f32 %v690, 0.0
        %v891 = vmax.f32 %v693, 0.0
        %v892 = vmax.f32 %v698, 0.0
        %v893 = vmax.f32 %v701, 0.0
        %v894 = vmax.f32 %v706, 0.0
        %v895 = vmax.f32 %v709, 0.0
        %v896 = vmax.f32 %v714, 0.0
        %v897 = vmax.f32 %v717, 0.0
        %v898 = vmax.f32 %v722, 0.0
        %v899 = vmax.f32 %v725, 0.0
        %v900 = vmax.f32 %v730, 0.0
        %v901 = vmax.f32 %v733, 0.0
        %v902 = vmax.f32 %v738, 0.0
        %v903 = vmax.f32 %v741, 0.0
        %v904 = vmax.f32 %v746, 0.0
        %v905 = vmax.f32 %v749, 0.0
        %v906 = vmax.f32 %v754, 0.0
        %v907 = vmax.f32 %v757, 0.0
        %v908 = vmax.f32 %v762, 0.0
        %v909 = vmax.f32 %v765, 0.0
        %v910 = vmax.f32 %v770, 0.0
        %v911 = vmax.f32 %v773, 0.0
        %v912 = vmax.f32 %v778, 0.0
        %v913 = vmax.f32 %v781, 0.0
        %v914 = vmax.f32 %v786, 0.0
        %v915 = vmax.f32 %v789, 0.0
        %v916 = vmax.f32 %v794, 0.0
        %v917 = vmax.f32 %v797, 0.0
        %v918 = vmax.f32 %v802, 0.0
        %v919 = vmax.f32 %v805, 0.0
        %v920 = vmax.f32 %v810, 0.0
        %v921 = vmax.f32 %v813, 0.0
        %v922 = vmax.f32 %v818, 0.0
        %v923 = vmax.f32 %v821, 0.0
        %v924 = vmax.f32 %v826, 0.0
        %v925 = vmax.f32 %v829, 0.0
        %v926 = vmax.f32 %v834, 0.0
        %v927 = vmax.f32 %v837, 0.0
        %v928 = vmax.f32 %v842, 0.0
        %v929 = vmax.f32 %v845, 0.0
        %v930 = vmax.f32 %v850, 0.0
        %v931 = vmax.f32 %v853, 0.0
        %v932 = vmax.f32 %v858, 0.0
        %v933 = vmax.f32 %v861, 0.0
        %v934 = vmax.f32 %v866, 0.0
        %v935 = vmax.f32 %v869, 0.0
        %v936 = vpack.c.bf16 %v873, %v872
        %v937 = vpack.c.bf16 %v875, %v874
        %v938 = vpack.c.bf16 %v877, %v876
        %v939 = vpack.c.bf16 %v879, %v878
        %v940 = vpack.c.bf16 %v881, %v880
        %v941 = vpack.c.bf16 %v883, %v882
        %v942 = vpack.c.bf16 %v885, %v884
        %v943 = vpack.c.bf16 %v887, %v886
        %v944 = vpack.c.bf16 %v889, %v888
        %v945 = vpack.c.bf16 %v891, %v890
        %v946 = vpack.c.bf16 %v893, %v892
        %v947 = vpack.c.bf16 %v895, %v894
        %v948 = vpack.c.bf16 %v897, %v896
        %v949 = vpack.c.bf16 %v899, %v898
        %v950 = vpack.c.bf16 %v901, %v900
        %v951 = vpack.c.bf16 %v903, %v902
        %v952 = vpack.c.bf16 %v905, %v904
        %v953 = vpack.c.bf16 %v907, %v906
        %v954 = vpack.c.bf16 %v909, %v908
        %v955 = vpack.c.bf16 %v911, %v910
        %v956 = vpack.c.bf16 %v913, %v912
        %v957 = vpack.c.bf16 %v915, %v914
        %v958 = vpack.c.bf16 %v917, %v916
        %v959 = vpack.c.bf16 %v919, %v918
        %v960 = vpack.c.bf16 %v921, %v920
        %v961 = vpack.c.bf16 %v923, %v922
        %v962 = vpack.c.bf16 %v925, %v924
        %v963 = vpack.c.bf16 %v927, %v926
        %v964 = vpack.c.bf16 %v929, %v928
        %v965 = vpack.c.bf16 %v931, %v930
        %v966 = vpack.c.bf16 %v933, %v932
        %v967 = vpack.c.bf16 %v935, %v934
        %v968 = vld [vmem:[#allocation7] sm:$0xf]
        %v969 = vld [vmem:[#allocation7 + $0x4] sm:$0xf]
        %v970 = vld [vmem:[#allocation7 + $0x8] sm:$0xf]
        %v971 = vld [vmem:[#allocation7 + $0xc] sm:$0xf]
        %v972 = vld [vmem:[#allocation7 + $0x10] sm:$0xf]
        %v973 = vld [vmem:[#allocation7 + $0x14] sm:$0xf]
        %v974 = vld [vmem:[#allocation7 + $0x18] sm:$0xf]
        %v975 = vld [vmem:[#allocation7 + $0x1c] sm:$0xf]
        %v976 = vld [vmem:[#allocation7 + $0x20] sm:$0xf]
        %v977 = vld [vmem:[#allocation7 + $0x24] sm:$0xf]
        %v978 = vld [vmem:[#allocation7 + $0x28] sm:$0xf]
        %v979 = vld [vmem:[#allocation7 + $0x2c] sm:$0xf]
        %v980 = vld [vmem:[#allocation7 + $0x30] sm:$0xf]
        %v981 = vld [vmem:[#allocation7 + $0x34] sm:$0xf]
        %v982 = vld [vmem:[#allocation7 + $0x38] sm:$0xf]
        %v983 = vld [vmem:[#allocation7 + $0x3c] sm:$0xf]
        %v1000 = vunpack.c.l.b16 %v968
        %v1001 = vunpack.c.l.b16 %v969
        %v1002 = vunpack.c.l.b16 %v970
        %v1003 = vunpack.c.l.b16 %v971
        %v1004 = vunpack.c.l.b16 %v972
        %v1005 = vunpack.c.l.b16 %v973
        %v1006 = vunpack.c.l.b16 %v974
        %v1007 = vunpack.c.l.b16 %v975
        %v1008 = vunpack.c.l.b16 %v976
        %v1009 = vunpack.c.l.b16 %v977
        %v1010 = vunpack.c.l.b16 %v978
        %v1011 = vunpack.c.l.b16 %v979
        %v1012 = vunpack.c.l.b16 %v980
        %v1013 = vunpack.c.l.b16 %v981
        %v1014 = vunpack.c.l.b16 %v982
        %v1015 = vunpack.c.l.b16 %v983
        %v1016 = vpack.c.b16 %v1001, %v1000
        %v1017 = vpack.c.b16 %v1003, %v1002
        %v1018 = vpack.c.b16 %v1005, %v1004
        %v1019 = vpack.c.b16 %v1007, %v1006
        %v1020 = vpack.c.b16 %v1009, %v1008
        %v1021 = vpack.c.b16 %v1011, %v1010
        %v1022 = vpack.c.b16 %v1013, %v1012
        %v1023 = vpack.c.b16 %v1015, %v1014
        %1032 = vmatprep.subr.bf16.mxu0 0
        %1033 = vmatpush1.bf16.msra.mxu0 %v1016
        %1034 = vmatprep.subr.bf16.mxu0 0
        %1035 = vmatpush1.bf16.msra.mxu0 %v1017
        %1036 = vmatprep.subr.bf16.mxu0 0
        %1037 = vmatpush1.bf16.msra.mxu0 %v1018
        %1038 = vmatprep.subr.bf16.mxu0 0
        %1039 = vmatpush1.bf16.msra.mxu0 %v1019
        %1040 = vmatprep.subr.bf16.mxu0 0
        %1041 = vmatpush1.bf16.msra.mxu0 %v1020
        %1042 = vmatprep.subr.bf16.mxu0 0
        %1043 = vmatpush1.bf16.msra.mxu0 %v1021
        %1044 = vmatprep.subr.bf16.mxu0 0
        %1045 = vmatpush1.bf16.msra.mxu0 %v1022
        %1046 = vmatprep.subr.bf16.mxu0 0
        %1047 = vmatpush1.bf16.msra.mxu0 %v1023
        %1048 = vmatprep.subr.bf16.mxu0 0
        %1049 = vmatpush1.bf16.msra.mxu0 0
        %1050 = vmatprep.subr.bf16.mxu0 0
        %1051 = vmatpush1.bf16.msra.mxu0 0
        %1052 = vmatprep.subr.bf16.mxu0 0
        %1053 = vmatpush1.bf16.msra.mxu0 0
        %1054 = vmatprep.subr.bf16.mxu0 0
        %1055 = vmatpush1.bf16.msra.mxu0 0
        %1056 = vmatprep.subr.bf16.mxu0 0
        %1057 = vmatpush1.bf16.msra.mxu0 0
        %1058 = vmatprep.subr.bf16.mxu0 0
        %1059 = vmatpush1.bf16.msra.mxu0 0
        %1060 = vmatprep.subr.bf16.mxu0 0
        %1061 = vmatpush1.bf16.msra.mxu0 0
        %1062 = vmatprep.subr.bf16.mxu0 0
        %1063 = vmatpush1.bf16.msra.mxu0 0
        %1064 = vmatprep.mubr.bf16.mxu0 0
        %1065 = vmatmul.mubr.bf16.gmra.mrb[0].mxu0 %v936
        %v1066 = vpop.f32.mrb[0].mxu0
        %v1067 = vadd.f32 0.0, %v1066
        %v1068 = vpop.f32.mrb[0].mxu0
        %v1069 = vpop.f32.mrb[0].mxu0
        %v1070 = vadd.f32 0.0, %v1069
        %v1071 = vpop.f32.mrb[0].mxu0
        %1072 = vmatprep.mubr.bf16.mxu0 0
        %1073 = vmatmul.mubr.bf16.gmra.mrb[0].mxu0 %v937
        %v1074 = vpop.f32.mrb[0].mxu0
        %v1075 = vadd.f32 0.0, %v1074
        %v1076 = vpop.f32.mrb[0].mxu0
        %v1077 = vpop.f32.mrb[0].mxu0
        %v1078 = vadd.f32 0.0, %v1077
        %v1079 = vpop.f32.mrb[0].mxu0
        %1080 = vmatprep.mubr.bf16.mxu0 0
        %1081 = vmatmul.mubr.bf16.gmra.mrb[0].mxu0 %v938
        %v1082 = vpop.f32.mrb[0].mxu0
        %v1083 = vadd.f32 0.0, %v1082
        %v1084 = vpop.f32.mrb[0].mxu0
        %v1085 = vpop.f32.mrb[0].mxu0
        %v1086 = vadd.f32 0.0, %v1085
        %v1087 = vpop.f32.mrb[0].mxu0
        %1088 = vmatprep.mubr.bf16.mxu0 0
        %1089 = vmatmul.mubr.bf16.gmra.mrb[0].mxu0 %v939
        %v1090 = vpop.f32.mrb[0].mxu0
        %v1091 = vadd.f32 0.0, %v1090
        %v1092 = vpop.f32.mrb[0].mxu0
        %v1093 = vpop.f32.mrb[0].mxu0
        %v1094 = vadd.f32 0.0, %v1093
        %v1095 = vpop.f32.mrb[0].mxu0
        %1096 = vmatprep.mubr.bf16.mxu0 0
        %1097 = vmatmul.mubr.bf16.gmra.mrb[0].mxu0 %v940
        %v1098 = vpop.f32.mrb[0].mxu0
        %v1099 = vadd.f32 0.0, %v1098
        %v1100 = vpop.f32.mrb[0].mxu0
        %v1101 = vpop.f32.mrb[0].mxu0
        %v1102 = vadd.f32 0.0, %v1101
        %v1103 = vpop.f32.mrb[0].mxu0
        %1104 = vmatprep.mubr.bf16.mxu0 0
        %1105 = vmatmul.mubr.bf16.gmra.mrb[0].mxu0 %v941
        %v1106 = vpop.f32.mrb[0].mxu0
        %v1107 = vadd.f32 0.0, %v1106
        %v1108 = vpop.f32.mrb[0].mxu0
        %v1109 = vpop.f32.mrb[0].mxu0
        %v1110 = vadd.f32 0.0, %v1109
        %v1111 = vpop.f32.mrb[0].mxu0
        %1112 = vmatprep.mubr.bf16.mxu0 0
        %1113 = vmatmul.mubr.bf16.gmra.mrb[0].mxu0 %v942
        %v1114 = vpop.f32.mrb[0].mxu0
        %v1115 = vadd.f32 0.0, %v1114
        %v1116 = vpop.f32.mrb[0].mxu0
        %v1117 = vpop.f32.mrb[0].mxu0
        %v1118 = vadd.f32 0.0, %v1117
        %v1119 = vpop.f32.mrb[0].mxu0
        %1120 = vmatprep.mubr.bf16.mxu0 0
        %1121 = vmatmul.mubr.bf16.gmra.mrb[0].mxu0 %v943
        %v1122 = vpop.f32.mrb[0].mxu0
        %v1123 = vadd.f32 0.0, %v1122
        %v1124 = vpop.f32.mrb[0].mxu0
        %v1125 = vpop.f32.mrb[0].mxu0
        %v1126 = vadd.f32 0.0, %v1125
        %v1127 = vpop.f32.mrb[0].mxu0
        %1128 = vmatprep.mubr.bf16.mxu0 0
        %1129 = vmatmul.mubr.bf16.gmra.mrb[0].mxu0 %v944
        %v1130 = vpop.f32.mrb[0].mxu0
        %v1131 = vadd.f32 0.0, %v1130
        %v1132 = vpop.f32.mrb[0].mxu0
        %v1133 = vpop.f32.mrb[0].mxu0
        %v1134 = vadd.f32 0.0, %v1133
        %v1135 = vpop.f32.mrb[0].mxu0
        %1136 = vmatprep.mubr.bf16.mxu0 0
        %1137 = vmatmul.mubr.bf16.gmra.mrb[0].mxu0 %v945
        %v1138 = vpop.f32.mrb[0].mxu0
        %v1139 = vadd.f32 0.0, %v1138
        %v1140 = vpop.f32.mrb[0].mxu0
        %v1141 = vpop.f32.mrb[0].mxu0
        %v1142 = vadd.f32 0.0, %v1141
        %v1143 = vpop.f32.mrb[0].mxu0
        %1144 = vmatprep.mubr.bf16.mxu0 0
        %1145 = vmatmul.mubr.bf16.gmra.mrb[0].mxu0 %v946
        %v1146 = vpop.f32.mrb[0].mxu0
        %v1147 = vadd.f32 0.0, %v1146
        %v1148 = vpop.f32.mrb[0].mxu0
        %v1149 = vpop.f32.mrb[0].mxu0
        %v1150 = vadd.f32 0.0, %v1149
        %v1151 = vpop.f32.mrb[0].mxu0
        %1152 = vmatprep.mubr.bf16.mxu0 0
        %1153 = vmatmul.mubr.bf16.gmra.mrb[0].mxu0 %v947
        %v1154 = vpop.f32.mrb[0].mxu0
        %v1155 = vadd.f32 0.0, %v1154
        %v1156 = vpop.f32.mrb[0].mxu0
        %v1157 = vpop.f32.mrb[0].mxu0
        %v1158 = vadd.f32 0.0, %v1157
        %v1159 = vpop.f32.mrb[0].mxu0
        %1160 = vmatprep.mubr.bf16.mxu0 0
        %1161 = vmatmul.mubr.bf16.gmra.mrb[0].mxu0 %v948
        %v1162 = vpop.f32.mrb[0].mxu0
        %v1163 = vadd.f32 0.0, %v1162
        %v1164 = vpop.f32.mrb[0].mxu0
        %v1165 = vpop.f32.mrb[0].mxu0
        %v1166 = vadd.f32 0.0, %v1165
        %v1167 = vpop.f32.mrb[0].mxu0
        %1168 = vmatprep.mubr.bf16.mxu0 0
        %1169 = vmatmul.mubr.bf16.gmra.mrb[0].mxu0 %v949
        %v1170 = vpop.f32.mrb[0].mxu0
        %v1171 = vadd.f32 0.0, %v1170
        %v1172 = vpop.f32.mrb[0].mxu0
        %v1173 = vpop.f32.mrb[0].mxu0
        %v1174 = vadd.f32 0.0, %v1173
        %v1175 = vpop.f32.mrb[0].mxu0
        %1176 = vmatprep.mubr.bf16.mxu0 0
        %1177 = vmatmul.mubr.bf16.gmra.mrb[0].mxu0 %v950
        %v1178 = vpop.f32.mrb[0].mxu0
        %v1179 = vadd.f32 0.0, %v1178
        %v1180 = vpop.f32.mrb[0].mxu0
        %v1181 = vpop.f32.mrb[0].mxu0
        %v1182 = vadd.f32 0.0, %v1181
        %v1183 = vpop.f32.mrb[0].mxu0
        %1184 = vmatprep.mubr.bf16.mxu0 0
        %1185 = vmatmul.mubr.bf16.gmra.mrb[0].mxu0 %v951
        %v1186 = vpop.f32.mrb[0].mxu0
        %v1187 = vadd.f32 0.0, %v1186
        %v1188 = vpop.f32.mrb[0].mxu0
        %v1189 = vpop.f32.mrb[0].mxu0
        %v1190 = vadd.f32 0.0, %v1189
        %v1191 = vpop.f32.mrb[0].mxu0
        %1192 = vmatprep.mubr.bf16.mxu0 0
        %1193 = vmatmul.mubr.bf16.gmra.mrb[0].mxu0 %v952
        %v1194 = vpop.f32.mrb[0].mxu0
        %v1195 = vadd.f32 0.0, %v1194
        %v1196 = vpop.f32.mrb[0].mxu0
        %v1197 = vpop.f32.mrb[0].mxu0
        %v1198 = vadd.f32 0.0, %v1197
        %v1199 = vpop.f32.mrb[0].mxu0
        %1200 = vmatprep.mubr.bf16.mxu0 0
        %1201 = vmatmul.mubr.bf16.gmra.mrb[0].mxu0 %v953
        %v1202 = vpop.f32.mrb[0].mxu0
        %v1203 = vadd.f32 0.0, %v1202
        %v1204 = vpop.f32.mrb[0].mxu0
        %v1205 = vpop.f32.mrb[0].mxu0
        %v1206 = vadd.f32 0.0, %v1205
        %v1207 = vpop.f32.mrb[0].mxu0
        %1208 = vmatprep.mubr.bf16.mxu0 0
        %1209 = vmatmul.mubr.bf16.gmra.mrb[0].mxu0 %v954
        %v1210 = vpop.f32.mrb[0].mxu0
        %v1211 = vadd.f32 0.0, %v1210
        %v1212 = vpop.f32.mrb[0].mxu0
        %v1213 = vpop.f32.mrb[0].mxu0
        %v1214 = vadd.f32 0.0, %v1213
        %v1215 = vpop.f32.mrb[0].mxu0
        %1216 = vmatprep.mubr.bf16.mxu0 0
        %1217 = vmatmul.mubr.bf16.gmra.mrb[0].mxu0 %v955
        %v1218 = vpop.f32.mrb[0].mxu0
        %v1219 = vadd.f32 0.0, %v1218
        %v1220 = vpop.f32.mrb[0].mxu0
        %v1221 = vpop.f32.mrb[0].mxu0
        %v1222 = vadd.f32 0.0, %v1221
        %v1223 = vpop.f32.mrb[0].mxu0
        %1224 = vmatprep.mubr.bf16.mxu0 0
        %1225 = vmatmul.mubr.bf16.gmra.mrb[0].mxu0 %v956
        %v1226 = vpop.f32.mrb[0].mxu0
        %v1227 = vadd.f32 0.0, %v1226
        %v1228 = vpop.f32.mrb[0].mxu0
        %v1229 = vpop.f32.mrb[0].mxu0
        %v1230 = vadd.f32 0.0, %v1229
        %v1231 = vpop.f32.mrb[0].mxu0
        %1232 = vmatprep.mubr.bf16.mxu0 0
        %1233 = vmatmul.mubr.bf16.gmra.mrb[0].mxu0 %v957
        %v1234 = vpop.f32.mrb[0].mxu0
        %v1235 = vadd.f32 0.0, %v1234
        %v1236 = vpop.f32.mrb[0].mxu0
        %v1237 = vpop.f32.mrb[0].mxu0
        %v1238 = vadd.f32 0.0, %v1237
        %v1239 = vpop.f32.mrb[0].mxu0
        %1240 = vmatprep.mubr.bf16.mxu0 0
        %1241 = vmatmul.mubr.bf16.gmra.mrb[0].mxu0 %v958
        %v1242 = vpop.f32.mrb[0].mxu0
        %v1243 = vadd.f32 0.0, %v1242
        %v1244 = vpop.f32.mrb[0].mxu0
        %v1245 = vpop.f32.mrb[0].mxu0
        %v1246 = vadd.f32 0.0, %v1245
        %v1247 = vpop.f32.mrb[0].mxu0
        %1248 = vmatprep.mubr.bf16.mxu0 0
        %1249 = vmatmul.mubr.bf16.gmra.mrb[0].mxu0 %v959
        %v1250 = vpop.f32.mrb[0].mxu0
        %v1251 = vadd.f32 0.0, %v1250
        %v1252 = vpop.f32.mrb[0].mxu0
        %v1253 = vpop.f32.mrb[0].mxu0
        %v1254 = vadd.f32 0.0, %v1253
        %v1255 = vpop.f32.mrb[0].mxu0
        %1256 = vmatprep.mubr.bf16.mxu0 0
        %1257 = vmatmul.mubr.bf16.gmra.mrb[0].mxu0 %v960
        %v1258 = vpop.f32.mrb[0].mxu0
        %v1259 = vadd.f32 0.0, %v1258
        %v1260 = vpop.f32.mrb[0].mxu0
        %v1261 = vpop.f32.mrb[0].mxu0
        %v1262 = vadd.f32 0.0, %v1261
        %v1263 = vpop.f32.mrb[0].mxu0
        %1264 = vmatprep.mubr.bf16.mxu0 0
        %1265 = vmatmul.mubr.bf16.gmra.mrb[0].mxu0 %v961
        %v1266 = vpop.f32.mrb[0].mxu0
        %v1267 = vadd.f32 0.0, %v1266
        %v1268 = vpop.f32.mrb[0].mxu0
        %v1269 = vpop.f32.mrb[0].mxu0
        %v1270 = vadd.f32 0.0, %v1269
        %v1271 = vpop.f32.mrb[0].mxu0
        %1272 = vmatprep.mubr.bf16.mxu0 0
        %1273 = vmatmul.mubr.bf16.gmra.mrb[0].mxu0 %v962
        %v1274 = vpop.f32.mrb[0].mxu0
        %v1275 = vadd.f32 0.0, %v1274
        %v1276 = vpop.f32.mrb[0].mxu0
        %v1277 = vpop.f32.mrb[0].mxu0
        %v1278 = vadd.f32 0.0, %v1277
        %v1279 = vpop.f32.mrb[0].mxu0
        %1280 = vmatprep.mubr.bf16.mxu0 0
        %1281 = vmatmul.mubr.bf16.gmra.mrb[0].mxu0 %v963
        %v1282 = vpop.f32.mrb[0].mxu0
        %v1283 = vadd.f32 0.0, %v1282
        %v1284 = vpop.f32.mrb[0].mxu0
        %v1285 = vpop.f32.mrb[0].mxu0
        %v1286 = vadd.f32 0.0, %v1285
        %v1287 = vpop.f32.mrb[0].mxu0
        %1288 = vmatprep.mubr.bf16.mxu0 0
        %1289 = vmatmul.mubr.bf16.gmra.mrb[0].mxu0 %v964
        %v1290 = vpop.f32.mrb[0].mxu0
        %v1291 = vadd.f32 0.0, %v1290
        %v1292 = vpop.f32.mrb[0].mxu0
        %v1293 = vpop.f32.mrb[0].mxu0
        %v1294 = vadd.f32 0.0, %v1293
        %v1295 = vpop.f32.mrb[0].mxu0
        %1296 = vmatprep.mubr.bf16.mxu0 0
        %1297 = vmatmul.mubr.bf16.gmra.mrb[0].mxu0 %v965
        %v1298 = vpop.f32.mrb[0].mxu0
        %v1299 = vadd.f32 0.0, %v1298
        %v1300 = vpop.f32.mrb[0].mxu0
        %v1301 = vpop.f32.mrb[0].mxu0
        %v1302 = vadd.f32 0.0, %v1301
        %v1303 = vpop.f32.mrb[0].mxu0
        %1304 = vmatprep.mubr.bf16.mxu0 0
        %1305 = vmatmul.mubr.bf16.gmra.mrb[0].mxu0 %v966
        %v1306 = vpop.f32.mrb[0].mxu0
        %v1307 = vadd.f32 0.0, %v1306
        %v1308 = vpop.f32.mrb[0].mxu0
        %v1309 = vpop.f32.mrb[0].mxu0
        %v1310 = vadd.f32 0.0, %v1309
        %v1311 = vpop.f32.mrb[0].mxu0
        %1312 = vmatprep.mubr.bf16.mxu0 0
        %1313 = vmatmul.mubr.bf16.gmra.mrb[0].mxu0 %v967
        %v1314 = vpop.f32.mrb[0].mxu0
        %v1315 = vadd.f32 0.0, %v1314
        %v1316 = vpop.f32.mrb[0].mxu0
        %v1317 = vpop.f32.mrb[0].mxu0
        %v1318 = vadd.f32 0.0, %v1317
        %v1319 = vpop.f32.mrb[0].mxu0
        %1320 = vdwg.mxu0
        %v1321 = vmax.f32 %v1067, 0.0
        %v1322 = vmax.f32 %v1070, 0.0
        %v1323 = vmax.f32 %v1075, 0.0
        %v1324 = vmax.f32 %v1078, 0.0
        %v1325 = vmax.f32 %v1083, 0.0
        %v1326 = vmax.f32 %v1086, 0.0
        %v1327 = vmax.f32 %v1091, 0.0
        %v1328 = vmax.f32 %v1094, 0.0
        %v1329 = vmax.f32 %v1099, 0.0
        %v1330 = vmax.f32 %v1102, 0.0
        %v1331 = vmax.f32 %v1107, 0.0
        %v1332 = vmax.f32 %v1110, 0.0
        %v1333 = vmax.f32 %v1115, 0.0
        %v1334 = vmax.f32 %v1118, 0.0
        %v1335 = vmax.f32 %v1123, 0.0
        %v1336 = vmax.f32 %v1126, 0.0
        %v1337 = vmax.f32 %v1131, 0.0
        %v1338 = vmax.f32 %v1134, 0.0
        %v1339 = vmax.f32 %v1139, 0.0
        %v1340 = vmax.f32 %v1142, 0.0
        %v1341 = vmax.f32 %v1147, 0.0
        %v1342 = vmax.f32 %v1150, 0.0
        %v1343 = vmax.f32 %v1155, 0.0
        %v1344 = vmax.f32 %v1158, 0.0
        %v1345 = vmax.f32 %v1163, 0.0
        %v1346 = vmax.f32 %v1166, 0.0
        %v1347 = vmax.f32 %v1171, 0.0
        %v1348 = vmax.f32 %v1174, 0.0
        %v1349 = vmax.f32 %v1179, 0.0
        %v1350 = vmax.f32 %v1182, 0.0
        %v1351 = vmax.f32 %v1187, 0.0
        %v1352 = vmax.f32 %v1190, 0.0
        %v1353 = vmax.f32 %v1195, 0.0
        %v1354 = vmax.f32 %v1198, 0.0
        %v1355 = vmax.f32 %v1203, 0.0
        %v1356 = vmax.f32 %v1206, 0.0
        %v1357 = vmax.f32 %v1211, 0.0
        %v1358 = vmax.f32 %v1214, 0.0
        %v1359 = vmax.f32 %v1219, 0.0
        %v1360 = vmax.f32 %v1222, 0.0
        %v1361 = vmax.f32 %v1227, 0.0
        %v1362 = vmax.f32 %v1230, 0.0
        %v1363 = vmax.f32 %v1235, 0.0
        %v1364 = vmax.f32 %v1238, 0.0
        %v1365 = vmax.f32 %v1243, 0.0
        %v1366 = vmax.f32 %v1246, 0.0
        %v1367 = vmax.f32 %v1251, 0.0
        %v1368 = vmax.f32 %v1254, 0.0
        %v1369 = vmax.f32 %v1259, 0.0
        %v1370 = vmax.f32 %v1262, 0.0
        %v1371 = vmax.f32 %v1267, 0.0
        %v1372 = vmax.f32 %v1270, 0.0
        %v1373 = vmax.f32 %v1275, 0.0
        %v1374 = vmax.f32 %v1278, 0.0
        %v1375 = vmax.f32 %v1283, 0.0
        %v1376 = vmax.f32 %v1286, 0.0
        %v1377 = vmax.f32 %v1291, 0.0
        %v1378 = vmax.f32 %v1294, 0.0
        %v1379 = vmax.f32 %v1299, 0.0
        %v1380 = vmax.f32 %v1302, 0.0
        %v1381 = vmax.f32 %v1307, 0.0
        %v1382 = vmax.f32 %v1310, 0.0
        %v1383 = vmax.f32 %v1315, 0.0
        %v1384 = vmax.f32 %v1318, 0.0
        %v1385 = vpack.c.bf16 %v1322, %v1321
        %v1386 = vpack.c.bf16 %v1324, %v1323
        %v1387 = vpack.c.bf16 %v1326, %v1325
        %v1388 = vpack.c.bf16 %v1328, %v1327
        %v1389 = vpack.c.bf16 %v1330, %v1329
        %v1390 = vpack.c.bf16 %v1332, %v1331
        %v1391 = vpack.c.bf16 %v1334, %v1333
        %v1392 = vpack.c.bf16 %v1336, %v1335
        %v1393 = vpack.c.bf16 %v1338, %v1337
        %v1394 = vpack.c.bf16 %v1340, %v1339
        %v1395 = vpack.c.bf16 %v1342, %v1341
        %v1396 = vpack.c.bf16 %v1344, %v1343
        %v1397 = vpack.c.bf16 %v1346, %v1345
        %v1398 = vpack.c.bf16 %v1348, %v1347
        %v1399 = vpack.c.bf16 %v1350, %v1349
        %v1400 = vpack.c.bf16 %v1352, %v1351
        %v1401 = vpack.c.bf16 %v1354, %v1353
        %v1402 = vpack.c.bf16 %v1356, %v1355
        %v1403 = vpack.c.bf16 %v1358, %v1357
        %v1404 = vpack.c.bf16 %v1360, %v1359
        %v1405 = vpack.c.bf16 %v1362, %v1361
        %v1406 = vpack.c.bf16 %v1364, %v1363
        %v1407 = vpack.c.bf16 %v1366, %v1365
        %v1408 = vpack.c.bf16 %v1368, %v1367
        %v1409 = vpack.c.bf16 %v1370, %v1369
        %v1410 = vpack.c.bf16 %v1372, %v1371
        %v1411 = vpack.c.bf16 %v1374, %v1373
        %v1412 = vpack.c.bf16 %v1376, %v1375
        %v1413 = vpack.c.bf16 %v1378, %v1377
        %v1414 = vpack.c.bf16 %v1380, %v1379
        %v1415 = vpack.c.bf16 %v1382, %v1381
        %v1416 = vpack.c.bf16 %v1384, %v1383
        %v1417 = vld [vmem:[#allocation8] sm:$0xf]
        %v1418 = vld [vmem:[#allocation8 + $0x4] sm:$0xf]
        %v1419 = vld [vmem:[#allocation8 + $0x8] sm:$0xf]
        %v1420 = vld [vmem:[#allocation8 + $0xc] sm:$0xf]
        %v1421 = vld [vmem:[#allocation8 + $0x10] sm:$0xf]
        %v1422 = vld [vmem:[#allocation8 + $0x14] sm:$0xf]
        %v1423 = vld [vmem:[#allocation8 + $0x18] sm:$0xf]
        %v1424 = vld [vmem:[#allocation8 + $0x1c] sm:$0xf]
        %v1425 = vld [vmem:[#allocation8 + $0x20] sm:$0xf]
        %v1426 = vld [vmem:[#allocation8 + $0x24] sm:$0xf]
        %v1427 = vld [vmem:[#allocation8 + $0x28] sm:$0xf]
        %v1428 = vld [vmem:[#allocation8 + $0x2c] sm:$0xf]
        %v1429 = vld [vmem:[#allocation8 + $0x30] sm:$0xf]
        %v1430 = vld [vmem:[#allocation8 + $0x34] sm:$0xf]
        %v1431 = vld [vmem:[#allocation8 + $0x38] sm:$0xf]
        %v1432 = vld [vmem:[#allocation8 + $0x3c] sm:$0xf]
        %v1449 = vunpack.c.l.b16 %v1417
        %v1450 = vunpack.c.l.b16 %v1418
        %v1451 = vunpack.c.l.b16 %v1419
        %v1452 = vunpack.c.l.b16 %v1420
        %v1453 = vunpack.c.l.b16 %v1421
        %v1454 = vunpack.c.l.b16 %v1422
        %v1455 = vunpack.c.l.b16 %v1423
        %v1456 = vunpack.c.l.b16 %v1424
        %v1457 = vunpack.c.l.b16 %v1425
        %v1458 = vunpack.c.l.b16 %v1426
        %v1459 = vunpack.c.l.b16 %v1427
        %v1460 = vunpack.c.l.b16 %v1428
        %v1461 = vunpack.c.l.b16 %v1429
        %v1462 = vunpack.c.l.b16 %v1430
        %v1463 = vunpack.c.l.b16 %v1431
        %v1464 = vunpack.c.l.b16 %v1432
        %v1465 = vpack.c.b16 %v1450, %v1449
        %v1466 = vpack.c.b16 %v1452, %v1451
        %v1467 = vpack.c.b16 %v1454, %v1453
        %v1468 = vpack.c.b16 %v1456, %v1455
        %v1469 = vpack.c.b16 %v1458, %v1457
        %v1470 = vpack.c.b16 %v1460, %v1459
        %v1471 = vpack.c.b16 %v1462, %v1461
        %v1472 = vpack.c.b16 %v1464, %v1463
        %1481 = vmatprep.subr.bf16.mxu0 0
        %1482 = vmatpush1.bf16.msra.mxu0 %v1465
        %1483 = vmatprep.subr.bf16.mxu0 0
        %1484 = vmatpush1.bf16.msra.mxu0 %v1466
        %1485 = vmatprep.subr.bf16.mxu0 0
        %1486 = vmatpush1.bf16.msra.mxu0 %v1467
        %1487 = vmatprep.subr.bf16.mxu0 0
        %1488 = vmatpush1.bf16.msra.mxu0 %v1468
        %1489 = vmatprep.subr.bf16.mxu0 0
        %1490 = vmatpush1.bf16.msra.mxu0 %v1469
        %1491 = vmatprep.subr.bf16.mxu0 0
        %1492 = vmatpush1.bf16.msra.mxu0 %v1470
        %1493 = vmatprep.subr.bf16.mxu0 0
        %1494 = vmatpush1.bf16.msra.mxu0 %v1471
        %1495 = vmatprep.subr.bf16.mxu0 0
        %1496 = vmatpush1.bf16.msra.mxu0 %v1472
        %1497 = vmatprep.subr.bf16.mxu0 0
        %1498 = vmatpush1.bf16.msra.mxu0 0
        %1499 = vmatprep.subr.bf16.mxu0 0
        %1500 = vmatpush1.bf16.msra.mxu0 0
        %1501 = vmatprep.subr.bf16.mxu0 0
        %1502 = vmatpush1.bf16.msra.mxu0 0
        %1503 = vmatprep.subr.bf16.mxu0 0
        %1504 = vmatpush1.bf16.msra.mxu0 0
        %1505 = vmatprep.subr.bf16.mxu0 0
        %1506 = vmatpush1.bf16.msra.mxu0 0
        %1507 = vmatprep.subr.bf16.mxu0 0
        %1508 = vmatpush1.bf16.msra.mxu0 0
        %1509 = vmatprep.subr.bf16.mxu0 0
        %1510 = vmatpush1.bf16.msra.mxu0 0
        %1511 = vmatprep.subr.bf16.mxu0 0
        %1512 = vmatpush1.bf16.msra.mxu0 0
        %1513 = vmatprep.mubr.bf16.mxu0 0
        %1514 = vmatmul.mubr.bf16.gmra.mrb[0].mxu0 %v1385
        %v1515 = vpop.f32.mrb[0].mxu0
        %v1516 = vadd.f32 0.0, %v1515
        %v1517 = vpop.f32.mrb[0].mxu0
        %v1518 = vpop.f32.mrb[0].mxu0
        %v1519 = vadd.f32 0.0, %v1518
        %v1520 = vpop.f32.mrb[0].mxu0
        %1521 = vmatprep.mubr.bf16.mxu0 0
        %1522 = vmatmul.mubr.bf16.gmra.mrb[0].mxu0 %v1386
        %v1523 = vpop.f32.mrb[0].mxu0
        %v1524 = vadd.f32 0.0, %v1523
        %v1525 = vpop.f32.mrb[0].mxu0
        %v1526 = vpop.f32.mrb[0].mxu0
        %v1527 = vadd.f32 0.0, %v1526
        %v1528 = vpop.f32.mrb[0].mxu0
        %1529 = vmatprep.mubr.bf16.mxu0 0
        %1530 = vmatmul.mubr.bf16.gmra.mrb[0].mxu0 %v1387
        %v1531 = vpop.f32.mrb[0].mxu0
        %v1532 = vadd.f32 0.0, %v1531
        %v1533 = vpop.f32.mrb[0].mxu0
        %v1534 = vpop.f32.mrb[0].mxu0
        %v1535 = vadd.f32 0.0, %v1534
        %v1536 = vpop.f32.mrb[0].mxu0
        %1537 = vmatprep.mubr.bf16.mxu0 0
        %1538 = vmatmul.mubr.bf16.gmra.mrb[0].mxu0 %v1388
        %v1539 = vpop.f32.mrb[0].mxu0
        %v1540 = vadd.f32 0.0, %v1539
        %v1541 = vpop.f32.mrb[0].mxu0
        %v1542 = vpop.f32.mrb[0].mxu0
        %v1543 = vadd.f32 0.0, %v1542
        %v1544 = vpop.f32.mrb[0].mxu0
        %1545 = vmatprep.mubr.bf16.mxu0 0
        %1546 = vmatmul.mubr.bf16.gmra.mrb[0].mxu0 %v1389
        %v1547 = vpop.f32.mrb[0].mxu0
        %v1548 = vadd.f32 0.0, %v1547
        %v1549 = vpop.f32.mrb[0].mxu0
        %v1550 = vpop.f32.mrb[0].mxu0
        %v1551 = vadd.f32 0.0, %v1550
        %v1552 = vpop.f32.mrb[0].mxu0
        %1553 = vmatprep.mubr.bf16.mxu0 0
        %1554 = vmatmul.mubr.bf16.gmra.mrb[0].mxu0 %v1390
        %v1555 = vpop.f32.mrb[0].mxu0
        %v1556 = vadd.f32 0.0, %v1555
        %v1557 = vpop.f32.mrb[0].mxu0
        %v1558 = vpop.f32.mrb[0].mxu0
        %v1559 = vadd.f32 0.0, %v1558
        %v1560 = vpop.f32.mrb[0].mxu0
        %1561 = vmatprep.mubr.bf16.mxu0 0
        %1562 = vmatmul.mubr.bf16.gmra.mrb[0].mxu0 %v1391
        %v1563 = vpop.f32.mrb[0].mxu0
        %v1564 = vadd.f32 0.0, %v1563
        %v1565 = vpop.f32.mrb[0].mxu0
        %v1566 = vpop.f32.mrb[0].mxu0
        %v1567 = vadd.f32 0.0, %v1566
        %v1568 = vpop.f32.mrb[0].mxu0
        %1569 = vmatprep.mubr.bf16.mxu0 0
        %1570 = vmatmul.mubr.bf16.gmra.mrb[0].mxu0 %v1392
        %v1571 = vpop.f32.mrb[0].mxu0
        %v1572 = vadd.f32 0.0, %v1571
        %v1573 = vpop.f32.mrb[0].mxu0
        %v1574 = vpop.f32.mrb[0].mxu0
        %v1575 = vadd.f32 0.0, %v1574
        %v1576 = vpop.f32.mrb[0].mxu0
        %1577 = vmatprep.mubr.bf16.mxu0 0
        %1578 = vmatmul.mubr.bf16.gmra.mrb[0].mxu0 %v1393
        %v1579 = vpop.f32.mrb[0].mxu0
        %v1580 = vadd.f32 0.0, %v1579
        %v1581 = vpop.f32.mrb[0].mxu0
        %v1582 = vpop.f32.mrb[0].mxu0
        %v1583 = vadd.f32 0.0, %v1582
        %v1584 = vpop.f32.mrb[0].mxu0
        %1585 = vmatprep.mubr.bf16.mxu0 0
        %1586 = vmatmul.mubr.bf16.gmra.mrb[0].mxu0 %v1394
        %v1587 = vpop.f32.mrb[0].mxu0
        %v1588 = vadd.f32 0.0, %v1587
        %v1589 = vpop.f32.mrb[0].mxu0
        %v1590 = vpop.f32.mrb[0].mxu0
        %v1591 = vadd.f32 0.0, %v1590
        %v1592 = vpop.f32.mrb[0].mxu0
        %1593 = vmatprep.mubr.bf16.mxu0 0
        %1594 = vmatmul.mubr.bf16.gmra.mrb[0].mxu0 %v1395
        %v1595 = vpop.f32.mrb[0].mxu0
        %v1596 = vadd.f32 0.0, %v1595
        %v1597 = vpop.f32.mrb[0].mxu0
        %v1598 = vpop.f32.mrb[0].mxu0
        %v1599 = vadd.f32 0.0, %v1598
        %v1600 = vpop.f32.mrb[0].mxu0
        %1601 = vmatprep.mubr.bf16.mxu0 0
        %1602 = vmatmul.mubr.bf16.gmra.mrb[0].mxu0 %v1396
        %v1603 = vpop.f32.mrb[0].mxu0
        %v1604 = vadd.f32 0.0, %v1603
        %v1605 = vpop.f32.mrb[0].mxu0
        %v1606 = vpop.f32.mrb[0].mxu0
        %v1607 = vadd.f32 0.0, %v1606
        %v1608 = vpop.f32.mrb[0].mxu0
        %1609 = vmatprep.mubr.bf16.mxu0 0
        %1610 = vmatmul.mubr.bf16.gmra.mrb[0].mxu0 %v1397
        %v1611 = vpop.f32.mrb[0].mxu0
        %v1612 = vadd.f32 0.0, %v1611
        %v1613 = vpop.f32.mrb[0].mxu0
        %v1614 = vpop.f32.mrb[0].mxu0
        %v1615 = vadd.f32 0.0, %v1614
        %v1616 = vpop.f32.mrb[0].mxu0
        %1617 = vmatprep.mubr.bf16.mxu0 0
        %1618 = vmatmul.mubr.bf16.gmra.mrb[0].mxu0 %v1398
        %v1619 = vpop.f32.mrb[0].mxu0
        %v1620 = vadd.f32 0.0, %v1619
        %v1621 = vpop.f32.mrb[0].mxu0
        %v1622 = vpop.f32.mrb[0].mxu0
        %v1623 = vadd.f32 0.0, %v1622
        %v1624 = vpop.f32.mrb[0].mxu0
        %1625 = vmatprep.mubr.bf16.mxu0 0
        %1626 = vmatmul.mubr.bf16.gmra.mrb[0].mxu0 %v1399
        %v1627 = vpop.f32.mrb[0].mxu0
        %v1628 = vadd.f32 0.0, %v1627
        %v1629 = vpop.f32.mrb[0].mxu0
        %v1630 = vpop.f32.mrb[0].mxu0
        %v1631 = vadd.f32 0.0, %v1630
        %v1632 = vpop.f32.mrb[0].mxu0
        %1633 = vmatprep.mubr.bf16.mxu0 0
        %1634 = vmatmul.mubr.bf16.gmra.mrb[0].mxu0 %v1400
        %v1635 = vpop.f32.mrb[0].mxu0
        %v1636 = vadd.f32 0.0, %v1635
        %v1637 = vpop.f32.mrb[0].mxu0
        %v1638 = vpop.f32.mrb[0].mxu0
        %v1639 = vadd.f32 0.0, %v1638
        %v1640 = vpop.f32.mrb[0].mxu0
        %1641 = vmatprep.mubr.bf16.mxu0 0
        %1642 = vmatmul.mubr.bf16.gmra.mrb[0].mxu0 %v1401
        %v1643 = vpop.f32.mrb[0].mxu0
        %v1644 = vadd.f32 0.0, %v1643
        %v1645 = vpop.f32.mrb[0].mxu0
        %v1646 = vpop.f32.mrb[0].mxu0
        %v1647 = vadd.f32 0.0, %v1646
        %v1648 = vpop.f32.mrb[0].mxu0
        %1649 = vmatprep.mubr.bf16.mxu0 0
        %1650 = vmatmul.mubr.bf16.gmra.mrb[0].mxu0 %v1402
        %v1651 = vpop.f32.mrb[0].mxu0
        %v1652 = vadd.f32 0.0, %v1651
        %v1653 = vpop.f32.mrb[0].mxu0
        %v1654 = vpop.f32.mrb[0].mxu0
        %v1655 = vadd.f32 0.0, %v1654
        %v1656 = vpop.f32.mrb[0].mxu0
        %1657 = vmatprep.mubr.bf16.mxu0 0
        %1658 = vmatmul.mubr.bf16.gmra.mrb[0].mxu0 %v1403
        %v1659 = vpop.f32.mrb[0].mxu0
        %v1660 = vadd.f32 0.0, %v1659
        %v1661 = vpop.f32.mrb[0].mxu0
        %v1662 = vpop.f32.mrb[0].mxu0
        %v1663 = vadd.f32 0.0, %v1662
        %v1664 = vpop.f32.mrb[0].mxu0
        %1665 = vmatprep.mubr.bf16.mxu0 0
        %1666 = vmatmul.mubr.bf16.gmra.mrb[0].mxu0 %v1404
        %v1667 = vpop.f32.mrb[0].mxu0
        %v1668 = vadd.f32 0.0, %v1667
        %v1669 = vpop.f32.mrb[0].mxu0
        %v1670 = vpop.f32.mrb[0].mxu0
        %v1671 = vadd.f32 0.0, %v1670
        %v1672 = vpop.f32.mrb[0].mxu0
        %1673 = vmatprep.mubr.bf16.mxu0 0
        %1674 = vmatmul.mubr.bf16.gmra.mrb[0].mxu0 %v1405
        %v1675 = vpop.f32.mrb[0].mxu0
        %v1676 = vadd.f32 0.0, %v1675
        %v1677 = vpop.f32.mrb[0].mxu0
        %v1678 = vpop.f32.mrb[0].mxu0
        %v1679 = vadd.f32 0.0, %v1678
        %v1680 = vpop.f32.mrb[0].mxu0
        %1681 = vmatprep.mubr.bf16.mxu0 0
        %1682 = vmatmul.mubr.bf16.gmra.mrb[0].mxu0 %v1406
        %v1683 = vpop.f32.mrb[0].mxu0
        %v1684 = vadd.f32 0.0, %v1683
        %v1685 = vpop.f32.mrb[0].mxu0
        %v1686 = vpop.f32.mrb[0].mxu0
        %v1687 = vadd.f32 0.0, %v1686
        %v1688 = vpop.f32.mrb[0].mxu0
        %1689 = vmatprep.mubr.bf16.mxu0 0
        %1690 = vmatmul.mubr.bf16.gmra.mrb[0].mxu0 %v1407
        %v1691 = vpop.f32.mrb[0].mxu0
        %v1692 = vadd.f32 0.0, %v1691
        %v1693 = vpop.f32.mrb[0].mxu0
        %v1694 = vpop.f32.mrb[0].mxu0
        %v1695 = vadd.f32 0.0, %v1694
        %v1696 = vpop.f32.mrb[0].mxu0
        %1697 = vmatprep.mubr.bf16.mxu0 0
        %1698 = vmatmul.mubr.bf16.gmra.mrb[0].mxu0 %v1408
        %v1699 = vpop.f32.mrb[0].mxu0
        %v1700 = vadd.f32 0.0, %v1699
        %v1701 = vpop.f32.mrb[0].mxu0
        %v1702 = vpop.f32.mrb[0].mxu0
        %v1703 = vadd.f32 0.0, %v1702
        %v1704 = vpop.f32.mrb[0].mxu0
        %1705 = vmatprep.mubr.bf16.mxu0 0
        %1706 = vmatmul.mubr.bf16.gmra.mrb[0].mxu0 %v1409
        %v1707 = vpop.f32.mrb[0].mxu0
        %v1708 = vadd.f32 0.0, %v1707
        %v1709 = vpop.f32.mrb[0].mxu0
        %v1710 = vpop.f32.mrb[0].mxu0
        %v1711 = vadd.f32 0.0, %v1710
        %v1712 = vpop.f32.mrb[0].mxu0
        %1713 = vmatprep.mubr.bf16.mxu0 0
        %1714 = vmatmul.mubr.bf16.gmra.mrb[0].mxu0 %v1410
        %v1715 = vpop.f32.mrb[0].mxu0
        %v1716 = vadd.f32 0.0, %v1715
        %v1717 = vpop.f32.mrb[0].mxu0
        %v1718 = vpop.f32.mrb[0].mxu0
        %v1719 = vadd.f32 0.0, %v1718
        %v1720 = vpop.f32.mrb[0].mxu0
        %1721 = vmatprep.mubr.bf16.mxu0 0
        %1722 = vmatmul.mubr.bf16.gmra.mrb[0].mxu0 %v1411
        %v1723 = vpop.f32.mrb[0].mxu0
        %v1724 = vadd.f32 0.0, %v1723
        %v1725 = vpop.f32.mrb[0].mxu0
        %v1726 = vpop.f32.mrb[0].mxu0
        %v1727 = vadd.f32 0.0, %v1726
        %v1728 = vpop.f32.mrb[0].mxu0
        %1729 = vmatprep.mubr.bf16.mxu0 0
        %1730 = vmatmul.mubr.bf16.gmra.mrb[0].mxu0 %v1412
        %v1731 = vpop.f32.mrb[0].mxu0
        %v1732 = vadd.f32 0.0, %v1731
        %v1733 = vpop.f32.mrb[0].mxu0
        %v1734 = vpop.f32.mrb[0].mxu0
        %v1735 = vadd.f32 0.0, %v1734
        %v1736 = vpop.f32.mrb[0].mxu0
        %1737 = vmatprep.mubr.bf16.mxu0 0
        %1738 = vmatmul.mubr.bf16.gmra.mrb[0].mxu0 %v1413
        %v1739 = vpop.f32.mrb[0].mxu0
        %v1740 = vadd.f32 0.0, %v1739
        %v1741 = vpop.f32.mrb[0].mxu0
        %v1742 = vpop.f32.mrb[0].mxu0
        %v1743 = vadd.f32 0.0, %v1742
        %v1744 = vpop.f32.mrb[0].mxu0
        %1745 = vmatprep.mubr.bf16.mxu0 0
        %1746 = vmatmul.mubr.bf16.gmra.mrb[0].mxu0 %v1414
        %v1747 = vpop.f32.mrb[0].mxu0
        %v1748 = vadd.f32 0.0, %v1747
        %v1749 = vpop.f32.mrb[0].mxu0
        %v1750 = vpop.f32.mrb[0].mxu0
        %v1751 = vadd.f32 0.0, %v1750
        %v1752 = vpop.f32.mrb[0].mxu0
        %1753 = vmatprep.mubr.bf16.mxu0 0
        %1754 = vmatmul.mubr.bf16.gmra.mrb[0].mxu0 %v1415
        %v1755 = vpop.f32.mrb[0].mxu0
        %v1756 = vadd.f32 0.0, %v1755
        %v1757 = vpop.f32.mrb[0].mxu0
        %v1758 = vpop.f32.mrb[0].mxu0
        %v1759 = vadd.f32 0.0, %v1758
        %v1760 = vpop.f32.mrb[0].mxu0
        %1761 = vmatprep.mubr.bf16.mxu0 0
        %1762 = vmatmul.mubr.bf16.gmra.mrb[0].mxu0 %v1416
        %v1763 = vpop.f32.mrb[0].mxu0
        %v1764 = vadd.f32 0.0, %v1763
        %v1765 = vpop.f32.mrb[0].mxu0
        %v1766 = vpop.f32.mrb[0].mxu0
        %v1767 = vadd.f32 0.0, %v1766
        %v1768 = vpop.f32.mrb[0].mxu0
        %1769 = vdwg.mxu0
        %v1770 = vpack.c.bf16 %v1519, %v1516
        %v1771 = vpack.c.bf16 %v1527, %v1524
        %v1772 = vpack.c.bf16 %v1535, %v1532
        %v1773 = vpack.c.bf16 %v1543, %v1540
        %v1774 = vpack.c.bf16 %v1551, %v1548
        %v1775 = vpack.c.bf16 %v1559, %v1556
        %v1776 = vpack.c.bf16 %v1567, %v1564
        %v1777 = vpack.c.bf16 %v1575, %v1572
        %v1778 = vpack.c.bf16 %v1583, %v1580
        %v1779 = vpack.c.bf16 %v1591, %v1588
        %v1780 = vpack.c.bf16 %v1599, %v1596
        %v1781 = vpack.c.bf16 %v1607, %v1604
        %v1782 = vpack.c.bf16 %v1615, %v1612
        %v1783 = vpack.c.bf16 %v1623, %v1620
        %v1784 = vpack.c.bf16 %v1631, %v1628
        %v1785 = vpack.c.bf16 %v1639, %v1636
        %v1786 = vpack.c.bf16 %v1647, %v1644
        %v1787 = vpack.c.bf16 %v1655, %v1652
        %v1788 = vpack.c.bf16 %v1663, %v1660
        %v1789 = vpack.c.bf16 %v1671, %v1668
        %v1790 = vpack.c.bf16 %v1679, %v1676
        %v1791 = vpack.c.bf16 %v1687, %v1684
        %v1792 = vpack.c.bf16 %v1695, %v1692
        %v1793 = vpack.c.bf16 %v1703, %v1700
        %v1794 = vpack.c.bf16 %v1711, %v1708
        %v1795 = vpack.c.bf16 %v1719, %v1716
        %v1796 = vpack.c.bf16 %v1727, %v1724
        %v1797 = vpack.c.bf16 %v1735, %v1732
        %v1798 = vpack.c.bf16 %v1743, %v1740
        %v1799 = vpack.c.bf16 %v1751, %v1748
        %v1800 = vpack.c.bf16 %v1759, %v1756
        %v1801 = vpack.c.bf16 %v1767, %v1764
        %v1834 = vunpack.c.l.b16 %v1770
        %v1835 = vunpack.c.h.b16 %v1770
        %v1836 = vunpack.c.l.b16 %v1771
        %v1837 = vunpack.c.h.b16 %v1771
        %v1838 = vunpack.c.l.b16 %v1772
        %v1839 = vunpack.c.h.b16 %v1772
        %v1840 = vunpack.c.l.b16 %v1773
        %v1841 = vunpack.c.h.b16 %v1773
        %v1842 = vunpack.c.l.b16 %v1774
        %v1843 = vunpack.c.h.b16 %v1774
        %v1844 = vunpack.c.l.b16 %v1775
        %v1845 = vunpack.c.h.b16 %v1775
        %v1846 = vunpack.c.l.b16 %v1776
        %v1847 = vunpack.c.h.b16 %v1776
        %v1848 = vunpack.c.l.b16 %v1777
        %v1849 = vunpack.c.h.b16 %v1777
        %v1850 = vunpack.c.l.b16 %v1778
        %v1851 = vunpack.c.h.b16 %v1778
        %v1852 = vunpack.c.l.b16 %v1779
        %v1853 = vunpack.c.h.b16 %v1779
        %v1854 = vunpack.c.l.b16 %v1780
        %v1855 = vunpack.c.h.b16 %v1780
        %v1856 = vunpack.c.l.b16 %v1781
        %v1857 = vunpack.c.h.b16 %v1781
        %v1858 = vunpack.c.l.b16 %v1782
        %v1859 = vunpack.c.h.b16 %v1782
        %v1860 = vunpack.c.l.b16 %v1783
        %v1861 = vunpack.c.h.b16 %v1783
        %v1862 = vunpack.c.l.b16 %v1784
        %v1863 = vunpack.c.h.b16 %v1784
        %v1864 = vunpack.c.l.b16 %v1785
        %v1865 = vunpack.c.h.b16 %v1785
        %v1866 = vunpack.c.l.b16 %v1786
        %v1867 = vunpack.c.h.b16 %v1786
        %v1868 = vunpack.c.l.b16 %v1787
        %v1869 = vunpack.c.h.b16 %v1787
        %v1870 = vunpack.c.l.b16 %v1788
        %v1871 = vunpack.c.h.b16 %v1788
        %v1872 = vunpack.c.l.b16 %v1789
        %v1873 = vunpack.c.h.b16 %v1789
        %v1874 = vunpack.c.l.b16 %v1790
        %v1875 = vunpack.c.h.b16 %v1790
        %v1876 = vunpack.c.l.b16 %v1791
        %v1877 = vunpack.c.h.b16 %v1791
        %v1878 = vunpack.c.l.b16 %v1792
        %v1879 = vunpack.c.h.b16 %v1792
        %v1880 = vunpack.c.l.b16 %v1793
        %v1881 = vunpack.c.h.b16 %v1793
        %v1882 = vunpack.c.l.b16 %v1794
        %v1883 = vunpack.c.h.b16 %v1794
        %v1884 = vunpack.c.l.b16 %v1795
        %v1885 = vunpack.c.h.b16 %v1795
        %v1886 = vunpack.c.l.b16 %v1796
        %v1887 = vunpack.c.h.b16 %v1796
        %v1888 = vunpack.c.l.b16 %v1797
        %v1889 = vunpack.c.h.b16 %v1797
        %v1890 = vunpack.c.l.b16 %v1798
        %v1891 = vunpack.c.h.b16 %v1798
        %v1892 = vunpack.c.l.b16 %v1799
        %v1893 = vunpack.c.h.b16 %v1799
        %v1894 = vunpack.c.l.b16 %v1800
        %v1895 = vunpack.c.h.b16 %v1800
        %v1896 = vunpack.c.l.b16 %v1801
        %v1897 = vunpack.c.h.b16 %v1801
        %v1898 = vpack.c.b16 %v1834, %v1834
        %v1899 = vpack.c.b16 %v1835, %v1835
        %v1900 = vpack.c.b16 %v1836, %v1836
        %v1901 = vpack.c.b16 %v1837, %v1837
        %v1902 = vpack.c.b16 %v1838, %v1838
        %v1903 = vpack.c.b16 %v1839, %v1839
        %v1904 = vpack.c.b16 %v1840, %v1840
        %v1905 = vpack.c.b16 %v1841, %v1841
        %v1906 = vpack.c.b16 %v1842, %v1842
        %v1907 = vpack.c.b16 %v1843, %v1843
        %v1908 = vpack.c.b16 %v1844, %v1844
        %v1909 = vpack.c.b16 %v1845, %v1845
        %v1910 = vpack.c.b16 %v1846, %v1846
        %v1911 = vpack.c.b16 %v1847, %v1847
        %v1912 = vpack.c.b16 %v1848, %v1848
        %v1913 = vpack.c.b16 %v1849, %v1849
        %v1914 = vpack.c.b16 %v1850, %v1850
        %v1915 = vpack.c.b16 %v1851, %v1851
        %v1916 = vpack.c.b16 %v1852, %v1852
        %v1917 = vpack.c.b16 %v1853, %v1853
        %v1918 = vpack.c.b16 %v1854, %v1854
        %v1919 = vpack.c.b16 %v1855, %v1855
        %v1920 = vpack.c.b16 %v1856, %v1856
        %v1921 = vpack.c.b16 %v1857, %v1857
        %v1922 = vpack.c.b16 %v1858, %v1858
        %v1923 = vpack.c.b16 %v1859, %v1859
        %v1924 = vpack.c.b16 %v1860, %v1860
        %v1925 = vpack.c.b16 %v1861, %v1861
        %v1926 = vpack.c.b16 %v1862, %v1862
        %v1927 = vpack.c.b16 %v1863, %v1863
        %v1928 = vpack.c.b16 %v1864, %v1864
        %v1929 = vpack.c.b16 %v1865, %v1865
        %v1930 = vpack.c.b16 %v1866, %v1866
        %v1931 = vpack.c.b16 %v1867, %v1867
        %v1932 = vpack.c.b16 %v1868, %v1868
        %v1933 = vpack.c.b16 %v1869, %v1869
        %v1934 = vpack.c.b16 %v1870, %v1870
        %v1935 = vpack.c.b16 %v1871, %v1871
        %v1936 = vpack.c.b16 %v1872, %v1872
        %v1937 = vpack.c.b16 %v1873, %v1873
        %v1938 = vpack.c.b16 %v1874, %v1874
        %v1939 = vpack.c.b16 %v1875, %v1875
        %v1940 = vpack.c.b16 %v1876, %v1876
        %v1941 = vpack.c.b16 %v1877, %v1877
        %v1942 = vpack.c.b16 %v1878, %v1878
        %v1943 = vpack.c.b16 %v1879, %v1879
        %v1944 = vpack.c.b16 %v1880, %v1880
        %v1945 = vpack.c.b16 %v1881, %v1881
        %v1946 = vpack.c.b16 %v1882, %v1882
        %v1947 = vpack.c.b16 %v1883, %v1883
        %v1948 = vpack.c.b16 %v1884, %v1884
        %v1949 = vpack.c.b16 %v1885, %v1885
        %v1950 = vpack.c.b16 %v1886, %v1886
        %v1951 = vpack.c.b16 %v1887, %v1887
        %v1952 = vpack.c.b16 %v1888, %v1888
        %v1953 = vpack.c.b16 %v1889, %v1889
        %v1954 = vpack.c.b16 %v1890, %v1890
        %v1955 = vpack.c.b16 %v1891, %v1891
        %v1956 = vpack.c.b16 %v1892, %v1892
        %v1957 = vpack.c.b16 %v1893, %v1893
        %v1958 = vpack.c.b16 %v1894, %v1894
        %v1959 = vpack.c.b16 %v1895, %v1895
        %v1960 = vpack.c.b16 %v1896, %v1896
        %v1961 = vpack.c.b16 %v1897, %v1897
        %2026 = vst [vmem:[%s259] sm:$0xf] %v1898
        %2027 = vst [vmem:[%s259 + $0x4] sm:$0xf] %v1899
        %2028 = vst [vmem:[%s259 + $0x8] sm:$0xf] %v1900
        %2029 = vst [vmem:[%s259 + $0xc] sm:$0xf] %v1901
        %2030 = vst [vmem:[%s259 + $0x10] sm:$0xf] %v1902
        %2031 = vst [vmem:[%s259 + $0x14] sm:$0xf] %v1903
        %2032 = vst [vmem:[%s259 + $0x18] sm:$0xf] %v1904
        %2033 = vst [vmem:[%s259 + $0x1c] sm:$0xf] %v1905
        %2034 = vst [vmem:[%s259 + $0x20] sm:$0xf] %v1906
        %2035 = vst [vmem:[%s259 + $0x24] sm:$0xf] %v1907
        %2036 = vst [vmem:[%s259 + $0x28] sm:$0xf] %v1908
        %2037 = vst [vmem:[%s259 + $0x2c] sm:$0xf] %v1909
        %2038 = vst [vmem:[%s259 + $0x30] sm:$0xf] %v1910
        %2039 = vst [vmem:[%s259 + $0x34] sm:$0xf] %v1911
        %2040 = vst [vmem:[%s259 + $0x38] sm:$0xf] %v1912
        %2041 = vst [vmem:[%s259 + $0x3c] sm:$0xf] %v1913
        %2042 = vst [vmem:[%s259 + $0x40] sm:$0xf] %v1914
        %2043 = vst [vmem:[%s259 + $0x44] sm:$0xf] %v1915
        %2044 = vst [vmem:[%s259 + $0x48] sm:$0xf] %v1916
        %2045 = vst [vmem:[%s259 + $0x4c] sm:$0xf] %v1917
        %2046 = vst [vmem:[%s259 + $0x50] sm:$0xf] %v1918
        %2047 = vst [vmem:[%s259 + $0x54] sm:$0xf] %v1919
        %2048 = vst [vmem:[%s259 + $0x58] sm:$0xf] %v1920
        %2049 = vst [vmem:[%s259 + $0x5c] sm:$0xf] %v1921
        %2050 = vst [vmem:[%s259 + $0x60] sm:$0xf] %v1922
        %2051 = vst [vmem:[%s259 + $0x64] sm:$0xf] %v1923
        %2052 = vst [vmem:[%s259 + $0x68] sm:$0xf] %v1924
        %2053 = vst [vmem:[%s259 + $0x6c] sm:$0xf] %v1925
        %2054 = vst [vmem:[%s259 + $0x70] sm:$0xf] %v1926
        %2055 = vst [vmem:[%s259 + $0x74] sm:$0xf] %v1927
        %2056 = vst [vmem:[%s259 + $0x78] sm:$0xf] %v1928
        %2057 = vst [vmem:[%s259 + $0x7c] sm:$0xf] %v1929
        %2058 = vst [vmem:[%s259 + $0x80] sm:$0xf] %v1930
        %2059 = vst [vmem:[%s259 + $0x84] sm:$0xf] %v1931
        %2060 = vst [vmem:[%s259 + $0x88] sm:$0xf] %v1932
        %2061 = vst [vmem:[%s259 + $0x8c] sm:$0xf] %v1933
        %2062 = vst [vmem:[%s259 + $0x90] sm:$0xf] %v1934
        %2063 = vst [vmem:[%s259 + $0x94] sm:$0xf] %v1935
        %2064 = vst [vmem:[%s259 + $0x98] sm:$0xf] %v1936
        %2065 = vst [vmem:[%s259 + $0x9c] sm:$0xf] %v1937
        %2066 = vst [vmem:[%s259 + $0xa0] sm:$0xf] %v1938
        %2067 = vst [vmem:[%s259 + $0xa4] sm:$0xf] %v1939
        %2068 = vst [vmem:[%s259 + $0xa8] sm:$0xf] %v1940
        %2069 = vst [vmem:[%s259 + $0xac] sm:$0xf] %v1941
        %2070 = vst [vmem:[%s259 + $0xb0] sm:$0xf] %v1942
        %2071 = vst [vmem:[%s259 + $0xb4] sm:$0xf] %v1943
        %2072 = vst [vmem:[%s259 + $0xb8] sm:$0xf] %v1944
        %2073 = vst [vmem:[%s259 + $0xbc] sm:$0xf] %v1945
        %2074 = vst [vmem:[%s259 + $0xc0] sm:$0xf] %v1946
        %2075 = vst [vmem:[%s259 + $0xc4] sm:$0xf] %v1947
        %2076 = vst [vmem:[%s259 + $0xc8] sm:$0xf] %v1948
        %2077 = vst [vmem:[%s259 + $0xcc] sm:$0xf] %v1949
        %2078 = vst [vmem:[%s259 + $0xd0] sm:$0xf] %v1950
        %2079 = vst [vmem:[%s259 + $0xd4] sm:$0xf] %v1951
        %2080 = vst [vmem:[%s259 + $0xd8] sm:$0xf] %v1952
        %2081 = vst [vmem:[%s259 + $0xdc] sm:$0xf] %v1953
        %2082 = vst [vmem:[%s259 + $0xe0] sm:$0xf] %v1954
        %2083 = vst [vmem:[%s259 + $0xe4] sm:$0xf] %v1955
        %2084 = vst [vmem:[%s259 + $0xe8] sm:$0xf] %v1956
        %2085 = vst [vmem:[%s259 + $0xec] sm:$0xf] %v1957
        %2086 = vst [vmem:[%s259 + $0xf0] sm:$0xf] %v1958
        %2087 = vst [vmem:[%s259 + $0xf4] sm:$0xf] %v1959
        %2088 = vst [vmem:[%s259 + $0xf8] sm:$0xf] %v1960
        %2089 = vst [vmem:[%s259 + $0xfc] sm:$0xf] %v1961
        %s2090 = sand.u32 %s120, 1
        %s2091 = scalar_lea.sflag [#allocation4], %s2090
        %s2092 = sand.u32 %s120, 1
        %s2093 = smul.addr %s2092, 256
        %s2094 = scalar_lea.vmem [#allocation10], %s2093
        // Predicated region
        $region53: #{tpu_custom_call.1} parent=35 // pred_check
          %p2095 = pneg %p130
        $region54: #{tpu_custom_call.1} parent=35 // pred_check_branch
          %2097 = sbr.rel (%p2095) target = $region56
        $region55: #{tpu_custom_call.1} parent=35 // pred_region
          %s2098 = smul.u32 64, %s23
          %s2100 = ssub.s32 4096, 4096
          %2101 = vsyncadd %s2091, %s2100
          %s2102 = smul.addr %s2098, 64
          %s2103 = scalar_lea.hbm %s4, %s2102
          %s2104 = sshll.u32 %s2094, 4
          %s2105 = int_to_ptr.vmem [resolvable:$true] %s2104
          %2110 = dma.vmem_to_hbm [thread:$0]  %s2105, 4096, %s2103, %s2091, 64, 64, 4
        $region56: #{tpu_custom_call.1} parent=35 // pred_fallthru
          _
      $region36: #{tpu_custom_call.1} parent=5 // pred_fallthru
        _
      %p2111 = scmp.le.s32.totalorder 2, %s18
      // Predicated region
      $region57: #{tpu_custom_call.1} parent=5 // pred_check
        %p2112 = pneg %p2111
      $region58: #{tpu_custom_call.1} parent=5 // pred_check_branch
        %2114 = sbr.rel (%p2112) target = $region60
      $region59: #{tpu_custom_call.1} parent=5 // pred_region
        %s2115 = ssub.s32 %s18, 2
        // Predicated region
        $region61: #{tpu_custom_call.1} parent=59 // pred_check
          %p2116 = pneg %p136
        $region62: #{tpu_custom_call.1} parent=59 // pred_check_branch
          %2118 = sbr.rel (%p2116) target = $region64
        $region63: #{tpu_custom_call.1} parent=59 // pred_region
          %s2119 = sand.u32 %s121, 1
          %s2120 = scalar_lea.sflag [#allocation4], %s2119
          %s2121 = sand.u32 %s121, 1
          %s2122 = smul.addr %s2121, 256
          %s2123 = scalar_lea.vmem [#allocation10], %s2122
          %2124 = dma.done %s2120, 4096
        $region64: #{tpu_custom_call.1} parent=59 // pred_fallthru
          _
      $region60: #{tpu_custom_call.1} parent=5 // pred_fallthru
        _
    $region6: #{tpu_custom_call.1} parent=1 // loop_footer
      %s22 = sadd.s32 1, %s18
    $region7: #{tpu_custom_call.1} parent=1 // loop_footer_branch
      %17 = sbr.rel target = $region3
    $region8: #{tpu_custom_call.1} parent=1 // loop_exit
      _
    %2125 = vsyncpa [#allocation3], 1
    %s2126 = scalar_lea.sflag [#allocation3], 1
    %2127 = vsyncpa %s2126, 1
    %2128 = vsyncpa [#allocation6], 1
    %2129 = vsyncpa [#allocation9], 1
    %2130 = vsyncpa [#allocation4], 1
    %s2131 = scalar_lea.sflag [#allocation4], 1
    %2132 = vsyncpa %s2131, 1

// kernel: tpu_custom_call.1
$region0: #{tpu_custom_call.1}
  #allocation0 [shape = 'u32[]', space=smem, size = 0x4, offset = 0x4, fixed_abs, tag = 'smem constant byte address 0x4 - core index']
  #allocation1 [shape = 'u32[144,128]{1,0:T(1,128)}', space=vmem, size = 0x12000, scoped, tag = 'internal scratch']
  %s0 = inlined_call_operand.hbm [shape: bf16[1024,128], index: 0, kind: input, shape index: {}]
  %s1 = inlined_call_operand.hbm [shape: bf16[128,128], index: 1, kind: input, shape index: {}]
  %s2 = inlined_call_operand.hbm [shape: bf16[128,128], index: 2, kind: input, shape index: {}]
  %s3 = inlined_call_operand.hbm [shape: bf16[128,128], index: 3, kind: input, shape index: {}]
  %s4 = inlined_call_operand.hbm [shape: bf16[1024,128], index: 4, kind: output, shape index: {}]
  %s5 = sld [smem:[#allocation0]]
  $region65: #{tpu_custom_call.1} parent=0
    _
  %s7 = ssub.s32 1, %s5
  %s8 = scalar_select 0, %s7, %s5
  $region1: #{tpu_custom_call.1} parent=0
    #allocation2 [shape = 'u8[262144]{0}', space=vmem, size = 0x40000, scoped, tag = 'input window, operand 0']
    #allocation3 [shape = 's32[2]{0}', space=sflag, size = 0x8, scoped, tag = 'scoped memory for tpu_custom_call.1']
    #allocation4 [shape = 's32[2]{0}', space=sflag, size = 0x8, scoped, tag = 'scoped memory for tpu_custom_call.1']
    #allocation5 [shape = 'u8[32768]{0}', space=vmem, size = 0x8000, scoped, tag = 'input window, operand 1, single buffered']
    #allocation6 [shape = 's32[1]{0}', space=sflag, size = 0x4, scoped, tag = 'scoped memory for tpu_custom_call.1']
    #allocation7 [shape = 'u8[32768]{0}', space=vmem, size = 0x8000, scoped, tag = 'input window, operand 2, single buffered']
    #allocation8 [shape = 'u8[32768]{0}', space=vmem, size = 0x8000, scoped, tag = 'input window, operand 3, single buffered']
    #allocation9 [shape = 's32[1]{0}', space=sflag, size = 0x4, scoped, tag = 'scoped memory for tpu_custom_call.1']
    #allocation10 [shape = 'u8[262144]{0}', space=vmem, size = 0x40000, scoped, tag = 'output window, operand 0']
    %9 = vsyncpa [#allocation3], 0
    %s10 = scalar_lea.sflag [#allocation3], 1
    %11 = vsyncpa %s10, 0
    %12 = vsyncpa [#allocation6], 0
    %13 = vsyncpa [#allocation9], 0
    %14 = vsyncpa [#allocation4], 0
    %s15 = scalar_lea.sflag [#allocation4], 1
    %16 = vsyncpa %s15, 0
    loop: start=0, step=1, limit=4
    $region2: #{tpu_custom_call.1} parent=1 // loop_pre_header
      _
    $region3: #{tpu_custom_call.1} parent=1 // loop_header
      %s18 = sphi 0, %s22
      %p19 = scmp.ge.s32.totalorder %s18, 4
      %s28 = sphi 0, %s30
      %s31 = sphi 0, %s28
      %s32 = sphi 0, %s31
      %s48 = sphi 0, %s32
      %s52 = sphi 0, %s52
      %s54 = sphi 0, %s52
      %s55 = sphi 0, %s54
      %s69 = sphi 0, %s55
      %s73 = sphi 0, %s73
      %s75 = sphi 0, %s73
      %s76 = sphi 0, %s75
      %s90 = sphi 0, %s76
      %s94 = sphi 0, %s94
      %s96 = sphi 0, %s94
      %s97 = sphi 0, %s96
      %s111 = sphi 0, %s97
      %s117 = sphi 0, %s119
      %s120 = sphi 0, %s117
      %s121 = sphi 0, %s120
      %s137 = sphi 0, %s121
    $region4: #{tpu_custom_call.1} parent=1 // loop_header_branch
      %21 = sbr.rel (%p19) target = $region8
    $region5: #{tpu_custom_call.1} parent=1 // loop_body
      %s23 = ssub.s32 %s18, 1
      %s24 = ssub.s32 %s18, 2
      %s25 = sadd.s32 %s18, 1
      %s26 = ssub.s32 %s18, %s25
      %p27 = scmp.eq.s32.totalorder %s26, 0
      %s29 = sadd.s32 %s28, 1
      %s30 = scalar_select %p27, %s28, %s29
      %p33 = pneg %p27
      %p34 = scmp.eq.s32.totalorder %s18, 1
      %p35 = por %p33, %p34
      %p36 = scmp.ne.s32.totalorder %s28, %s31
      %p37 = scmp.eq.s32.totalorder %s18, 0
      %p38 = por %p36, %p37
      %p39 = scmp.ne.s32.totalorder %s28, %s31
      %p40 = scmp.eq.s32.totalorder %s23, 1
      %p41 = por %p39, %p40
      %p42 = scmp.ne.s32.totalorder %s31, %s32
      %p43 = scmp.eq.s32.totalorder %s23, 0
      %p44 = por %p42, %p43
      %p45 = scmp.ne.s32.totalorder %s31, %s32
      %p46 = scmp.eq.s32.totalorder %s24, 1
      %p47 = por %p45, %p46
      %p49 = scmp.ne.s32.totalorder %s32, %s48
      %p50 = scmp.eq.s32.totalorder %s24, 0
      %p51 = por %p49, %p50
      %s53 = sadd.s32 %s52, 1
      %p56 = scmp.eq.s32.totalorder %s18, 1
      %p57 = scmp.ne.s32.totalorder %s52, %s54
      %p58 = scmp.eq.s32.totalorder %s18, 0
      %p59 = por %p57, %p58
      %p60 = scmp.ne.s32.totalorder %s52, %s54
      %p61 = scmp.eq.s32.totalorder %s23, 1
      %p62 = por %p60, %p61
      %p63 = scmp.ne.s32.totalorder %s54, %s55
      %p64 = scmp.eq.s32.totalorder %s23, 0
      %p65 = por %p63, %p64
      %p66 = scmp.ne.s32.totalorder %s54, %s55
      %p67 = scmp.eq.s32.totalorder %s24, 1
      %p68 = por %p66, %p67
      %p70 = scmp.ne.s32.totalorder %s55, %s69
      %p71 = scmp.eq.s32.totalorder %s24, 0
      %p72 = por %p70, %p71
      %s74 = sadd.s32 %s73, 1
      %p77 = scmp.eq.s32.totalorder %s18, 1
      %p78 = scmp.ne.s32.totalorder %s73, %s75
      %p79 = scmp.eq.s32.totalorder %s18, 0
      %p80 = por %p78, %p79
      %p81 = scmp.ne.s32.totalorder %s73, %s75
      %p82 = scmp.eq.s32.totalorder %s23, 1
      %p83 = por %p81, %p82
      %p84 = scmp.ne.s32.totalorder %s75, %s76
      %p85 = scmp.eq.s32.totalorder %s23, 0
      %p86 = por %p84, %p85
      %p87 = scmp.ne.s32.totalorder %s75, %s76
      %p88 = scmp.eq.s32.totalorder %s24, 1
      %p89 = por %p87, %p88
      %p91 = scmp.ne.s32.totalorder %s76, %s90
      %p92 = scmp.eq.s32.totalorder %s24, 0
      %p93 = por %p91, %p92
      %s95 = sadd.s32 %s94, 1
      %p98 = scmp.eq.s32.totalorder %s18, 1
      %p99 = scmp.ne.s32.totalorder %s94, %s96
      %p100 = scmp.eq.s32.totalorder %s18, 0
      %p101 = por %p99, %p100
      %p102 = scmp.ne.s32.totalorder %s94, %s96
      %p103 = scmp.eq.s32.totalorder %s23, 1
      %p104 = por %p102, %p103
      %p105 = scmp.ne.s32.totalorder %s96, %s97
      %p106 = scmp.eq.s32.totalorder %s23, 0
      %p107 = por %p105, %p106
      %p108 = scmp.ne.s32.totalorder %s96, %s97
      %p109 = scmp.eq.s32.totalorder %s24, 1
      %p110 = por %p108, %p109
      %p112 = scmp.ne.s32.totalorder %s97, %s111
      %p113 = scmp.eq.s32.totalorder %s24, 0
      %p114 = por %p112, %p113
      %s115 = ssub.s32 %s18, %s25
      %p116 = scmp.eq.s32.totalorder %s115, 0
      %s118 = sadd.s32 %s117, 1
      %s119 = scalar_select %p116, %s117, %s118
      %p122 = pneg %p116
      %p123 = scmp.eq.s32.totalorder %s18, 1
      %p124 = por %p122, %p123
      %p125 = scmp.ne.s32.totalorder %s117, %s120
      %p126 = scmp.eq.s32.totalorder %s18, 0
      %p127 = por %p125, %p126
      %p128 = scmp.ne.s32.totalorder %s117, %s120
      %p129 = scmp.eq.s32.totalorder %s23, 1
      %p130 = por %p128, %p129
      %p131 = scmp.ne.s32.totalorder %s120, %s121
      %p132 = scmp.eq.s32.totalorder %s23, 0
      %p133 = por %p131, %p132
      %p134 = scmp.ne.s32.totalorder %s120, %s121
      %p135 = scmp.eq.s32.totalorder %s24, 1
      %p136 = por %p134, %p135
      %p138 = scmp.ne.s32.totalorder %s121, %s137
      %p139 = scmp.eq.s32.totalorder %s24, 0
      %p140 = por %p138, %p139
      %p141 = scmp.le.s32.totalorder 1, %s18
      %p142 = scmp.lt.s32.totalorder %s18, 3
      %p143 = pnand %p141, %p142
      %p144 = pneg %p143
      // Predicated region
      $region9: #{tpu_custom_call.1} parent=5 // pred_check
        _
      $region10: #{tpu_custom_call.1} parent=5 // pred_check_branch
        %146 = sbr.rel (%p143) target = $region12
      $region11: #{tpu_custom_call.1} parent=5 // pred_region
        %s147 = ssub.s32 %s18, 1
        // Predicated region
        $region13: #{tpu_custom_call.1} parent=11 // pred_check
          %p148 = pneg %p65
        $region14: #{tpu_custom_call.1} parent=11 // pred_check_branch
          %150 = sbr.rel (%p148) target = $region16
        $region15: #{tpu_custom_call.1} parent=11 // pred_region
          %s152 = ssub.s32 1024, 1024
          %153 = vsyncadd [#allocation6], %s152
          %s154 = sshll.u32 [#allocation5], 4
          %s155 = int_to_ptr.vmem [resolvable:$true] %s154
          %160 = dma.hbm_to_vmem [thread:$0]  %s1, 1024, %s155, [#allocation6], 64, 64, 4
        $region16: #{tpu_custom_call.1} parent=11 // pred_fallthru
          _
        // Predicated region
        $region17: #{tpu_custom_call.1} parent=11 // pred_check
          %p161 = pneg %p86
        $region18: #{tpu_custom_call.1} parent=11 // pred_check_branch
          %163 = sbr.rel (%p161) target = $region20
        $region19: #{tpu_custom_call.1} parent=11 // pred_region
          %s165 = ssub.s32 1024, 1024
          %166 = vsyncadd [#allocation6], %s165
          %s167 = sshll.u32 [#allocation7], 4
          %s168 = int_to_ptr.vmem [resolvable:$true] %s167
          %173 = dma.hbm_to_vmem [thread:$0]  %s2, 1024, %s168, [#allocation6], 64, 64, 4
        $region20: #{tpu_custom_call.1} parent=11 // pred_fallthru
          _
        // Predicated region
        $region21: #{tpu_custom_call.1} parent=11 // pred_check
          %p174 = pneg %p107
        $region22: #{tpu_custom_call.1} parent=11 // pred_check_branch
          %176 = sbr.rel (%p174) target = $region24
        $region23: #{tpu_custom_call.1} parent=11 // pred_region
          %s178 = ssub.s32 1024, 1024
          %179 = vsyncadd [#allocation9], %s178
          %s180 = sshll.u32 [#allocation8], 4
          %s181 = int_to_ptr.vmem [resolvable:$true] %s180
          %186 = dma.hbm_to_vmem [thread:$0]  %s3, 1024, %s181, [#allocation9], 64, 64, 4
        $region24: #{tpu_custom_call.1} parent=11 // pred_fallthru
          _
      $region12: #{tpu_custom_call.1} parent=5 // pred_fallthru
        _
      %p187 = scmp.lt.s32.totalorder %s18, 2
      // Predicated region
      $region25: #{tpu_custom_call.1} parent=5 // pred_check
        %p188 = pneg %p187
      $region26: #{tpu_custom_call.1} parent=5 // pred_check_branch
        %190 = sbr.rel (%p188) target = $region28
      $region27: #{tpu_custom_call.1} parent=5 // pred_region
        // Predicated region
        $region29: #{tpu_custom_call.1} parent=27 // pred_check
          %p191 = pneg %p38
        $region30: #{tpu_custom_call.1} parent=27 // pred_check_branch
          %193 = sbr.rel (%p191) target = $region32
        $region31: #{tpu_custom_call.1} parent=27 // pred_region
          %s194 = sand.u32 %s28, 1
          %s195 = scalar_lea.sflag [#allocation3], %s194
          %s196 = sand.u32 %s28, 1
          %s197 = smul.addr %s196, 256
          %s198 = scalar_lea.vmem [#allocation2], %s197
          %s199 = smul.u32 64, %s18
          %s201 = ssub.s32 4096, 4096
          %202 = vsyncadd %s195, %s201
          %s203 = smul.addr %s199, 64
          %s204 = scalar_lea.hbm %s0, %s203
          %s205 = sshll.u32 %s198, 4
          %s206 = int_to_ptr.vmem [resolvable:$true] %s205
          %211 = dma.hbm_to_vmem [thread:$0]  %s204, 4096, %s206, %s195, 64, 64, 4
        $region32: #{tpu_custom_call.1} parent=27 // pred_fallthru
          _
      $region28: #{tpu_custom_call.1} parent=5 // pred_fallthru
        _
      %p212 = scmp.le.s32.totalorder 1, %s18
      %p213 = scmp.lt.s32.totalorder %s18, 3
      %p214 = pnand %p212, %p213
      %p215 = pneg %p214
      // Predicated region
      $region33: #{tpu_custom_call.1} parent=5 // pred_check
        _
      $region34: #{tpu_custom_call.1} parent=5 // pred_check_branch
        %217 = sbr.rel (%p214) target = $region36
      $region35: #{tpu_custom_call.1} parent=5 // pred_region
        %s218 = ssub.s32 %s18, 1
        %s219 = sand.u32 %s31, 1
        %s220 = scalar_lea.sflag [#allocation3], %s219
        %s221 = sand.u32 %s31, 1
        %s222 = smul.addr %s221, 256
        %s223 = scalar_lea.vmem [#allocation2], %s222
        // Predicated region
        $region37: #{tpu_custom_call.1} parent=35 // pred_check
          %p224 = pneg %p44
        $region38: #{tpu_custom_call.1} parent=35 // pred_check_branch
          %226 = sbr.rel (%p224) target = $region40
        $region39: #{tpu_custom_call.1} parent=35 // pred_region
          %227 = dma.done %s220, 4096
        $region40: #{tpu_custom_call.1} parent=35 // pred_fallthru
          _
        // Predicated region
        $region41: #{tpu_custom_call.1} parent=35 // pred_check
          %p228 = pneg %p65
        $region42: #{tpu_custom_call.1} parent=35 // pred_check_branch
          %230 = sbr.rel (%p228) target = $region44
        $region43: #{tpu_custom_call.1} parent=35 // pred_region
          %231 = dma.done [#allocation6], 1024
        $region44: #{tpu_custom_call.1} parent=35 // pred_fallthru
          _
        // Predicated region
        $region45: #{tpu_custom_call.1} parent=35 // pred_check
          %p232 = pneg %p86
        $region46: #{tpu_custom_call.1} parent=35 // pred_check_branch
          %234 = sbr.rel (%p232) target = $region48
        $region47: #{tpu_custom_call.1} parent=35 // pred_region
          %235 = dma.done [#allocation6], 1024
        $region48: #{tpu_custom_call.1} parent=35 // pred_fallthru
          _
        // Predicated region
        $region49: #{tpu_custom_call.1} parent=35 // pred_check
          %p236 = pneg %p107
        $region50: #{tpu_custom_call.1} parent=35 // pred_check_branch
          %238 = sbr.rel (%p236) target = $region52
        $region51: #{tpu_custom_call.1} parent=35 // pred_region
          %239 = dma.done [#allocation9], 1024
        $region52: #{tpu_custom_call.1} parent=35 // pred_fallthru
          _
        %s240 = sand.u32 %s31, 1
        %s241 = scalar_lea.sflag [#allocation3], %s240
        %s242 = sand.u32 %s31, 1
        %s243 = smul.addr %s242, 256
        %s244 = scalar_lea.vmem [#allocation2], %s243
        %p245 = pneg %p44
        %p246 = pneg %p41
        %p247 = pneg %p65
        %p248 = pneg %p62
        %p249 = pneg %p86
        %p250 = pneg %p83
        %p251 = pneg %p107
        %p252 = pneg %p104
        %p253 = pneg %p133
        %p254 = pneg %p130
        %s255 = sand.u32 %s120, 1
        %s256 = scalar_lea.sflag [#allocation4], %s255
        %s257 = sand.u32 %s120, 1
        %s258 = smul.addr %s257, 256
        %s259 = scalar_lea.vmem [#allocation10], %s258
        %s260 = smul.u32 64, %s23
        %s261 = smul.u32 64, %s23
        %v263 = vld [vmem:[%s223] sm:$0xf]
        %v264 = vld [vmem:[%s223 + $0x4] sm:$0xf]
        %v265 = vld [vmem:[%s223 + $0x8] sm:$0xf]
        %v266 = vld [vmem:[%s223 + $0xc] sm:$0xf]
        %v267 = vld [vmem:[%s223 + $0x10] sm:$0xf]
        %v268 = vld [vmem:[%s223 + $0x14] sm:$0xf]
        %v269 = vld [vmem:[%s223 + $0x18] sm:$0xf]
        %v270 = vld [vmem:[%s223 + $0x1c] sm:$0xf]
        %v271 = vld [vmem:[%s223 + $0x20] sm:$0xf]
        %v272 = vld [vmem:[%s223 + $0x24] sm:$0xf]
        %v273 = vld [vmem:[%s223 + $0x28] sm:$0xf]
        %v274 = vld [vmem:[%s223 + $0x2c] sm:$0xf]
        %v275 = vld [vmem:[%s223 + $0x30] sm:$0xf]
        %v276 = vld [vmem:[%s223 + $0x34] sm:$0xf]
        %v277 = vld [vmem:[%s223 + $0x38] sm:$0xf]
        %v278 = vld [vmem:[%s223 + $0x3c] sm:$0xf]
        %v279 = vld [vmem:[%s223 + $0x40] sm:$0xf]
        %v280 = vld [vmem:[%s223 + $0x44] sm:$0xf]
        %v281 = vld [vmem:[%s223 + $0x48] sm:$0xf]
        %v282 = vld [vmem:[%s223 + $0x4c] sm:$0xf]
        %v283 = vld [vmem:[%s223 + $0x50] sm:$0xf]
        %v284 = vld [vmem:[%s223 + $0x54] sm:$0xf]
        %v285 = vld [vmem:[%s223 + $0x58] sm:$0xf]
        %v286 = vld [vmem:[%s223 + $0x5c] sm:$0xf]
        %v287 = vld [vmem:[%s223 + $0x60] sm:$0xf]
        %v288 = vld [vmem:[%s223 + $0x64] sm:$0xf]
        %v289 = vld [vmem:[%s223 + $0x68] sm:$0xf]
        %v290 = vld [vmem:[%s223 + $0x6c] sm:$0xf]
        %v291 = vld [vmem:[%s223 + $0x70] sm:$0xf]
        %v292 = vld [vmem:[%s223 + $0x74] sm:$0xf]
        %v293 = vld [vmem:[%s223 + $0x78] sm:$0xf]
        %v294 = vld [vmem:[%s223 + $0x7c] sm:$0xf]
        %v295 = vld [vmem:[%s223 + $0x80] sm:$0xf]
        %v296 = vld [vmem:[%s223 + $0x84] sm:$0xf]
        %v297 = vld [vmem:[%s223 + $0x88] sm:$0xf]
        %v298 = vld [vmem:[%s223 + $0x8c] sm:$0xf]
        %v299 = vld [vmem:[%s223 + $0x90] sm:$0xf]
        %v300 = vld [vmem:[%s223 + $0x94] sm:$0xf]
        %v301 = vld [vmem:[%s223 + $0x98] sm:$0xf]
        %v302 = vld [vmem:[%s223 + $0x9c] sm:$0xf]
        %v303 = vld [vmem:[%s223 + $0xa0] sm:$0xf]
        %v304 = vld [vmem:[%s223 + $0xa4] sm:$0xf]
        %v305 = vld [vmem:[%s223 + $0xa8] sm:$0xf]
        %v306 = vld [vmem:[%s223 + $0xac] sm:$0xf]
        %v307 = vld [vmem:[%s223 + $0xb0] sm:$0xf]
        %v308 = vld [vmem:[%s223 + $0xb4] sm:$0xf]
        %v309 = vld [vmem:[%s223 + $0xb8] sm:$0xf]
        %v310 = vld [vmem:[%s223 + $0xbc] sm:$0xf]
        %v311 = vld [vmem:[%s223 + $0xc0] sm:$0xf]
        %v312 = vld [vmem:[%s223 + $0xc4] sm:$0xf]
        %v313 = vld [vmem:[%s223 + $0xc8] sm:$0xf]
        %v314 = vld [vmem:[%s223 + $0xcc] sm:$0xf]
        %v315 = vld [vmem:[%s223 + $0xd0] sm:$0xf]
        %v316 = vld [vmem:[%s223 + $0xd4] sm:$0xf]
        %v317 = vld [vmem:[%s223 + $0xd8] sm:$0xf]
        %v318 = vld [vmem:[%s223 + $0xdc] sm:$0xf]
        %v319 = vld [vmem:[%s223 + $0xe0] sm:$0xf]
        %v320 = vld [vmem:[%s223 + $0xe4] sm:$0xf]
        %v321 = vld [vmem:[%s223 + $0xe8] sm:$0xf]
        %v322 = vld [vmem:[%s223 + $0xec] sm:$0xf]
        %v323 = vld [vmem:[%s223 + $0xf0] sm:$0xf]
        %v324 = vld [vmem:[%s223 + $0xf4] sm:$0xf]
        %v325 = vld [vmem:[%s223 + $0xf8] sm:$0xf]
        %v326 = vld [vmem:[%s223 + $0xfc] sm:$0xf]
        %v327 = vld [vmem:[#allocation5] sm:$0xf]
        %v328 = vld [vmem:[#allocation5 + $0x4] sm:$0xf]
        %v329 = vld [vmem:[#allocation5 + $0x8] sm:$0xf]
        %v330 = vld [vmem:[#allocation5 + $0xc] sm:$0xf]
        %v331 = vld [vmem:[#allocation5 + $0x10] sm:$0xf]
        %v332 = vld [vmem:[#allocation5 + $0x14] sm:$0xf]
        %v333 = vld [vmem:[#allocation5 + $0x18] sm:$0xf]
        %v334 = vld [vmem:[#allocation5 + $0x1c] sm:$0xf]
        %v335 = vld [vmem:[#allocation5 + $0x20] sm:$0xf]
        %v336 = vld [vmem:[#allocation5 + $0x24] sm:$0xf]
        %v337 = vld [vmem:[#allocation5 + $0x28] sm:$0xf]
        %v338 = vld [vmem:[#allocation5 + $0x2c] sm:$0xf]
        %v339 = vld [vmem:[#allocation5 + $0x30] sm:$0xf]
        %v340 = vld [vmem:[#allocation5 + $0x34] sm:$0xf]
        %v341 = vld [vmem:[#allocation5 + $0x38] sm:$0xf]
        %v342 = vld [vmem:[#allocation5 + $0x3c] sm:$0xf]
        %v407 = vunpack.c.l.b16 %v263
        %v408 = vunpack.c.l.b16 %v264
        %v409 = vunpack.c.l.b16 %v265
        %v410 = vunpack.c.l.b16 %v266
        %v411 = vunpack.c.l.b16 %v267
        %v412 = vunpack.c.l.b16 %v268
        %v413 = vunpack.c.l.b16 %v269
        %v414 = vunpack.c.l.b16 %v270
        %v415 = vunpack.c.l.b16 %v271
        %v416 = vunpack.c.l.b16 %v272
        %v417 = vunpack.c.l.b16 %v273
        %v418 = vunpack.c.l.b16 %v274
        %v419 = vunpack.c.l.b16 %v275
        %v420 = vunpack.c.l.b16 %v276
        %v421 = vunpack.c.l.b16 %v277
        %v422 = vunpack.c.l.b16 %v278
        %v423 = vunpack.c.l.b16 %v279
        %v424 = vunpack.c.l.b16 %v280
        %v425 = vunpack.c.l.b16 %v281
        %v426 = vunpack.c.l.b16 %v282
        %v427 = vunpack.c.l.b16 %v283
        %v428 = vunpack.c.l.b16 %v284
        %v429 = vunpack.c.l.b16 %v285
        %v430 = vunpack.c.l.b16 %v286
        %v431 = vunpack.c.l.b16 %v287
        %v432 = vunpack.c.l.b16 %v288
        %v433 = vunpack.c.l.b16 %v289
        %v434 = vunpack.c.l.b16 %v290
        %v435 = vunpack.c.l.b16 %v291
        %v436 = vunpack.c.l.b16 %v292
        %v437 = vunpack.c.l.b16 %v293
        %v438 = vunpack.c.l.b16 %v294
        %v439 = vunpack.c.l.b16 %v295
        %v440 = vunpack.c.l.b16 %v296
        %v441 = vunpack.c.l.b16 %v297
        %v442 = vunpack.c.l.b16 %v298
        %v443 = vunpack.c.l.b16 %v299
        %v444 = vunpack.c.l.b16 %v300
        %v445 = vunpack.c.l.b16 %v301
        %v446 = vunpack.c.l.b16 %v302
        %v447 = vunpack.c.l.b16 %v303
        %v448 = vunpack.c.l.b16 %v304
        %v449 = vunpack.c.l.b16 %v305
        %v450 = vunpack.c.l.b16 %v306
        %v451 = vunpack.c.l.b16 %v307
        %v452 = vunpack.c.l.b16 %v308
        %v453 = vunpack.c.l.b16 %v309
        %v454 = vunpack.c.l.b16 %v310
        %v455 = vunpack.c.l.b16 %v311
        %v456 = vunpack.c.l.b16 %v312
        %v457 = vunpack.c.l.b16 %v313
        %v458 = vunpack.c.l.b16 %v314
        %v459 = vunpack.c.l.b16 %v315
        %v460 = vunpack.c.l.b16 %v316
        %v461 = vunpack.c.l.b16 %v317
        %v462 = vunpack.c.l.b16 %v318
        %v463 = vunpack.c.l.b16 %v319
        %v464 = vunpack.c.l.b16 %v320
        %v465 = vunpack.c.l.b16 %v321
        %v466 = vunpack.c.l.b16 %v322
        %v467 = vunpack.c.l.b16 %v323
        %v468 = vunpack.c.l.b16 %v324
        %v469 = vunpack.c.l.b16 %v325
        %v470 = vunpack.c.l.b16 %v326
        %v471 = vpack.c.b16 %v408, %v407
        %v472 = vpack.c.b16 %v410, %v409
        %v473 = vpack.c.b16 %v412, %v411
        %v474 = vpack.c.b16 %v414, %v413
        %v475 = vpack.c.b16 %v416, %v415
        %v476 = vpack.c.b16 %v418, %v417
        %v477 = vpack.c.b16 %v420, %v419
        %v478 = vpack.c.b16 %v422, %v421
        %v479 = vpack.c.b16 %v424, %v423
        %v480 = vpack.c.b16 %v426, %v425
        %v481 = vpack.c.b16 %v428, %v427
        %v482 = vpack.c.b16 %v430, %v429
        %v483 = vpack.c.b16 %v432, %v431
        %v484 = vpack.c.b16 %v434, %v433
        %v485 = vpack.c.b16 %v436, %v435
        %v486 = vpack.c.b16 %v438, %v437
        %v487 = vpack.c.b16 %v440, %v439
        %v488 = vpack.c.b16 %v442, %v441
        %v489 = vpack.c.b16 %v444, %v443
        %v490 = vpack.c.b16 %v446, %v445
        %v491 = vpack.c.b16 %v448, %v447
        %v492 = vpack.c.b16 %v450, %v449
        %v493 = vpack.c.b16 %v452, %v451
        %v494 = vpack.c.b16 %v454, %v453
        %v495 = vpack.c.b16 %v456, %v455
        %v496 = vpack.c.b16 %v458, %v457
        %v497 = vpack.c.b16 %v460, %v459
        %v498 = vpack.c.b16 %v462, %v461
        %v499 = vpack.c.b16 %v464, %v463
        %v500 = vpack.c.b16 %v466, %v465
        %v501 = vpack.c.b16 %v468, %v467
        %v502 = vpack.c.b16 %v470, %v469
        %v551 = vunpack.c.l.b16 %v327
        %v552 = vunpack.c.l.b16 %v328
        %v553 = vunpack.c.l.b16 %v329
        %v554 = vunpack.c.l.b16 %v330
        %v555 = vunpack.c.l.b16 %v331
        %v556 = vunpack.c.l.b16 %v332
        %v557 = vunpack.c.l.b16 %v333
        %v558 = vunpack.c.l.b16 %v334
        %v559 = vunpack.c.l.b16 %v335
        %v560 = vunpack.c.l.b16 %v336
        %v561 = vunpack.c.l.b16 %v337
        %v562 = vunpack.c.l.b16 %v338
        %v563 = vunpack.c.l.b16 %v339
        %v564 = vunpack.c.l.b16 %v340
        %v565 = vunpack.c.l.b16 %v341
        %v566 = vunpack.c.l.b16 %v342
        %v567 = vpack.c.b16 %v552, %v551
        %v568 = vpack.c.b16 %v554, %v553
        %v569 = vpack.c.b16 %v556, %v555
        %v570 = vpack.c.b16 %v558, %v557
        %v571 = vpack.c.b16 %v560, %v559
        %v572 = vpack.c.b16 %v562, %v561
        %v573 = vpack.c.b16 %v564, %v563
        %v574 = vpack.c.b16 %v566, %v565
        %583 = vmatprep.subr.bf16.mxu0 0
        %584 = vmatpush1.bf16.msra.mxu0 %v567
        %585 = vmatprep.subr.bf16.mxu0 0
        %586 = vmatpush1.bf16.msra.mxu0 %v568
        %587 = vmatprep.subr.bf16.mxu0 0
        %588 = vmatpush1.bf16.msra.mxu0 %v569
        %589 = vmatprep.subr.bf16.mxu0 0
        %590 = vmatpush1.bf16.msra.mxu0 %v570
        %591 = vmatprep.subr.bf16.mxu0 0
        %592 = vmatpush1.bf16.msra.mxu0 %v571
        %593 = vmatprep.subr.bf16.mxu0 0
        %594 = vmatpush1.bf16.msra.mxu0 %v572
        %595 = vmatprep.subr.bf16.mxu0 0
        %596 = vmatpush1.bf16.msra.mxu0 %v573
        %597 = vmatprep.subr.bf16.mxu0 0
        %598 = vmatpush1.bf16.msra.mxu0 %v574
        %599 = vmatprep.subr.bf16.mxu0 0
        %600 = vmatpush1.bf16.msra.mxu0 0
        %601 = vmatprep.subr.bf16.mxu0 0
        %602 = vmatpush1.bf16.msra.mxu0 0
        %603 = vmatprep.subr.bf16.mxu0 0
        %604 = vmatpush1.bf16.msra.mxu0 0
        %605 = vmatprep.subr.bf16.mxu0 0
        %606 = vmatpush1.bf16.msra.mxu0 0
        %607 = vmatprep.subr.bf16.mxu0 0
        %608 = vmatpush1.bf16.msra.mxu0 0
        %609 = vmatprep.subr.bf16.mxu0 0
        %610 = vmatpush1.bf16.msra.mxu0 0
        %611 = vmatprep.subr.bf16.mxu0 0
        %612 = vmatpush1.bf16.msra.mxu0 0
        %613 = vmatprep.subr.bf16.mxu0 0
        %614 = vmatpush1.bf16.msra.mxu0 0
        %615 = vmatprep.mubr.bf16.mxu0 0
        %616 = vmatmul.mubr.bf16.gmra.mrb[0].mxu0 %v471
        %v617 = vpop.f32.mrb[0].mxu0
        %v618 = vadd.f32 0.0, %v617
        %v619 = vpop.f32.mrb[0].mxu0
        %v620 = vpop.f32.mrb[0].mxu0
        %v621 = vadd.f32 0.0, %v620
        %v622 = vpop.f32.mrb[0].mxu0
        %623 = vmatprep.mubr.bf16.mxu0 0
        %624 = vmatmul.mubr.bf16.gmra.mrb[0].mxu0 %v472
        %v625 = vpop.f32.mrb[0].mxu0
        %v626 = vadd.f32 0.0, %v625
        %v627 = vpop.f32.mrb[0].mxu0
        %v628 = vpop.f32.mrb[0].mxu0
        %v629 = vadd.f32 0.0, %v628
        %v630 = vpop.f32.mrb[0].mxu0
        %631 = vmatprep.mubr.bf16.mxu0 0
        %632 = vmatmul.mubr.bf16.gmra.mrb[0].mxu0 %v473
        %v633 = vpop.f32.mrb[0].mxu0
        %v634 = vadd.f32 0.0, %v633
        %v635 = vpop.f32.mrb[0].mxu0
        %v636 = vpop.f32.mrb[0].mxu0
        %v637 = vadd.f32 0.0, %v636
        %v638 = vpop.f32.mrb[0].mxu0
        %639 = vmatprep.mubr.bf16.mxu0 0
        %640 = vmatmul.mubr.bf16.gmra.mrb[0].mxu0 %v474
        %v641 = vpop.f32.mrb[0].mxu0
        %v642 = vadd.f32 0.0, %v641
        %v643 = vpop.f32.mrb[0].mxu0
        %v644 = vpop.f32.mrb[0].mxu0
        %v645 = vadd.f32 0.0, %v644
        %v646 = vpop.f32.mrb[0].mxu0
        %647 = vmatprep.mubr.bf16.mxu0 0
        %648 = vmatmul.mubr.bf16.gmra.mrb[0].mxu0 %v475
        %v649 = vpop.f32.mrb[0].mxu0
        %v650 = vadd.f32 0.0, %v649
        %v651 = vpop.f32.mrb[0].mxu0
        %v652 = vpop.f32.mrb[0].mxu0
        %v653 = vadd.f32 0.0, %v652
        %v654 = vpop.f32.mrb[0].mxu0
        %655 = vmatprep.mubr.bf16.mxu0 0
        %656 = vmatmul.mubr.bf16.gmra.mrb[0].mxu0 %v476
        %v657 = vpop.f32.mrb[0].mxu0
        %v658 = vadd.f32 0.0, %v657
        %v659 = vpop.f32.mrb[0].mxu0
        %v660 = vpop.f32.mrb[0].mxu0
        %v661 = vadd.f32 0.0, %v660
        %v662 = vpop.f32.mrb[0].mxu0
        %663 = vmatprep.mubr.bf16.mxu0 0
        %664 = vmatmul.mubr.bf16.gmra.mrb[0].mxu0 %v477
        %v665 = vpop.f32.mrb[0].mxu0
        %v666 = vadd.f32 0.0, %v665
        %v667 = vpop.f32.mrb[0].mxu0
        %v668 = vpop.f32.mrb[0].mxu0
        %v669 = vadd.f32 0.0, %v668
        %v670 = vpop.f32.mrb[0].mxu0
        %671 = vmatprep.mubr.bf16.mxu0 0
        %672 = vmatmul.mubr.bf16.gmra.mrb[0].mxu0 %v478
        %v673 = vpop.f32.mrb[0].mxu0
        %v674 = vadd.f32 0.0, %v673
        %v675 = vpop.f32.mrb[0].mxu0
        %v676 = vpop.f32.mrb[0].mxu0
        %v677 = vadd.f32 0.0, %v676
        %v678 = vpop.f32.mrb[0].mxu0
        %679 = vmatprep.mubr.bf16.mxu0 0
        %680 = vmatmul.mubr.bf16.gmra.mrb[0].mxu0 %v479
        %v681 = vpop.f32.mrb[0].mxu0
        %v682 = vadd.f32 0.0, %v681
        %v683 = vpop.f32.mrb[0].mxu0
        %v684 = vpop.f32.mrb[0].mxu0
        %v685 = vadd.f32 0.0, %v684
        %v686 = vpop.f32.mrb[0].mxu0
        %687 = vmatprep.mubr.bf16.mxu0 0
        %688 = vmatmul.mubr.bf16.gmra.mrb[0].mxu0 %v480
        %v689 = vpop.f32.mrb[0].mxu0
        %v690 = vadd.f32 0.0, %v689
        %v691 = vpop.f32.mrb[0].mxu0
        %v692 = vpop.f32.mrb[0].mxu0
        %v693 = vadd.f32 0.0, %v692
        %v694 = vpop.f32.mrb[0].mxu0
        %695 = vmatprep.mubr.bf16.mxu0 0
        %696 = vmatmul.mubr.bf16.gmra.mrb[0].mxu0 %v481
        %v697 = vpop.f32.mrb[0].mxu0
        %v698 = vadd.f32 0.0, %v697
        %v699 = vpop.f32.mrb[0].mxu0
        %v700 = vpop.f32.mrb[0].mxu0
        %v701 = vadd.f32 0.0, %v700
        %v702 = vpop.f32.mrb[0].mxu0
        %703 = vmatprep.mubr.bf16.mxu0 0
        %704 = vmatmul.mubr.bf16.gmra.mrb[0].mxu0 %v482
        %v705 = vpop.f32.mrb[0].mxu0
        %v706 = vadd.f32 0.0, %v705
        %v707 = vpop.f32.mrb[0].mxu0
        %v708 = vpop.f32.mrb[0].mxu0
        %v709 = vadd.f32 0.0, %v708
        %v710 = vpop.f32.mrb[0].mxu0
        %711 = vmatprep.mubr.bf16.mxu0 0
        %712 = vmatmul.mubr.bf16.gmra.mrb[0].mxu0 %v483
        %v713 = vpop.f32.mrb[0].mxu0
        %v714 = vadd.f32 0.0, %v713
        %v715 = vpop.f32.mrb[0].mxu0
        %v716 = vpop.f32.mrb[0].mxu0
        %v717 = vadd.f32 0.0, %v716
        %v718 = vpop.f32.mrb[0].mxu0
        %719 = vmatprep.mubr.bf16.mxu0 0
        %720 = vmatmul.mubr.bf16.gmra.mrb[0].mxu0 %v484
        %v721 = vpop.f32.mrb[0].mxu0
        %v722 = vadd.f32 0.0, %v721
        %v723 = vpop.f32.mrb[0].mxu0
        %v724 = vpop.f32.mrb[0].mxu0
        %v725 = vadd.f32 0.0, %v724
        %v726 = vpop.f32.mrb[0].mxu0
        %727 = vmatprep.mubr.bf16.mxu0 0
        %728 = vmatmul.mubr.bf16.gmra.mrb[0].mxu0 %v485
        %v729 = vpop.f32.mrb[0].mxu0
        %v730 = vadd.f32 0.0, %v729
        %v731 = vpop.f32.mrb[0].mxu0
        %v732 = vpop.f32.mrb[0].mxu0
        %v733 = vadd.f32 0.0, %v732
        %v734 = vpop.f32.mrb[0].mxu0
        %735 = vmatprep.mubr.bf16.mxu0 0
        %736 = vmatmul.mubr.bf16.gmra.mrb[0].mxu0 %v486
        %v737 = vpop.f32.mrb[0].mxu0
        %v738 = vadd.f32 0.0, %v737
        %v739 = vpop.f32.mrb[0].mxu0
        %v740 = vpop.f32.mrb[0].mxu0
        %v741 = vadd.f32 0.0, %v740
        %v742 = vpop.f32.mrb[0].mxu0
        %743 = vmatprep.mubr.bf16.mxu0 0
        %744 = vmatmul.mubr.bf16.gmra.mrb[0].mxu0 %v487
        %v745 = vpop.f32.mrb[0].mxu0
        %v746 = vadd.f32 0.0, %v745
        %v747 = vpop.f32.mrb[0].mxu0
        %v748 = vpop.f32.mrb[0].mxu0
        %v749 = vadd.f32 0.0, %v748
        %v750 = vpop.f32.mrb[0].mxu0
        %751 = vmatprep.mubr.bf16.mxu0 0
        %752 = vmatmul.mubr.bf16.gmra.mrb[0].mxu0 %v488
        %v753 = vpop.f32.mrb[0].mxu0
        %v754 = vadd.f32 0.0, %v753
        %v755 = vpop.f32.mrb[0].mxu0
        %v756 = vpop.f32.mrb[0].mxu0
        %v757 = vadd.f32 0.0, %v756
        %v758 = vpop.f32.mrb[0].mxu0
        %759 = vmatprep.mubr.bf16.mxu0 0
        %760 = vmatmul.mubr.bf16.gmra.mrb[0].mxu0 %v489
        %v761 = vpop.f32.mrb[0].mxu0
        %v762 = vadd.f32 0.0, %v761
        %v763 = vpop.f32.mrb[0].mxu0
        %v764 = vpop.f32.mrb[0].mxu0
        %v765 = vadd.f32 0.0, %v764
        %v766 = vpop.f32.mrb[0].mxu0
        %767 = vmatprep.mubr.bf16.mxu0 0
        %768 = vmatmul.mubr.bf16.gmra.mrb[0].mxu0 %v490
        %v769 = vpop.f32.mrb[0].mxu0
        %v770 = vadd.f32 0.0, %v769
        %v771 = vpop.f32.mrb[0].mxu0
        %v772 = vpop.f32.mrb[0].mxu0
        %v773 = vadd.f32 0.0, %v772
        %v774 = vpop.f32.mrb[0].mxu0
        %775 = vmatprep.mubr.bf16.mxu0 0
        %776 = vmatmul.mubr.bf16.gmra.mrb[0].mxu0 %v491
        %v777 = vpop.f32.mrb[0].mxu0
        %v778 = vadd.f32 0.0, %v777
        %v779 = vpop.f32.mrb[0].mxu0
        %v780 = vpop.f32.mrb[0].mxu0
        %v781 = vadd.f32 0.0, %v780
        %v782 = vpop.f32.mrb[0].mxu0
        %783 = vmatprep.mubr.bf16.mxu0 0
        %784 = vmatmul.mubr.bf16.gmra.mrb[0].mxu0 %v492
        %v785 = vpop.f32.mrb[0].mxu0
        %v786 = vadd.f32 0.0, %v785
        %v787 = vpop.f32.mrb[0].mxu0
        %v788 = vpop.f32.mrb[0].mxu0
        %v789 = vadd.f32 0.0, %v788
        %v790 = vpop.f32.mrb[0].mxu0
        %791 = vmatprep.mubr.bf16.mxu0 0
        %792 = vmatmul.mubr.bf16.gmra.mrb[0].mxu0 %v493
        %v793 = vpop.f32.mrb[0].mxu0
        %v794 = vadd.f32 0.0, %v793
        %v795 = vpop.f32.mrb[0].mxu0
        %v796 = vpop.f32.mrb[0].mxu0
        %v797 = vadd.f32 0.0, %v796
        %v798 = vpop.f32.mrb[0].mxu0
        %799 = vmatprep.mubr.bf16.mxu0 0
        %800 = vmatmul.mubr.bf16.gmra.mrb[0].mxu0 %v494
        %v801 = vpop.f32.mrb[0].mxu0
        %v802 = vadd.f32 0.0, %v801
        %v803 = vpop.f32.mrb[0].mxu0
        %v804 = vpop.f32.mrb[0].mxu0
        %v805 = vadd.f32 0.0, %v804
        %v806 = vpop.f32.mrb[0].mxu0
        %807 = vmatprep.mubr.bf16.mxu0 0
        %808 = vmatmul.mubr.bf16.gmra.mrb[0].mxu0 %v495
        %v809 = vpop.f32.mrb[0].mxu0
        %v810 = vadd.f32 0.0, %v809
        %v811 = vpop.f32.mrb[0].mxu0
        %v812 = vpop.f32.mrb[0].mxu0
        %v813 = vadd.f32 0.0, %v812
        %v814 = vpop.f32.mrb[0].mxu0
        %815 = vmatprep.mubr.bf16.mxu0 0
        %816 = vmatmul.mubr.bf16.gmra.mrb[0].mxu0 %v496
        %v817 = vpop.f32.mrb[0].mxu0
        %v818 = vadd.f32 0.0, %v817
        %v819 = vpop.f32.mrb[0].mxu0
        %v820 = vpop.f32.mrb[0].mxu0
        %v821 = vadd.f32 0.0, %v820
        %v822 = vpop.f32.mrb[0].mxu0
        %823 = vmatprep.mubr.bf16.mxu0 0
        %824 = vmatmul.mubr.bf16.gmra.mrb[0].mxu0 %v497
        %v825 = vpop.f32.mrb[0].mxu0
        %v826 = vadd.f32 0.0, %v825
        %v827 = vpop.f32.mrb[0].mxu0
        %v828 = vpop.f32.mrb[0].mxu0
        %v829 = vadd.f32 0.0, %v828
        %v830 = vpop.f32.mrb[0].mxu0
        %831 = vmatprep.mubr.bf16.mxu0 0
        %832 = vmatmul.mubr.bf16.gmra.mrb[0].mxu0 %v498
        %v833 = vpop.f32.mrb[0].mxu0
        %v834 = vadd.f32 0.0, %v833
        %v835 = vpop.f32.mrb[0].mxu0
        %v836 = vpop.f32.mrb[0].mxu0
        %v837 = vadd.f32 0.0, %v836
        %v838 = vpop.f32.mrb[0].mxu0
        %839 = vmatprep.mubr.bf16.mxu0 0
        %840 = vmatmul.mubr.bf16.gmra.mrb[0].mxu0 %v499
        %v841 = vpop.f32.mrb[0].mxu0
        %v842 = vadd.f32 0.0, %v841
        %v843 = vpop.f32.mrb[0].mxu0
        %v844 = vpop.f32.mrb[0].mxu0
        %v845 = vadd.f32 0.0, %v844
        %v846 = vpop.f32.mrb[0].mxu0
        %847 = vmatprep.mubr.bf16.mxu0 0
        %848 = vmatmul.mubr.bf16.gmra.mrb[0].mxu0 %v500
        %v849 = vpop.f32.mrb[0].mxu0
        %v850 = vadd.f32 0.0, %v849
        %v851 = vpop.f32.mrb[0].mxu0
        %v852 = vpop.f32.mrb[0].mxu0
        %v853 = vadd.f32 0.0, %v852
        %v854 = vpop.f32.mrb[0].mxu0
        %855 = vmatprep.mubr.bf16.mxu0 0
        %856 = vmatmul.mubr.bf16.gmra.mrb[0].mxu0 %v501
        %v857 = vpop.f32.mrb[0].mxu0
        %v858 = vadd.f32 0.0, %v857
        %v859 = vpop.f32.mrb[0].mxu0
        %v860 = vpop.f32.mrb[0].mxu0
        %v861 = vadd.f32 0.0, %v860
        %v862 = vpop.f32.mrb[0].mxu0
        %863 = vmatprep.mubr.bf16.mxu0 0
        %864 = vmatmul.mubr.bf16.gmra.mrb[0].mxu0 %v502
        %v865 = vpop.f32.mrb[0].mxu0
        %v866 = vadd.f32 0.0, %v865
        %v867 = vpop.f32.mrb[0].mxu0
        %v868 = vpop.f32.mrb[0].mxu0
        %v869 = vadd.f32 0.0, %v868
        %v870 = vpop.f32.mrb[0].mxu0
        %871 = vdwg.mxu0
        %v872 = vmax.f32 %v618, 0.0
        %v873 = vmax.f32 %v621, 0.0
        %v874 = vmax.f32 %v626, 0.0
        %v875 = vmax.f32 %v629, 0.0
        %v876 = vmax.f32 %v634, 0.0
        %v877 = vmax.f32 %v637, 0.0
        %v878 = vmax.f32 %v642, 0.0
        %v879 = vmax.f32 %v645, 0.0
        %v880 = vmax.f32 %v650, 0.0
        %v881 = vmax.f32 %v653, 0.0
        %v882 = vmax.f32 %v658, 0.0
        %v883 = vmax.f32 %v661, 0.0
        %v884 = vmax.f32 %v666, 0.0
        %v885 = vmax.f32 %v669, 0.0
        %v886 = vmax.f32 %v674, 0.0
        %v887 = vmax.f32 %v677, 0.0
        %v888 = vmax.f32 %v682, 0.0
        %v889 = vmax.f32 %v685, 0.0
        %v890 = vmax.f32 %v690, 0.0
        %v891 = vmax.f32 %v693, 0.0
        %v892 = vmax.f32 %v698, 0.0
        %v893 = vmax.f32 %v701, 0.0
        %v894 = vmax.f32 %v706, 0.0
        %v895 = vmax.f32 %v709, 0.0
        %v896 = vmax.f32 %v714, 0.0
        %v897 = vmax.f32 %v717, 0.0
        %v898 = vmax.f32 %v722, 0.0
        %v899 = vmax.f32 %v725, 0.0
        %v900 = vmax.f32 %v730, 0.0
        %v901 = vmax.f32 %v733, 0.0
        %v902 = vmax.f32 %v738, 0.0
        %v903 = vmax.f32 %v741, 0.0
        %v904 = vmax.f32 %v746, 0.0
        %v905 = vmax.f32 %v749, 0.0
        %v906 = vmax.f32 %v754, 0.0
        %v907 = vmax.f32 %v757, 0.0
        %v908 = vmax.f32 %v762, 0.0
        %v909 = vmax.f32 %v765, 0.0
        %v910 = vmax.f32 %v770, 0.0
        %v911 = vmax.f32 %v773, 0.0
        %v912 = vmax.f32 %v778, 0.0
        %v913 = vmax.f32 %v781, 0.0
        %v914 = vmax.f32 %v786, 0.0
        %v915 = vmax.f32 %v789, 0.0
        %v916 = vmax.f32 %v794, 0.0
        %v917 = vmax.f32 %v797, 0.0
        %v918 = vmax.f32 %v802, 0.0
        %v919 = vmax.f32 %v805, 0.0
        %v920 = vmax.f32 %v810, 0.0
        %v921 = vmax.f32 %v813, 0.0
        %v922 = vmax.f32 %v818, 0.0
        %v923 = vmax.f32 %v821, 0.0
        %v924 = vmax.f32 %v826, 0.0
        %v925 = vmax.f32 %v829, 0.0
        %v926 = vmax.f32 %v834, 0.0
        %v927 = vmax.f32 %v837, 0.0
        %v928 = vmax.f32 %v842, 0.0
        %v929 = vmax.f32 %v845, 0.0
        %v930 = vmax.f32 %v850, 0.0
        %v931 = vmax.f32 %v853, 0.0
        %v932 = vmax.f32 %v858, 0.0
        %v933 = vmax.f32 %v861, 0.0
        %v934 = vmax.f32 %v866, 0.0
        %v935 = vmax.f32 %v869, 0.0
        %v936 = vpack.c.bf16 %v873, %v872
        %v937 = vpack.c.bf16 %v875, %v874
        %v938 = vpack.c.bf16 %v877, %v876
        %v939 = vpack.c.bf16 %v879, %v878
        %v940 = vpack.c.bf16 %v881, %v880
        %v941 = vpack.c.bf16 %v883, %v882
        %v942 = vpack.c.bf16 %v885, %v884
        %v943 = vpack.c.bf16 %v887, %v886
        %v944 = vpack.c.bf16 %v889, %v888
        %v945 = vpack.c.bf16 %v891, %v890
        %v946 = vpack.c.bf16 %v893, %v892
        %v947 = vpack.c.bf16 %v895, %v894
        %v948 = vpack.c.bf16 %v897, %v896
        %v949 = vpack.c.bf16 %v899, %v898
        %v950 = vpack.c.bf16 %v901, %v900
        %v951 = vpack.c.bf16 %v903, %v902
        %v952 = vpack.c.bf16 %v905, %v904
        %v953 = vpack.c.bf16 %v907, %v906
        %v954 = vpack.c.bf16 %v909, %v908
        %v955 = vpack.c.bf16 %v911, %v910
        %v956 = vpack.c.bf16 %v913, %v912
        %v957 = vpack.c.bf16 %v915, %v914
        %v958 = vpack.c.bf16 %v917, %v916
        %v959 = vpack.c.bf16 %v919, %v918
        %v960 = vpack.c.bf16 %v921, %v920
        %v961 = vpack.c.bf16 %v923, %v922
        %v962 = vpack.c.bf16 %v925, %v924
        %v963 = vpack.c.bf16 %v927, %v926
        %v964 = vpack.c.bf16 %v929, %v928
        %v965 = vpack.c.bf16 %v931, %v930
        %v966 = vpack.c.bf16 %v933, %v932
        %v967 = vpack.c.bf16 %v935, %v934
        %v968 = vld [vmem:[#allocation7] sm:$0xf]
        %v969 = vld [vmem:[#allocation7 + $0x4] sm:$0xf]
        %v970 = vld [vmem:[#allocation7 + $0x8] sm:$0xf]
        %v971 = vld [vmem:[#allocation7 + $0xc] sm:$0xf]
        %v972 = vld [vmem:[#allocation7 + $0x10] sm:$0xf]
        %v973 = vld [vmem:[#allocation7 + $0x14] sm:$0xf]
        %v974 = vld [vmem:[#allocation7 + $0x18] sm:$0xf]
        %v975 = vld [vmem:[#allocation7 + $0x1c] sm:$0xf]
        %v976 = vld [vmem:[#allocation7 + $0x20] sm:$0xf]
        %v977 = vld [vmem:[#allocation7 + $0x24] sm:$0xf]
        %v978 = vld [vmem:[#allocation7 + $0x28] sm:$0xf]
        %v979 = vld [vmem:[#allocation7 + $0x2c] sm:$0xf]
        %v980 = vld [vmem:[#allocation7 + $0x30] sm:$0xf]
        %v981 = vld [vmem:[#allocation7 + $0x34] sm:$0xf]
        %v982 = vld [vmem:[#allocation7 + $0x38] sm:$0xf]
        %v983 = vld [vmem:[#allocation7 + $0x3c] sm:$0xf]
        %v1000 = vunpack.c.l.b16 %v968
        %v1001 = vunpack.c.l.b16 %v969
        %v1002 = vunpack.c.l.b16 %v970
        %v1003 = vunpack.c.l.b16 %v971
        %v1004 = vunpack.c.l.b16 %v972
        %v1005 = vunpack.c.l.b16 %v973
        %v1006 = vunpack.c.l.b16 %v974
        %v1007 = vunpack.c.l.b16 %v975
        %v1008 = vunpack.c.l.b16 %v976
        %v1009 = vunpack.c.l.b16 %v977
        %v1010 = vunpack.c.l.b16 %v978
        %v1011 = vunpack.c.l.b16 %v979
        %v1012 = vunpack.c.l.b16 %v980
        %v1013 = vunpack.c.l.b16 %v981
        %v1014 = vunpack.c.l.b16 %v982
        %v1015 = vunpack.c.l.b16 %v983
        %v1016 = vpack.c.b16 %v1001, %v1000
        %v1017 = vpack.c.b16 %v1003, %v1002
        %v1018 = vpack.c.b16 %v1005, %v1004
        %v1019 = vpack.c.b16 %v1007, %v1006
        %v1020 = vpack.c.b16 %v1009, %v1008
        %v1021 = vpack.c.b16 %v1011, %v1010
        %v1022 = vpack.c.b16 %v1013, %v1012
        %v1023 = vpack.c.b16 %v1015, %v1014
        %1032 = vmatprep.subr.bf16.mxu0 0
        %1033 = vmatpush1.bf16.msra.mxu0 %v1016
        %1034 = vmatprep.subr.bf16.mxu0 0
        %1035 = vmatpush1.bf16.msra.mxu0 %v1017
        %1036 = vmatprep.subr.bf16.mxu0 0
        %1037 = vmatpush1.bf16.msra.mxu0 %v1018
        %1038 = vmatprep.subr.bf16.mxu0 0
        %1039 = vmatpush1.bf16.msra.mxu0 %v1019
        %1040 = vmatprep.subr.bf16.mxu0 0
        %1041 = vmatpush1.bf16.msra.mxu0 %v1020
        %1042 = vmatprep.subr.bf16.mxu0 0
        %1043 = vmatpush1.bf16.msra.mxu0 %v1021
        %1044 = vmatprep.subr.bf16.mxu0 0
        %1045 = vmatpush1.bf16.msra.mxu0 %v1022
        %1046 = vmatprep.subr.bf16.mxu0 0
        %1047 = vmatpush1.bf16.msra.mxu0 %v1023
        %1048 = vmatprep.subr.bf16.mxu0 0
        %1049 = vmatpush1.bf16.msra.mxu0 0
        %1050 = vmatprep.subr.bf16.mxu0 0
        %1051 = vmatpush1.bf16.msra.mxu0 0
        %1052 = vmatprep.subr.bf16.mxu0 0
        %1053 = vmatpush1.bf16.msra.mxu0 0
        %1054 = vmatprep.subr.bf16.mxu0 0
        %1055 = vmatpush1.bf16.msra.mxu0 0
        %1056 = vmatprep.subr.bf16.mxu0 0
        %1057 = vmatpush1.bf16.msra.mxu0 0
        %1058 = vmatprep.subr.bf16.mxu0 0
        %1059 = vmatpush1.bf16.msra.mxu0 0
        %1060 = vmatprep.subr.bf16.mxu0 0
        %1061 = vmatpush1.bf16.msra.mxu0 0
        %1062 = vmatprep.subr.bf16.mxu0 0
        %1063 = vmatpush1.bf16.msra.mxu0 0
        %1064 = vmatprep.mubr.bf16.mxu0 0
        %1065 = vmatmul.mubr.bf16.gmra.mrb[0].mxu0 %v936
        %v1066 = vpop.f32.mrb[0].mxu0
        %v1067 = vadd.f32 0.0, %v1066
        %v1068 = vpop.f32.mrb[0].mxu0
        %v1069 = vpop.f32.mrb[0].mxu0
        %v1070 = vadd.f32 0.0, %v1069
        %v1071 = vpop.f32.mrb[0].mxu0
        %1072 = vmatprep.mubr.bf16.mxu0 0
        %1073 = vmatmul.mubr.bf16.gmra.mrb[0].mxu0 %v937
        %v1074 = vpop.f32.mrb[0].mxu0
        %v1075 = vadd.f32 0.0, %v1074
        %v1076 = vpop.f32.mrb[0].mxu0
        %v1077 = vpop.f32.mrb[0].mxu0
        %v1078 = vadd.f32 0.0, %v1077
        %v1079 = vpop.f32.mrb[0].mxu0
        %1080 = vmatprep.mubr.bf16.mxu0 0
        %1081 = vmatmul.mubr.bf16.gmra.mrb[0].mxu0 %v938
        %v1082 = vpop.f32.mrb[0].mxu0
        %v1083 = vadd.f32 0.0, %v1082
        %v1084 = vpop.f32.mrb[0].mxu0
        %v1085 = vpop.f32.mrb[0].mxu0
        %v1086 = vadd.f32 0.0, %v1085
        %v1087 = vpop.f32.mrb[0].mxu0
        %1088 = vmatprep.mubr.bf16.mxu0 0
        %1089 = vmatmul.mubr.bf16.gmra.mrb[0].mxu0 %v939
        %v1090 = vpop.f32.mrb[0].mxu0
        %v1091 = vadd.f32 0.0, %v1090
        %v1092 = vpop.f32.mrb[0].mxu0
        %v1093 = vpop.f32.mrb[0].mxu0
        %v1094 = vadd.f32 0.0, %v1093
        %v1095 = vpop.f32.mrb[0].mxu0
        %1096 = vmatprep.mubr.bf16.mxu0 0
        %1097 = vmatmul.mubr.bf16.gmra.mrb[0].mxu0 %v940
        %v1098 = vpop.f32.mrb[0].mxu0
        %v1099 = vadd.f32 0.0, %v1098
        %v1100 = vpop.f32.mrb[0].mxu0
        %v1101 = vpop.f32.mrb[0].mxu0
        %v1102 = vadd.f32 0.0, %v1101
        %v1103 = vpop.f32.mrb[0].mxu0
        %1104 = vmatprep.mubr.bf16.mxu0 0
        %1105 = vmatmul.mubr.bf16.gmra.mrb[0].mxu0 %v941
        %v1106 = vpop.f32.mrb[0].mxu0
        %v1107 = vadd.f32 0.0, %v1106
        %v1108 = vpop.f32.mrb[0].mxu0
        %v1109 = vpop.f32.mrb[0].mxu0
        %v1110 = vadd.f32 0.0, %v1109
        %v1111 = vpop.f32.mrb[0].mxu0
        %1112 = vmatprep.mubr.bf16.mxu0 0
        %1113 = vmatmul.mubr.bf16.gmra.mrb[0].mxu0 %v942
        %v1114 = vpop.f32.mrb[0].mxu0
        %v1115 = vadd.f32 0.0, %v1114
        %v1116 = vpop.f32.mrb[0].mxu0
        %v1117 = vpop.f32.mrb[0].mxu0
        %v1118 = vadd.f32 0.0, %v1117
        %v1119 = vpop.f32.mrb[0].mxu0
        %1120 = vmatprep.mubr.bf16.mxu0 0
        %1121 = vmatmul.mubr.bf16.gmra.mrb[0].mxu0 %v943
        %v1122 = vpop.f32.mrb[0].mxu0
        %v1123 = vadd.f32 0.0, %v1122
        %v1124 = vpop.f32.mrb[0].mxu0
        %v1125 = vpop.f32.mrb[0].mxu0
        %v1126 = vadd.f32 0.0, %v1125
        %v1127 = vpop.f32.mrb[0].mxu0
        %1128 = vmatprep.mubr.bf16.mxu0 0
        %1129 = vmatmul.mubr.bf16.gmra.mrb[0].mxu0 %v944
        %v1130 = vpop.f32.mrb[0].mxu0
        %v1131 = vadd.f32 0.0, %v1130
        %v1132 = vpop.f32.mrb[0].mxu0
        %v1133 = vpop.f32.mrb[0].mxu0
        %v1134 = vadd.f32 0.0, %v1133
        %v1135 = vpop.f32.mrb[0].mxu0
        %1136 = vmatprep.mubr.bf16.mxu0 0
        %1137 = vmatmul.mubr.bf16.gmra.mrb[0].mxu0 %v945
        %v1138 = vpop.f32.mrb[0].mxu0
        %v1139 = vadd.f32 0.0, %v1138
        %v1140 = vpop.f32.mrb[0].mxu0
        %v1141 = vpop.f32.mrb[0].mxu0
        %v1142 = vadd.f32 0.0, %v1141
        %v1143 = vpop.f32.mrb[0].mxu0
        %1144 = vmatprep.mubr.bf16.mxu0 0
        %1145 = vmatmul.mubr.bf16.gmra.mrb[0].mxu0 %v946
        %v1146 = vpop.f32.mrb[0].mxu0
        %v1147 = vadd.f32 0.0, %v1146
        %v1148 = vpop.f32.mrb[0].mxu0
        %v1149 = vpop.f32.mrb[0].mxu0
        %v1150 = vadd.f32 0.0, %v1149
        %v1151 = vpop.f32.mrb[0].mxu0
        %1152 = vmatprep.mubr.bf16.mxu0 0
        %1153 = vmatmul.mubr.bf16.gmra.mrb[0].mxu0 %v947
        %v1154 = vpop.f32.mrb[0].mxu0
        %v1155 = vadd.f32 0.0, %v1154
        %v1156 = vpop.f32.mrb[0].mxu0
        %v1157 = vpop.f32.mrb[0].mxu0
        %v1158 = vadd.f32 0.0, %v1157
        %v1159 = vpop.f32.mrb[0].mxu0
        %1160 = vmatprep.mubr.bf16.mxu0 0
        %1161 = vmatmul.mubr.bf16.gmra.mrb[0].mxu0 %v948
        %v1162 = vpop.f32.mrb[0].mxu0
        %v1163 = vadd.f32 0.0, %v1162
        %v1164 = vpop.f32.mrb[0].mxu0
        %v1165 = vpop.f32.mrb[0].mxu0
        %v1166 = vadd.f32 0.0, %v1165
        %v1167 = vpop.f32.mrb[0].mxu0
        %1168 = vmatprep.mubr.bf16.mxu0 0
        %1169 = vmatmul.mubr.bf16.gmra.mrb[0].mxu0 %v949
        %v1170 = vpop.f32.mrb[0].mxu0
        %v1171 = vadd.f32 0.0, %v1170
        %v1172 = vpop.f32.mrb[0].mxu0
        %v1173 = vpop.f32.mrb[0].mxu0
        %v1174 = vadd.f32 0.0, %v1173
        %v1175 = vpop.f32.mrb[0].mxu0
        %1176 = vmatprep.mubr.bf16.mxu0 0
        %1177 = vmatmul.mubr.bf16.gmra.mrb[0].mxu0 %v950
        %v1178 = vpop.f32.mrb[0].mxu0
        %v1179 = vadd.f32 0.0, %v1178
        %v1180 = vpop.f32.mrb[0].mxu0
        %v1181 = vpop.f32.mrb[0].mxu0
        %v1182 = vadd.f32 0.0, %v1181
        %v1183 = vpop.f32.mrb[0].mxu0
        %1184 = vmatprep.mubr.bf16.mxu0 0
        %1185 = vmatmul.mubr.bf16.gmra.mrb[0].mxu0 %v951
        %v1186 = vpop.f32.mrb[0].mxu0
        %v1187 = vadd.f32 0.0, %v1186
        %v1188 = vpop.f32.mrb[0].mxu0
        %v1189 = vpop.f32.mrb[0].mxu0
        %v1190 = vadd.f32 0.0, %v1189
        %v1191 = vpop.f32.mrb[0].mxu0
        %1192 = vmatprep.mubr.bf16.mxu0 0
        %1193 = vmatmul.mubr.bf16.gmra.mrb[0].mxu0 %v952
        %v1194 = vpop.f32.mrb[0].mxu0
        %v1195 = vadd.f32 0.0, %v1194
        %v1196 = vpop.f32.mrb[0].mxu0
        %v1197 = vpop.f32.mrb[0].mxu0
        %v1198 = vadd.f32 0.0, %v1197
        %v1199 = vpop.f32.mrb[0].mxu0
        %1200 = vmatprep.mubr.bf16.mxu0 0
        %1201 = vmatmul.mubr.bf16.gmra.mrb[0].mxu0 %v953
        %v1202 = vpop.f32.mrb[0].mxu0
        %v1203 = vadd.f32 0.0, %v1202
        %v1204 = vpop.f32.mrb[0].mxu0
        %v1205 = vpop.f32.mrb[0].mxu0
        %v1206 = vadd.f32 0.0, %v1205
        %v1207 = vpop.f32.mrb[0].mxu0
        %1208 = vmatprep.mubr.bf16.mxu0 0
        %1209 = vmatmul.mubr.bf16.gmra.mrb[0].mxu0 %v954
        %v1210 = vpop.f32.mrb[0].mxu0
        %v1211 = vadd.f32 0.0, %v1210
        %v1212 = vpop.f32.mrb[0].mxu0
        %v1213 = vpop.f32.mrb[0].mxu0
        %v1214 = vadd.f32 0.0, %v1213
        %v1215 = vpop.f32.mrb[0].mxu0
        %1216 = vmatprep.mubr.bf16.mxu0 0
        %1217 = vmatmul.mubr.bf16.gmra.mrb[0].mxu0 %v955
        %v1218 = vpop.f32.mrb[0].mxu0
        %v1219 = vadd.f32 0.0, %v1218
        %v1220 = vpop.f32.mrb[0].mxu0
        %v1221 = vpop.f32.mrb[0].mxu0
        %v1222 = vadd.f32 0.0, %v1221
        %v1223 = vpop.f32.mrb[0].mxu0
        %1224 = vmatprep.mubr.bf16.mxu0 0
        %1225 = vmatmul.mubr.bf16.gmra.mrb[0].mxu0 %v956
        %v1226 = vpop.f32.mrb[0].mxu0
        %v1227 = vadd.f32 0.0, %v1226
        %v1228 = vpop.f32.mrb[0].mxu0
        %v1229 = vpop.f32.mrb[0].mxu0
        %v1230 = vadd.f32 0.0, %v1229
        %v1231 = vpop.f32.mrb[0].mxu0
        %1232 = vmatprep.mubr.bf16.mxu0 0
        %1233 = vmatmul.mubr.bf16.gmra.mrb[0].mxu0 %v957
        %v1234 = vpop.f32.mrb[0].mxu0
        %v1235 = vadd.f32 0.0, %v1234
        %v1236 = vpop.f32.mrb[0].mxu0
        %v1237 = vpop.f32.mrb[0].mxu0
        %v1238 = vadd.f32 0.0, %v1237
        %v1239 = vpop.f32.mrb[0].mxu0
        %1240 = vmatprep.mubr.bf16.mxu0 0
        %1241 = vmatmul.mubr.bf16.gmra.mrb[0].mxu0 %v958
        %v1242 = vpop.f32.mrb[0].mxu0
        %v1243 = vadd.f32 0.0, %v1242
        %v1244 = vpop.f32.mrb[0].mxu0
        %v1245 = vpop.f32.mrb[0].mxu0
        %v1246 = vadd.f32 0.0, %v1245
        %v1247 = vpop.f32.mrb[0].mxu0
        %1248 = vmatprep.mubr.bf16.mxu0 0
        %1249 = vmatmul.mubr.bf16.gmra.mrb[0].mxu0 %v959
        %v1250 = vpop.f32.mrb[0].mxu0
        %v1251 = vadd.f32 0.0, %v1250
        %v1252 = vpop.f32.mrb[0].mxu0
        %v1253 = vpop.f32.mrb[0].mxu0
        %v1254 = vadd.f32 0.0, %v1253
        %v1255 = vpop.f32.mrb[0].mxu0
        %1256 = vmatprep.mubr.bf16.mxu0 0
        %1257 = vmatmul.mubr.bf16.gmra.mrb[0].mxu0 %v960
        %v1258 = vpop.f32.mrb[0].mxu0
        %v1259 = vadd.f32 0.0, %v1258
        %v1260 = vpop.f32.mrb[0].mxu0
        %v1261 = vpop.f32.mrb[0].mxu0
        %v1262 = vadd.f32 0.0, %v1261
        %v1263 = vpop.f32.mrb[0].mxu0
        %1264 = vmatprep.mubr.bf16.mxu0 0
        %1265 = vmatmul.mubr.bf16.gmra.mrb[0].mxu0 %v961
        %v1266 = vpop.f32.mrb[0].mxu0
        %v1267 = vadd.f32 0.0, %v1266
        %v1268 = vpop.f32.mrb[0].mxu0
        %v1269 = vpop.f32.mrb[0].mxu0
        %v1270 = vadd.f32 0.0, %v1269
        %v1271 = vpop.f32.mrb[0].mxu0
        %1272 = vmatprep.mubr.bf16.mxu0 0
        %1273 = vmatmul.mubr.bf16.gmra.mrb[0].mxu0 %v962
        %v1274 = vpop.f32.mrb[0].mxu0
        %v1275 = vadd.f32 0.0, %v1274
        %v1276 = vpop.f32.mrb[0].mxu0
        %v1277 = vpop.f32.mrb[0].mxu0
        %v1278 = vadd.f32 0.0, %v1277
        %v1279 = vpop.f32.mrb[0].mxu0
        %1280 = vmatprep.mubr.bf16.mxu0 0
        %1281 = vmatmul.mubr.bf16.gmra.mrb[0].mxu0 %v963
        %v1282 = vpop.f32.mrb[0].mxu0
        %v1283 = vadd.f32 0.0, %v1282
        %v1284 = vpop.f32.mrb[0].mxu0
        %v1285 = vpop.f32.mrb[0].mxu0
        %v1286 = vadd.f32 0.0, %v1285
        %v1287 = vpop.f32.mrb[0].mxu0
        %1288 = vmatprep.mubr.bf16.mxu0 0
        %1289 = vmatmul.mubr.bf16.gmra.mrb[0].mxu0 %v964
        %v1290 = vpop.f32.mrb[0].mxu0
        %v1291 = vadd.f32 0.0, %v1290
        %v1292 = vpop.f32.mrb[0].mxu0
        %v1293 = vpop.f32.mrb[0].mxu0
        %v1294 = vadd.f32 0.0, %v1293
        %v1295 = vpop.f32.mrb[0].mxu0
        %1296 = vmatprep.mubr.bf16.mxu0 0
        %1297 = vmatmul.mubr.bf16.gmra.mrb[0].mxu0 %v965
        %v1298 = vpop.f32.mrb[0].mxu0
        %v1299 = vadd.f32 0.0, %v1298
        %v1300 = vpop.f32.mrb[0].mxu0
        %v1301 = vpop.f32.mrb[0].mxu0
        %v1302 = vadd.f32 0.0, %v1301
        %v1303 = vpop.f32.mrb[0].mxu0
        %1304 = vmatprep.mubr.bf16.mxu0 0
        %1305 = vmatmul.mubr.bf16.gmra.mrb[0].mxu0 %v966
        %v1306 = vpop.f32.mrb[0].mxu0
        %v1307 = vadd.f32 0.0, %v1306
        %v1308 = vpop.f32.mrb[0].mxu0
        %v1309 = vpop.f32.mrb[0].mxu0
        %v1310 = vadd.f32 0.0, %v1309
        %v1311 = vpop.f32.mrb[0].mxu0
        %1312 = vmatprep.mubr.bf16.mxu0 0
        %1313 = vmatmul.mubr.bf16.gmra.mrb[0].mxu0 %v967
        %v1314 = vpop.f32.mrb[0].mxu0
        %v1315 = vadd.f32 0.0, %v1314
        %v1316 = vpop.f32.mrb[0].mxu0
        %v1317 = vpop.f32.mrb[0].mxu0
        %v1318 = vadd.f32 0.0, %v1317
        %v1319 = vpop.f32.mrb[0].mxu0
        %1320 = vdwg.mxu0
        %v1321 = vmax.f32 %v1067, 0.0
        %v1322 = vmax.f32 %v1070, 0.0
        %v1323 = vmax.f32 %v1075, 0.0
        %v1324 = vmax.f32 %v1078, 0.0
        %v1325 = vmax.f32 %v1083, 0.0
        %v1326 = vmax.f32 %v1086, 0.0
        %v1327 = vmax.f32 %v1091, 0.0
        %v1328 = vmax.f32 %v1094, 0.0
        %v1329 = vmax.f32 %v1099, 0.0
        %v1330 = vmax.f32 %v1102, 0.0
        %v1331 = vmax.f32 %v1107, 0.0
        %v1332 = vmax.f32 %v1110, 0.0
        %v1333 = vmax.f32 %v1115, 0.0
        %v1334 = vmax.f32 %v1118, 0.0
        %v1335 = vmax.f32 %v1123, 0.0
        %v1336 = vmax.f32 %v1126, 0.0
        %v1337 = vmax.f32 %v1131, 0.0
        %v1338 = vmax.f32 %v1134, 0.0
        %v1339 = vmax.f32 %v1139, 0.0
        %v1340 = vmax.f32 %v1142, 0.0
        %v1341 = vmax.f32 %v1147, 0.0
        %v1342 = vmax.f32 %v1150, 0.0
        %v1343 = vmax.f32 %v1155, 0.0
        %v1344 = vmax.f32 %v1158, 0.0
        %v1345 = vmax.f32 %v1163, 0.0
        %v1346 = vmax.f32 %v1166, 0.0
        %v1347 = vmax.f32 %v1171, 0.0
        %v1348 = vmax.f32 %v1174, 0.0
        %v1349 = vmax.f32 %v1179, 0.0
        %v1350 = vmax.f32 %v1182, 0.0
        %v1351 = vmax.f32 %v1187, 0.0
        %v1352 = vmax.f32 %v1190, 0.0
        %v1353 = vmax.f32 %v1195, 0.0
        %v1354 = vmax.f32 %v1198, 0.0
        %v1355 = vmax.f32 %v1203, 0.0
        %v1356 = vmax.f32 %v1206, 0.0
        %v1357 = vmax.f32 %v1211, 0.0
        %v1358 = vmax.f32 %v1214, 0.0
        %v1359 = vmax.f32 %v1219, 0.0
        %v1360 = vmax.f32 %v1222, 0.0
        %v1361 = vmax.f32 %v1227, 0.0
        %v1362 = vmax.f32 %v1230, 0.0
        %v1363 = vmax.f32 %v1235, 0.0
        %v1364 = vmax.f32 %v1238, 0.0
        %v1365 = vmax.f32 %v1243, 0.0
        %v1366 = vmax.f32 %v1246, 0.0
        %v1367 = vmax.f32 %v1251, 0.0
        %v1368 = vmax.f32 %v1254, 0.0
        %v1369 = vmax.f32 %v1259, 0.0
        %v1370 = vmax.f32 %v1262, 0.0
        %v1371 = vmax.f32 %v1267, 0.0
        %v1372 = vmax.f32 %v1270, 0.0
        %v1373 = vmax.f32 %v1275, 0.0
        %v1374 = vmax.f32 %v1278, 0.0
        %v1375 = vmax.f32 %v1283, 0.0
        %v1376 = vmax.f32 %v1286, 0.0
        %v1377 = vmax.f32 %v1291, 0.0
        %v1378 = vmax.f32 %v1294, 0.0
        %v1379 = vmax.f32 %v1299, 0.0
        %v1380 = vmax.f32 %v1302, 0.0
        %v1381 = vmax.f32 %v1307, 0.0
        %v1382 = vmax.f32 %v1310, 0.0
        %v1383 = vmax.f32 %v1315, 0.0
        %v1384 = vmax.f32 %v1318, 0.0
        %v1385 = vpack.c.bf16 %v1322, %v1321
        %v1386 = vpack.c.bf16 %v1324, %v1323
        %v1387 = vpack.c.bf16 %v1326, %v1325
        %v1388 = vpack.c.bf16 %v1328, %v1327
        %v1389 = vpack.c.bf16 %v1330, %v1329
        %v1390 = vpack.c.bf16 %v1332, %v1331
        %v1391 = vpack.c.bf16 %v1334, %v1333
        %v1392 = vpack.c.bf16 %v1336, %v1335
        %v1393 = vpack.c.bf16 %v1338, %v1337
        %v1394 = vpack.c.bf16 %v1340, %v1339
        %v1395 = vpack.c.bf16 %v1342, %v1341
        %v1396 = vpack.c.bf16 %v1344, %v1343
        %v1397 = vpack.c.bf16 %v1346, %v1345
        %v1398 = vpack.c.bf16 %v1348, %v1347
        %v1399 = vpack.c.bf16 %v1350, %v1349
        %v1400 = vpack.c.bf16 %v1352, %v1351
        %v1401 = vpack.c.bf16 %v1354, %v1353
        %v1402 = vpack.c.bf16 %v1356, %v1355
        %v1403 = vpack.c.bf16 %v1358, %v1357
        %v1404 = vpack.c.bf16 %v1360, %v1359
        %v1405 = vpack.c.bf16 %v1362, %v1361
        %v1406 = vpack.c.bf16 %v1364, %v1363
        %v1407 = vpack.c.bf16 %v1366, %v1365
        %v1408 = vpack.c.bf16 %v1368, %v1367
        %v1409 = vpack.c.bf16 %v1370, %v1369
        %v1410 = vpack.c.bf16 %v1372, %v1371
        %v1411 = vpack.c.bf16 %v1374, %v1373
        %v1412 = vpack.c.bf16 %v1376, %v1375
        %v1413 = vpack.c.bf16 %v1378, %v1377
        %v1414 = vpack.c.bf16 %v1380, %v1379
        %v1415 = vpack.c.bf16 %v1382, %v1381
        %v1416 = vpack.c.bf16 %v1384, %v1383
        %v1417 = vld [vmem:[#allocation8] sm:$0xf]
        %v1418 = vld [vmem:[#allocation8 + $0x4] sm:$0xf]
        %v1419 = vld [vmem:[#allocation8 + $0x8] sm:$0xf]
        %v1420 = vld [vmem:[#allocation8 + $0xc] sm:$0xf]
        %v1421 = vld [vmem:[#allocation8 + $0x10] sm:$0xf]
        %v1422 = vld [vmem:[#allocation8 + $0x14] sm:$0xf]
        %v1423 = vld [vmem:[#allocation8 + $0x18] sm:$0xf]
        %v1424 = vld [vmem:[#allocation8 + $0x1c] sm:$0xf]
        %v1425 = vld [vmem:[#allocation8 + $0x20] sm:$0xf]
        %v1426 = vld [vmem:[#allocation8 + $0x24] sm:$0xf]
        %v1427 = vld [vmem:[#allocation8 + $0x28] sm:$0xf]
        %v1428 = vld [vmem:[#allocation8 + $0x2c] sm:$0xf]
        %v1429 = vld [vmem:[#allocation8 + $0x30] sm:$0xf]
        %v1430 = vld [vmem:[#allocation8 + $0x34] sm:$0xf]
        %v1431 = vld [vmem:[#allocation8 + $0x38] sm:$0xf]
        %v1432 = vld [vmem:[#allocation8 + $0x3c] sm:$0xf]
        %v1449 = vunpack.c.l.b16 %v1417
        %v1450 = vunpack.c.l.b16 %v1418
        %v1451 = vunpack.c.l.b16 %v1419
        %v1452 = vunpack.c.l.b16 %v1420
        %v1453 = vunpack.c.l.b16 %v1421
        %v1454 = vunpack.c.l.b16 %v1422
        %v1455 = vunpack.c.l.b16 %v1423
        %v1456 = vunpack.c.l.b16 %v1424
        %v1457 = vunpack.c.l.b16 %v1425
        %v1458 = vunpack.c.l.b16 %v1426
        %v1459 = vunpack.c.l.b16 %v1427
        %v1460 = vunpack.c.l.b16 %v1428
        %v1461 = vunpack.c.l.b16 %v1429
        %v1462 = vunpack.c.l.b16 %v1430
        %v1463 = vunpack.c.l.b16 %v1431
        %v1464 = vunpack.c.l.b16 %v1432
        %v1465 = vpack.c.b16 %v1450, %v1449
        %v1466 = vpack.c.b16 %v1452, %v1451
        %v1467 = vpack.c.b16 %v1454, %v1453
        %v1468 = vpack.c.b16 %v1456, %v1455
        %v1469 = vpack.c.b16 %v1458, %v1457
        %v1470 = vpack.c.b16 %v1460, %v1459
        %v1471 = vpack.c.b16 %v1462, %v1461
        %v1472 = vpack.c.b16 %v1464, %v1463
        %1481 = vmatprep.subr.bf16.mxu0 0
        %1482 = vmatpush1.bf16.msra.mxu0 %v1465
        %1483 = vmatprep.subr.bf16.mxu0 0
        %1484 = vmatpush1.bf16.msra.mxu0 %v1466
        %1485 = vmatprep.subr.bf16.mxu0 0
        %1486 = vmatpush1.bf16.msra.mxu0 %v1467
        %1487 = vmatprep.subr.bf16.mxu0 0
        %1488 = vmatpush1.bf16.msra.mxu0 %v1468
        %1489 = vmatprep.subr.bf16.mxu0 0
        %1490 = vmatpush1.bf16.msra.mxu0 %v1469
        %1491 = vmatprep.subr.bf16.mxu0 0
        %1492 = vmatpush1.bf16.msra.mxu0 %v1470
        %1493 = vmatprep.subr.bf16.mxu0 0
        %1494 = vmatpush1.bf16.msra.mxu0 %v1471
        %1495 = vmatprep.subr.bf16.mxu0 0
        %1496 = vmatpush1.bf16.msra.mxu0 %v1472
        %1497 = vmatprep.subr.bf16.mxu0 0
        %1498 = vmatpush1.bf16.msra.mxu0 0
        %1499 = vmatprep.subr.bf16.mxu0 0
        %1500 = vmatpush1.bf16.msra.mxu0 0
        %1501 = vmatprep.subr.bf16.mxu0 0
        %1502 = vmatpush1.bf16.msra.mxu0 0
        %1503 = vmatprep.subr.bf16.mxu0 0
        %1504 = vmatpush1.bf16.msra.mxu0 0
        %1505 = vmatprep.subr.bf16.mxu0 0
        %1506 = vmatpush1.bf16.msra.mxu0 0
        %1507 = vmatprep.subr.bf16.mxu0 0
        %1508 = vmatpush1.bf16.msra.mxu0 0
        %1509 = vmatprep.subr.bf16.mxu0 0
        %1510 = vmatpush1.bf16.msra.mxu0 0
        %1511 = vmatprep.subr.bf16.mxu0 0
        %1512 = vmatpush1.bf16.msra.mxu0 0
        %1513 = vmatprep.mubr.bf16.mxu0 0
        %1514 = vmatmul.mubr.bf16.gmra.mrb[0].mxu0 %v1385
        %v1515 = vpop.f32.mrb[0].mxu0
        %v1516 = vadd.f32 0.0, %v1515
        %v1517 = vpop.f32.mrb[0].mxu0
        %v1518 = vpop.f32.mrb[0].mxu0
        %v1519 = vadd.f32 0.0, %v1518
        %v1520 = vpop.f32.mrb[0].mxu0
        %1521 = vmatprep.mubr.bf16.mxu0 0
        %1522 = vmatmul.mubr.bf16.gmra.mrb[0].mxu0 %v1386
        %v1523 = vpop.f32.mrb[0].mxu0
        %v1524 = vadd.f32 0.0, %v1523
        %v1525 = vpop.f32.mrb[0].mxu0
        %v1526 = vpop.f32.mrb[0].mxu0
        %v1527 = vadd.f32 0.0, %v1526
        %v1528 = vpop.f32.mrb[0].mxu0
        %1529 = vmatprep.mubr.bf16.mxu0 0
        %1530 = vmatmul.mubr.bf16.gmra.mrb[0].mxu0 %v1387
        %v1531 = vpop.f32.mrb[0].mxu0
        %v1532 = vadd.f32 0.0, %v1531
        %v1533 = vpop.f32.mrb[0].mxu0
        %v1534 = vpop.f32.mrb[0].mxu0
        %v1535 = vadd.f32 0.0, %v1534
        %v1536 = vpop.f32.mrb[0].mxu0
        %1537 = vmatprep.mubr.bf16.mxu0 0
        %1538 = vmatmul.mubr.bf16.gmra.mrb[0].mxu0 %v1388
        %v1539 = vpop.f32.mrb[0].mxu0
        %v1540 = vadd.f32 0.0, %v1539
        %v1541 = vpop.f32.mrb[0].mxu0
        %v1542 = vpop.f32.mrb[0].mxu0
        %v1543 = vadd.f32 0.0, %v1542
        %v1544 = vpop.f32.mrb[0].mxu0
        %1545 = vmatprep.mubr.bf16.mxu0 0
        %1546 = vmatmul.mubr.bf16.gmra.mrb[0].mxu0 %v1389
        %v1547 = vpop.f32.mrb[0].mxu0
        %v1548 = vadd.f32 0.0, %v1547
        %v1549 = vpop.f32.mrb[0].mxu0
        %v1550 = vpop.f32.mrb[0].mxu0
        %v1551 = vadd.f32 0.0, %v1550
        %v1552 = vpop.f32.mrb[0].mxu0
        %1553 = vmatprep.mubr.bf16.mxu0 0
        %1554 = vmatmul.mubr.bf16.gmra.mrb[0].mxu0 %v1390
        %v1555 = vpop.f32.mrb[0].mxu0
        %v1556 = vadd.f32 0.0, %v1555
        %v1557 = vpop.f32.mrb[0].mxu0
        %v1558 = vpop.f32.mrb[0].mxu0
        %v1559 = vadd.f32 0.0, %v1558
        %v1560 = vpop.f32.mrb[0].mxu0
        %1561 = vmatprep.mubr.bf16.mxu0 0
        %1562 = vmatmul.mubr.bf16.gmra.mrb[0].mxu0 %v1391
        %v1563 = vpop.f32.mrb[0].mxu0
        %v1564 = vadd.f32 0.0, %v1563
        %v1565 = vpop.f32.mrb[0].mxu0
        %v1566 = vpop.f32.mrb[0].mxu0
        %v1567 = vadd.f32 0.0, %v1566
        %v1568 = vpop.f32.mrb[0].mxu0
        %1569 = vmatprep.mubr.bf16.mxu0 0
        %1570 = vmatmul.mubr.bf16.gmra.mrb[0].mxu0 %v1392
        %v1571 = vpop.f32.mrb[0].mxu0
        %v1572 = vadd.f32 0.0, %v1571
        %v1573 = vpop.f32.mrb[0].mxu0
        %v1574 = vpop.f32.mrb[0].mxu0
        %v1575 = vadd.f32 0.0, %v1574
        %v1576 = vpop.f32.mrb[0].mxu0
        %1577 = vmatprep.mubr.bf16.mxu0 0
        %1578 = vmatmul.mubr.bf16.gmra.mrb[0].mxu0 %v1393
        %v1579 = vpop.f32.mrb[0].mxu0
        %v1580 = vadd.f32 0.0, %v1579
        %v1581 = vpop.f32.mrb[0].mxu0
        %v1582 = vpop.f32.mrb[0].mxu0
        %v1583 = vadd.f32 0.0, %v1582
        %v1584 = vpop.f32.mrb[0].mxu0
        %1585 = vmatprep.mubr.bf16.mxu0 0
        %1586 = vmatmul.mubr.bf16.gmra.mrb[0].mxu0 %v1394
        %v1587 = vpop.f32.mrb[0].mxu0
        %v1588 = vadd.f32 0.0, %v1587
        %v1589 = vpop.f32.mrb[0].mxu0
        %v1590 = vpop.f32.mrb[0].mxu0
        %v1591 = vadd.f32 0.0, %v1590
        %v1592 = vpop.f32.mrb[0].mxu0
        %1593 = vmatprep.mubr.bf16.mxu0 0
        %1594 = vmatmul.mubr.bf16.gmra.mrb[0].mxu0 %v1395
        %v1595 = vpop.f32.mrb[0].mxu0
        %v1596 = vadd.f32 0.0, %v1595
        %v1597 = vpop.f32.mrb[0].mxu0
        %v1598 = vpop.f32.mrb[0].mxu0
        %v1599 = vadd.f32 0.0, %v1598
        %v1600 = vpop.f32.mrb[0].mxu0
        %1601 = vmatprep.mubr.bf16.mxu0 0
        %1602 = vmatmul.mubr.bf16.gmra.mrb[0].mxu0 %v1396
        %v1603 = vpop.f32.mrb[0].mxu0
        %v1604 = vadd.f32 0.0, %v1603
        %v1605 = vpop.f32.mrb[0].mxu0
        %v1606 = vpop.f32.mrb[0].mxu0
        %v1607 = vadd.f32 0.0, %v1606
        %v1608 = vpop.f32.mrb[0].mxu0
        %1609 = vmatprep.mubr.bf16.mxu0 0
        %1610 = vmatmul.mubr.bf16.gmra.mrb[0].mxu0 %v1397
        %v1611 = vpop.f32.mrb[0].mxu0
        %v1612 = vadd.f32 0.0, %v1611
        %v1613 = vpop.f32.mrb[0].mxu0
        %v1614 = vpop.f32.mrb[0].mxu0
        %v1615 = vadd.f32 0.0, %v1614
        %v1616 = vpop.f32.mrb[0].mxu0
        %1617 = vmatprep.mubr.bf16.mxu0 0
        %1618 = vmatmul.mubr.bf16.gmra.mrb[0].mxu0 %v1398
        %v1619 = vpop.f32.mrb[0].mxu0
        %v1620 = vadd.f32 0.0, %v1619
        %v1621 = vpop.f32.mrb[0].mxu0
        %v1622 = vpop.f32.mrb[0].mxu0
        %v1623 = vadd.f32 0.0, %v1622
        %v1624 = vpop.f32.mrb[0].mxu0
        %1625 = vmatprep.mubr.bf16.mxu0 0
        %1626 = vmatmul.mubr.bf16.gmra.mrb[0].mxu0 %v1399
        %v1627 = vpop.f32.mrb[0].mxu0
        %v1628 = vadd.f32 0.0, %v1627
        %v1629 = vpop.f32.mrb[0].mxu0
        %v1630 = vpop.f32.mrb[0].mxu0
        %v1631 = vadd.f32 0.0, %v1630
        %v1632 = vpop.f32.mrb[0].mxu0
        %1633 = vmatprep.mubr.bf16.mxu0 0
        %1634 = vmatmul.mubr.bf16.gmra.mrb[0].mxu0 %v1400
        %v1635 = vpop.f32.mrb[0].mxu0
        %v1636 = vadd.f32 0.0, %v1635
        %v1637 = vpop.f32.mrb[0].mxu0
        %v1638 = vpop.f32.mrb[0].mxu0
        %v1639 = vadd.f32 0.0, %v1638
        %v1640 = vpop.f32.mrb[0].mxu0
        %1641 = vmatprep.mubr.bf16.mxu0 0
        %1642 = vmatmul.mubr.bf16.gmra.mrb[0].mxu0 %v1401
        %v1643 = vpop.f32.mrb[0].mxu0
        %v1644 = vadd.f32 0.0, %v1643
        %v1645 = vpop.f32.mrb[0].mxu0
        %v1646 = vpop.f32.mrb[0].mxu0
        %v1647 = vadd.f32 0.0, %v1646
        %v1648 = vpop.f32.mrb[0].mxu0
        %1649 = vmatprep.mubr.bf16.mxu0 0
        %1650 = vmatmul.mubr.bf16.gmra.mrb[0].mxu0 %v1402
        %v1651 = vpop.f32.mrb[0].mxu0
        %v1652 = vadd.f32 0.0, %v1651
        %v1653 = vpop.f32.mrb[0].mxu0
        %v1654 = vpop.f32.mrb[0].mxu0
        %v1655 = vadd.f32 0.0, %v1654
        %v1656 = vpop.f32.mrb[0].mxu0
        %1657 = vmatprep.mubr.bf16.mxu0 0
        %1658 = vmatmul.mubr.bf16.gmra.mrb[0].mxu0 %v1403
        %v1659 = vpop.f32.mrb[0].mxu0
        %v1660 = vadd.f32 0.0, %v1659
        %v1661 = vpop.f32.mrb[0].mxu0
        %v1662 = vpop.f32.mrb[0].mxu0
        %v1663 = vadd.f32 0.0, %v1662
        %v1664 = vpop.f32.mrb[0].mxu0
        %1665 = vmatprep.mubr.bf16.mxu0 0
        %1666 = vmatmul.mubr.bf16.gmra.mrb[0].mxu0 %v1404
        %v1667 = vpop.f32.mrb[0].mxu0
        %v1668 = vadd.f32 0.0, %v1667
        %v1669 = vpop.f32.mrb[0].mxu0
        %v1670 = vpop.f32.mrb[0].mxu0
        %v1671 = vadd.f32 0.0, %v1670
        %v1672 = vpop.f32.mrb[0].mxu0
        %1673 = vmatprep.mubr.bf16.mxu0 0
        %1674 = vmatmul.mubr.bf16.gmra.mrb[0].mxu0 %v1405
        %v1675 = vpop.f32.mrb[0].mxu0
        %v1676 = vadd.f32 0.0, %v1675
        %v1677 = vpop.f32.mrb[0].mxu0
        %v1678 = vpop.f32.mrb[0].mxu0
        %v1679 = vadd.f32 0.0, %v1678
        %v1680 = vpop.f32.mrb[0].mxu0
        %1681 = vmatprep.mubr.bf16.mxu0 0
        %1682 = vmatmul.mubr.bf16.gmra.mrb[0].mxu0 %v1406
        %v1683 = vpop.f32.mrb[0].mxu0
        %v1684 = vadd.f32 0.0, %v1683
        %v1685 = vpop.f32.mrb[0].mxu0
        %v1686 = vpop.f32.mrb[0].mxu0
        %v1687 = vadd.f32 0.0, %v1686
        %v1688 = vpop.f32.mrb[0].mxu0
        %1689 = vmatprep.mubr.bf16.mxu0 0
        %1690 = vmatmul.mubr.bf16.gmra.mrb[0].mxu0 %v1407
        %v1691 = vpop.f32.mrb[0].mxu0
        %v1692 = vadd.f32 0.0, %v1691
        %v1693 = vpop.f32.mrb[0].mxu0
        %v1694 = vpop.f32.mrb[0].mxu0
        %v1695 = vadd.f32 0.0, %v1694
        %v1696 = vpop.f32.mrb[0].mxu0
        %1697 = vmatprep.mubr.bf16.mxu0 0
        %1698 = vmatmul.mubr.bf16.gmra.mrb[0].mxu0 %v1408
        %v1699 = vpop.f32.mrb[0].mxu0
        %v1700 = vadd.f32 0.0, %v1699
        %v1701 = vpop.f32.mrb[0].mxu0
        %v1702 = vpop.f32.mrb[0].mxu0
        %v1703 = vadd.f32 0.0, %v1702
        %v1704 = vpop.f32.mrb[0].mxu0
        %1705 = vmatprep.mubr.bf16.mxu0 0
        %1706 = vmatmul.mubr.bf16.gmra.mrb[0].mxu0 %v1409
        %v1707 = vpop.f32.mrb[0].mxu0
        %v1708 = vadd.f32 0.0, %v1707
        %v1709 = vpop.f32.mrb[0].mxu0
        %v1710 = vpop.f32.mrb[0].mxu0
        %v1711 = vadd.f32 0.0, %v1710
        %v1712 = vpop.f32.mrb[0].mxu0
        %1713 = vmatprep.mubr.bf16.mxu0 0
        %1714 = vmatmul.mubr.bf16.gmra.mrb[0].mxu0 %v1410
        %v1715 = vpop.f32.mrb[0].mxu0
        %v1716 = vadd.f32 0.0, %v1715
        %v1717 = vpop.f32.mrb[0].mxu0
        %v1718 = vpop.f32.mrb[0].mxu0
        %v1719 = vadd.f32 0.0, %v1718
        %v1720 = vpop.f32.mrb[0].mxu0
        %1721 = vmatprep.mubr.bf16.mxu0 0
        %1722 = vmatmul.mubr.bf16.gmra.mrb[0].mxu0 %v1411
        %v1723 = vpop.f32.mrb[0].mxu0
        %v1724 = vadd.f32 0.0, %v1723
        %v1725 = vpop.f32.mrb[0].mxu0
        %v1726 = vpop.f32.mrb[0].mxu0
        %v1727 = vadd.f32 0.0, %v1726
        %v1728 = vpop.f32.mrb[0].mxu0
        %1729 = vmatprep.mubr.bf16.mxu0 0
        %1730 = vmatmul.mubr.bf16.gmra.mrb[0].mxu0 %v1412
        %v1731 = vpop.f32.mrb[0].mxu0
        %v1732 = vadd.f32 0.0, %v1731
        %v1733 = vpop.f32.mrb[0].mxu0
        %v1734 = vpop.f32.mrb[0].mxu0
        %v1735 = vadd.f32 0.0, %v1734
        %v1736 = vpop.f32.mrb[0].mxu0
        %1737 = vmatprep.mubr.bf16.mxu0 0
        %1738 = vmatmul.mubr.bf16.gmra.mrb[0].mxu0 %v1413
        %v1739 = vpop.f32.mrb[0].mxu0
        %v1740 = vadd.f32 0.0, %v1739
        %v1741 = vpop.f32.mrb[0].mxu0
        %v1742 = vpop.f32.mrb[0].mxu0
        %v1743 = vadd.f32 0.0, %v1742
        %v1744 = vpop.f32.mrb[0].mxu0
        %1745 = vmatprep.mubr.bf16.mxu0 0
        %1746 = vmatmul.mubr.bf16.gmra.mrb[0].mxu0 %v1414
        %v1747 = vpop.f32.mrb[0].mxu0
        %v1748 = vadd.f32 0.0, %v1747
        %v1749 = vpop.f32.mrb[0].mxu0
        %v1750 = vpop.f32.mrb[0].mxu0
        %v1751 = vadd.f32 0.0, %v1750
        %v1752 = vpop.f32.mrb[0].mxu0
        %1753 = vmatprep.mubr.bf16.mxu0 0
        %1754 = vmatmul.mubr.bf16.gmra.mrb[0].mxu0 %v1415
        %v1755 = vpop.f32.mrb[0].mxu0
        %v1756 = vadd.f32 0.0, %v1755
        %v1757 = vpop.f32.mrb[0].mxu0
        %v1758 = vpop.f32.mrb[0].mxu0
        %v1759 = vadd.f32 0.0, %v1758
        %v1760 = vpop.f32.mrb[0].mxu0
        %1761 = vmatprep.mubr.bf16.mxu0 0
        %1762 = vmatmul.mubr.bf16.gmra.mrb[0].mxu0 %v1416
        %v1763 = vpop.f32.mrb[0].mxu0
        %v1764 = vadd.f32 0.0, %v1763
        %v1765 = vpop.f32.mrb[0].mxu0
        %v1766 = vpop.f32.mrb[0].mxu0
        %v1767 = vadd.f32 0.0, %v1766
        %v1768 = vpop.f32.mrb[0].mxu0
        %1769 = vdwg.mxu0
        %v1770 = vpack.c.bf16 %v1519, %v1516
        %v1771 = vpack.c.bf16 %v1527, %v1524
        %v1772 = vpack.c.bf16 %v1535, %v1532
        %v1773 = vpack.c.bf16 %v1543, %v1540
        %v1774 = vpack.c.bf16 %v1551, %v1548
        %v1775 = vpack.c.bf16 %v1559, %v1556
        %v1776 = vpack.c.bf16 %v1567, %v1564
        %v1777 = vpack.c.bf16 %v1575, %v1572
        %v1778 = vpack.c.bf16 %v1583, %v1580
        %v1779 = vpack.c.bf16 %v1591, %v1588
        %v1780 = vpack.c.bf16 %v1599, %v1596
        %v1781 = vpack.c.bf16 %v1607, %v1604
        %v1782 = vpack.c.bf16 %v1615, %v1612
        %v1783 = vpack.c.bf16 %v1623, %v1620
        %v1784 = vpack.c.bf16 %v1631, %v1628
        %v1785 = vpack.c.bf16 %v1639, %v1636
        %v1786 = vpack.c.bf16 %v1647, %v1644
        %v1787 = vpack.c.bf16 %v1655, %v1652
        %v1788 = vpack.c.bf16 %v1663, %v1660
        %v1789 = vpack.c.bf16 %v1671, %v1668
        %v1790 = vpack.c.bf16 %v1679, %v1676
        %v1791 = vpack.c.bf16 %v1687, %v1684
        %v1792 = vpack.c.bf16 %v1695, %v1692
        %v1793 = vpack.c.bf16 %v1703, %v1700
        %v1794 = vpack.c.bf16 %v1711, %v1708
        %v1795 = vpack.c.bf16 %v1719, %v1716
        %v1796 = vpack.c.bf16 %v1727, %v1724
        %v1797 = vpack.c.bf16 %v1735, %v1732
        %v1798 = vpack.c.bf16 %v1743, %v1740
        %v1799 = vpack.c.bf16 %v1751, %v1748
        %v1800 = vpack.c.bf16 %v1759, %v1756
        %v1801 = vpack.c.bf16 %v1767, %v1764
        %v1834 = vunpack.c.l.b16 %v1770
        %v1835 = vunpack.c.h.b16 %v1770
        %v1836 = vunpack.c.l.b16 %v1771
        %v1837 = vunpack.c.h.b16 %v1771
        %v1838 = vunpack.c.l.b16 %v1772
        %v1839 = vunpack.c.h.b16 %v1772
        %v1840 = vunpack.c.l.b16 %v1773
        %v1841 = vunpack.c.h.b16 %v1773
        %v1842 = vunpack.c.l.b16 %v1774
        %v1843 = vunpack.c.h.b16 %v1774
        %v1844 = vunpack.c.l.b16 %v1775
        %v1845 = vunpack.c.h.b16 %v1775
        %v1846 = vunpack.c.l.b16 %v1776
        %v1847 = vunpack.c.h.b16 %v1776
        %v1848 = vunpack.c.l.b16 %v1777
        %v1849 = vunpack.c.h.b16 %v1777
        %v1850 = vunpack.c.l.b16 %v1778
        %v1851 = vunpack.c.h.b16 %v1778
        %v1852 = vunpack.c.l.b16 %v1779
        %v1853 = vunpack.c.h.b16 %v1779
        %v1854 = vunpack.c.l.b16 %v1780
        %v1855 = vunpack.c.h.b16 %v1780
        %v1856 = vunpack.c.l.b16 %v1781
        %v1857 = vunpack.c.h.b16 %v1781
        %v1858 = vunpack.c.l.b16 %v1782
        %v1859 = vunpack.c.h.b16 %v1782
        %v1860 = vunpack.c.l.b16 %v1783
        %v1861 = vunpack.c.h.b16 %v1783
        %v1862 = vunpack.c.l.b16 %v1784
        %v1863 = vunpack.c.h.b16 %v1784
        %v1864 = vunpack.c.l.b16 %v1785
        %v1865 = vunpack.c.h.b16 %v1785
        %v1866 = vunpack.c.l.b16 %v1786
        %v1867 = vunpack.c.h.b16 %v1786
        %v1868 = vunpack.c.l.b16 %v1787
        %v1869 = vunpack.c.h.b16 %v1787
        %v1870 = vunpack.c.l.b16 %v1788
        %v1871 = vunpack.c.h.b16 %v1788
        %v1872 = vunpack.c.l.b16 %v1789
        %v1873 = vunpack.c.h.b16 %v1789
        %v1874 = vunpack.c.l.b16 %v1790
        %v1875 = vunpack.c.h.b16 %v1790
        %v1876 = vunpack.c.l.b16 %v1791
        %v1877 = vunpack.c.h.b16 %v1791
        %v1878 = vunpack.c.l.b16 %v1792
        %v1879 = vunpack.c.h.b16 %v1792
        %v1880 = vunpack.c.l.b16 %v1793
        %v1881 = vunpack.c.h.b16 %v1793
        %v1882 = vunpack.c.l.b16 %v1794
        %v1883 = vunpack.c.h.b16 %v1794
        %v1884 = vunpack.c.l.b16 %v1795
        %v1885 = vunpack.c.h.b16 %v1795
        %v1886 = vunpack.c.l.b16 %v1796
        %v1887 = vunpack.c.h.b16 %v1796
        %v1888 = vunpack.c.l.b16 %v1797
        %v1889 = vunpack.c.h.b16 %v1797
        %v1890 = vunpack.c.l.b16 %v1798
        %v1891 = vunpack.c.h.b16 %v1798
        %v1892 = vunpack.c.l.b16 %v1799
        %v1893 = vunpack.c.h.b16 %v1799
        %v1894 = vunpack.c.l.b16 %v1800
        %v1895 = vunpack.c.h.b16 %v1800
        %v1896 = vunpack.c.l.b16 %v1801
        %v1897 = vunpack.c.h.b16 %v1801
        %v1898 = vpack.c.b16 %v1834, %v1834
        %v1899 = vpack.c.b16 %v1835, %v1835
        %v1900 = vpack.c.b16 %v1836, %v1836
        %v1901 = vpack.c.b16 %v1837, %v1837
        %v1902 = vpack.c.b16 %v1838, %v1838
        %v1903 = vpack.c.b16 %v1839, %v1839
        %v1904 = vpack.c.b16 %v1840, %v1840
        %v1905 = vpack.c.b16 %v1841, %v1841
        %v1906 = vpack.c.b16 %v1842, %v1842
        %v1907 = vpack.c.b16 %v1843, %v1843
        %v1908 = vpack.c.b16 %v1844, %v1844
        %v1909 = vpack.c.b16 %v1845, %v1845
        %v1910 = vpack.c.b16 %v1846, %v1846
        %v1911 = vpack.c.b16 %v1847, %v1847
        %v1912 = vpack.c.b16 %v1848, %v1848
        %v1913 = vpack.c.b16 %v1849, %v1849
        %v1914 = vpack.c.b16 %v1850, %v1850
        %v1915 = vpack.c.b16 %v1851, %v1851
        %v1916 = vpack.c.b16 %v1852, %v1852
        %v1917 = vpack.c.b16 %v1853, %v1853
        %v1918 = vpack.c.b16 %v1854, %v1854
        %v1919 = vpack.c.b16 %v1855, %v1855
        %v1920 = vpack.c.b16 %v1856, %v1856
        %v1921 = vpack.c.b16 %v1857, %v1857
        %v1922 = vpack.c.b16 %v1858, %v1858
        %v1923 = vpack.c.b16 %v1859, %v1859
        %v1924 = vpack.c.b16 %v1860, %v1860
        %v1925 = vpack.c.b16 %v1861, %v1861
        %v1926 = vpack.c.b16 %v1862, %v1862
        %v1927 = vpack.c.b16 %v1863, %v1863
        %v1928 = vpack.c.b16 %v1864, %v1864
        %v1929 = vpack.c.b16 %v1865, %v1865
        %v1930 = vpack.c.b16 %v1866, %v1866
        %v1931 = vpack.c.b16 %v1867, %v1867
        %v1932 = vpack.c.b16 %v1868, %v1868
        %v1933 = vpack.c.b16 %v1869, %v1869
        %v1934 = vpack.c.b16 %v1870, %v1870
        %v1935 = vpack.c.b16 %v1871, %v1871
        %v1936 = vpack.c.b16 %v1872, %v1872
        %v1937 = vpack.c.b16 %v1873, %v1873
        %v1938 = vpack.c.b16 %v1874, %v1874
        %v1939 = vpack.c.b16 %v1875, %v1875
        %v1940 = vpack.c.b16 %v1876, %v1876
        %v1941 = vpack.c.b16 %v1877, %v1877
        %v1942 = vpack.c.b16 %v1878, %v1878
        %v1943 = vpack.c.b16 %v1879, %v1879
        %v1944 = vpack.c.b16 %v1880, %v1880
        %v1945 = vpack.c.b16 %v1881, %v1881
        %v1946 = vpack.c.b16 %v1882, %v1882
        %v1947 = vpack.c.b16 %v1883, %v1883
        %v1948 = vpack.c.b16 %v1884, %v1884
        %v1949 = vpack.c.b16 %v1885, %v1885
        %v1950 = vpack.c.b16 %v1886, %v1886
        %v1951 = vpack.c.b16 %v1887, %v1887
        %v1952 = vpack.c.b16 %v1888, %v1888
        %v1953 = vpack.c.b16 %v1889, %v1889
        %v1954 = vpack.c.b16 %v1890, %v1890
        %v1955 = vpack.c.b16 %v1891, %v1891
        %v1956 = vpack.c.b16 %v1892, %v1892
        %v1957 = vpack.c.b16 %v1893, %v1893
        %v1958 = vpack.c.b16 %v1894, %v1894
        %v1959 = vpack.c.b16 %v1895, %v1895
        %v1960 = vpack.c.b16 %v1896, %v1896
        %v1961 = vpack.c.b16 %v1897, %v1897
        %2026 = vst [vmem:[%s259] sm:$0xf] %v1898
        %2027 = vst [vmem:[%s259 + $0x4] sm:$0xf] %v1899
        %2028 = vst [vmem:[%s259 + $0x8] sm:$0xf] %v1900
        %2029 = vst [vmem:[%s259 + $0xc] sm:$0xf] %v1901
        %2030 = vst [vmem:[%s259 + $0x10] sm:$0xf] %v1902
        %2031 = vst [vmem:[%s259 + $0x14] sm:$0xf] %v1903
        %2032 = vst [vmem:[%s259 + $0x18] sm:$0xf] %v1904
        %2033 = vst [vmem:[%s259 + $0x1c] sm:$0xf] %v1905
        %2034 = vst [vmem:[%s259 + $0x20] sm:$0xf] %v1906
        %2035 = vst [vmem:[%s259 + $0x24] sm:$0xf] %v1907
        %2036 = vst [vmem:[%s259 + $0x28] sm:$0xf] %v1908
        %2037 = vst [vmem:[%s259 + $0x2c] sm:$0xf] %v1909
        %2038 = vst [vmem:[%s259 + $0x30] sm:$0xf] %v1910
        %2039 = vst [vmem:[%s259 + $0x34] sm:$0xf] %v1911
        %2040 = vst [vmem:[%s259 + $0x38] sm:$0xf] %v1912
        %2041 = vst [vmem:[%s259 + $0x3c] sm:$0xf] %v1913
        %2042 = vst [vmem:[%s259 + $0x40] sm:$0xf] %v1914
        %2043 = vst [vmem:[%s259 + $0x44] sm:$0xf] %v1915
        %2044 = vst [vmem:[%s259 + $0x48] sm:$0xf] %v1916
        %2045 = vst [vmem:[%s259 + $0x4c] sm:$0xf] %v1917
        %2046 = vst [vmem:[%s259 + $0x50] sm:$0xf] %v1918
        %2047 = vst [vmem:[%s259 + $0x54] sm:$0xf] %v1919
        %2048 = vst [vmem:[%s259 + $0x58] sm:$0xf] %v1920
        %2049 = vst [vmem:[%s259 + $0x5c] sm:$0xf] %v1921
        %2050 = vst [vmem:[%s259 + $0x60] sm:$0xf] %v1922
        %2051 = vst [vmem:[%s259 + $0x64] sm:$0xf] %v1923
        %2052 = vst [vmem:[%s259 + $0x68] sm:$0xf] %v1924
        %2053 = vst [vmem:[%s259 + $0x6c] sm:$0xf] %v1925
        %2054 = vst [vmem:[%s259 + $0x70] sm:$0xf] %v1926
        %2055 = vst [vmem:[%s259 + $0x74] sm:$0xf] %v1927
        %2056 = vst [vmem:[%s259 + $0x78] sm:$0xf] %v1928
        %2057 = vst [vmem:[%s259 + $0x7c] sm:$0xf] %v1929
        %2058 = vst [vmem:[%s259 + $0x80] sm:$0xf] %v1930
        %2059 = vst [vmem:[%s259 + $0x84] sm:$0xf] %v1931
        %2060 = vst [vmem:[%s259 + $0x88] sm:$0xf] %v1932
        %2061 = vst [vmem:[%s259 + $0x8c] sm:$0xf] %v1933
        %2062 = vst [vmem:[%s259 + $0x90] sm:$0xf] %v1934
        %2063 = vst [vmem:[%s259 + $0x94] sm:$0xf] %v1935
        %2064 = vst [vmem:[%s259 + $0x98] sm:$0xf] %v1936
        %2065 = vst [vmem:[%s259 + $0x9c] sm:$0xf] %v1937
        %2066 = vst [vmem:[%s259 + $0xa0] sm:$0xf] %v1938
        %2067 = vst [vmem:[%s259 + $0xa4] sm:$0xf] %v1939
        %2068 = vst [vmem:[%s259 + $0xa8] sm:$0xf] %v1940
        %2069 = vst [vmem:[%s259 + $0xac] sm:$0xf] %v1941
        %2070 = vst [vmem:[%s259 + $0xb0] sm:$0xf] %v1942
        %2071 = vst [vmem:[%s259 + $0xb4] sm:$0xf] %v1943
        %2072 = vst [vmem:[%s259 + $0xb8] sm:$0xf] %v1944
        %2073 = vst [vmem:[%s259 + $0xbc] sm:$0xf] %v1945
        %2074 = vst [vmem:[%s259 + $0xc0] sm:$0xf] %v1946
        %2075 = vst [vmem:[%s259 + $0xc4] sm:$0xf] %v1947
        %2076 = vst [vmem:[%s259 + $0xc8] sm:$0xf] %v1948
        %2077 = vst [vmem:[%s259 + $0xcc] sm:$0xf] %v1949
        %2078 = vst [vmem:[%s259 + $0xd0] sm:$0xf] %v1950
        %2079 = vst [vmem:[%s259 + $0xd4] sm:$0xf] %v1951
        %2080 = vst [vmem:[%s259 + $0xd8] sm:$0xf] %v1952
        %2081 = vst [vmem:[%s259 + $0xdc] sm:$0xf] %v1953
        %2082 = vst [vmem:[%s259 + $0xe0] sm:$0xf] %v1954
        %2083 = vst [vmem:[%s259 + $0xe4] sm:$0xf] %v1955
        %2084 = vst [vmem:[%s259 + $0xe8] sm:$0xf] %v1956
        %2085 = vst [vmem:[%s259 + $0xec] sm:$0xf] %v1957
        %2086 = vst [vmem:[%s259 + $0xf0] sm:$0xf] %v1958
        %2087 = vst [vmem:[%s259 + $0xf4] sm:$0xf] %v1959
        %2088 = vst [vmem:[%s259 + $0xf8] sm:$0xf] %v1960
        %2089 = vst [vmem:[%s259 + $0xfc] sm:$0xf] %v1961
        %s2090 = sand.u32 %s120, 1
        %s2091 = scalar_lea.sflag [#allocation4], %s2090
        %s2092 = sand.u32 %s120, 1
        %s2093 = smul.addr %s2092, 256
        %s2094 = scalar_lea.vmem [#allocation10], %s2093
        // Predicated region
        $region53: #{tpu_custom_call.1} parent=35 // pred_check
          %p2095 = pneg %p130
        $region54: #{tpu_custom_call.1} parent=35 // pred_check_branch
          %2097 = sbr.rel (%p2095) target = $region56
        $region55: #{tpu_custom_call.1} parent=35 // pred_region
          %s2098 = smul.u32 64, %s23
          %s2100 = ssub.s32 4096, 4096
          %2101 = vsyncadd %s2091, %s2100
          %s2102 = smul.addr %s2098, 64
          %s2103 = scalar_lea.hbm %s4, %s2102
          %s2104 = sshll.u32 %s2094, 4
          %s2105 = int_to_ptr.vmem [resolvable:$true] %s2104
          %2110 = dma.vmem_to_hbm [thread:$0]  %s2105, 4096, %s2103, %s2091, 64, 64, 4
        $region56: #{tpu_custom_call.1} parent=35 // pred_fallthru
          _
      $region36: #{tpu_custom_call.1} parent=5 // pred_fallthru
        _
      %p2111 = scmp.le.s32.totalorder 2, %s18
      // Predicated region
      $region57: #{tpu_custom_call.1} parent=5 // pred_check
        %p2112 = pneg %p2111
      $region58: #{tpu_custom_call.1} parent=5 // pred_check_branch
        %2114 = sbr.rel (%p2112) target = $region60
      $region59: #{tpu_custom_call.1} parent=5 // pred_region
        %s2115 = ssub.s32 %s18, 2
        // Predicated region
        $region61: #{tpu_custom_call.1} parent=59 // pred_check
          %p2116 = pneg %p136
        $region62: #{tpu_custom_call.1} parent=59 // pred_check_branch
          %2118 = sbr.rel (%p2116) target = $region64
        $region63: #{tpu_custom_call.1} parent=59 // pred_region
          %s2119 = sand.u32 %s121, 1
          %s2120 = scalar_lea.sflag [#allocation4], %s2119
          %s2121 = sand.u32 %s121, 1
          %s2122 = smul.addr %s2121, 256
          %s2123 = scalar_lea.vmem [#allocation10], %s2122
          %2124 = dma.done %s2120, 4096
        $region64: #{tpu_custom_call.1} parent=59 // pred_fallthru
          _
      $region60: #{tpu_custom_call.1} parent=5 // pred_fallthru
        _
    $region6: #{tpu_custom_call.1} parent=1 // loop_footer
      %s22 = sadd.s32 1, %s18
    $region7: #{tpu_custom_call.1} parent=1 // loop_footer_branch
      %17 = sbr.rel target = $region3
    $region8: #{tpu_custom_call.1} parent=1 // loop_exit
      _
    %2125 = vsyncpa [#allocation3], 1
    %s2126 = scalar_lea.sflag [#allocation3], 1
    %2127 = vsyncpa %s2126, 1
    %2128 = vsyncpa [#allocation6], 1
    %2129 = vsyncpa [#allocation9], 1
    %2130 = vsyncpa [#allocation4], 1
    %s2131 = scalar_lea.sflag [#allocation4], 1
    %2132 = vsyncpa %s2131, 1

</llo_original>
